<compile_context>
chip_gen: v5e
topology: v5e:2x2
jax: 0.10.0
libtpu: 0.0.40
codegen_flags: <defaults>
</compile_context>

<pallas_src>
import functools

import numpy as np
import jax
import jax.numpy as jnp
from jax.experimental import pallas as pl
from jax.experimental.pallas import tpu as pltpu

_BN_EPS = 1e-5
_DIN_PAD = 16   # zero-pad the tiny channel dim (exact); sublane-friendly K for layer 1
_TG = 8         # point groups per grid step -> M = _TG * N rows per matmul


def _attribute_index(attribute):
    idx = [0, 1, 2]
    if 'opacity' in attribute:
        idx += [3]
    if 'scale' in attribute:
        idx += [4, 5, 6]
    if 'rotation' in attribute:
        idx += [7, 8, 9, 10]
    if 'sh' in attribute:
        idx += [11, 12, 13]
    return idx


def _fold_bn(w, b, gamma, beta, mean, var, eps=_BN_EPS):
    """Fold an eval-mode BatchNorm1d into the preceding 1x1 conv (linear)."""
    s = gamma / jnp.sqrt(var + eps)
    return w * s[:, None], (b - mean) * s + beta


def prepare_encoder_params(p):
    """One-time prep: fold BN, transpose weights to (in,out), cast big-matmul
    weights to bf16. W1 stays f32 (raw coordinates go through it)."""
    w1f, b1f = _fold_bn(p['w1'], p['b1'], p['bn1_gamma'], p['bn1_beta'],
                        p['bn1_mean'], p['bn1_var'])
    w3f, b3f = _fold_bn(p['w3'], p['b3'], p['bn2_gamma'], p['bn2_beta'],
                        p['bn2_mean'], p['bn2_var'])
    din = p['w1'].shape[1]
    mid = p['w2'].shape[0]            # 256: per-point feature channels
    w1_t = w1f.T                      # (Din, 128)
    if din < _DIN_PAD:                # extra zero rows are mathematically exact
        w1_t = jnp.pad(w1_t, ((0, _DIN_PAD - din), (0, 0)))
    return dict(
        w1_t=w1_t.astype(jnp.float32),                        # (16, 128)  f32
        b1=b1f.reshape(1, -1).astype(jnp.float32),
        w2_t=p['w2'].T.astype(jnp.bfloat16),                  # (128, 256)
        b2=p['b2'].reshape(1, -1).astype(jnp.float32),
        # Split W3 along its input channels: first `mid` rows act on the
        # broadcast global feature, the rest on the per-point feature.
        w3g_t=w3f[:, :mid].T.astype(jnp.bfloat16),            # (256, 512) global half
        w3f_t=w3f[:, mid:].T.astype(jnp.bfloat16),            # (256, 512) per-point half
        b3=b3f.reshape(1, -1).astype(jnp.float32),
        w4_t=p['w4'].T.astype(jnp.bfloat16),                  # (512, C)
        b4=p['b4'].reshape(1, -1).astype(jnp.float32),
    )


def _encoder_kernel(n, x_ref, w1_ref, b1_ref, w2_ref, b2_ref,
                    w3g_ref, w3f_ref, b3_ref, w4_ref, b4_ref, o_ref):
    # x_ref block: (TG*N, Din_pad) f32 -- TG point groups flattened over rows.
    rows = x_ref.shape[0]
    tg = rows // n
    x = x_ref[...]                                                    # f32

    # first_conv: Lin(Din,128) + BN (folded) + ReLU   (tiny K, kept in f32)
    h1 = jnp.dot(x, w1_ref[...], preferred_element_type=jnp.float32) + b1_ref[...]
    h1 = jnp.maximum(h1, 0.0)                                         # (rows, 128)

    # first_conv second linear: Lin(128, 256)
    f = jnp.dot(h1.astype(jnp.bfloat16), w2_ref[...],
                preferred_element_type=jnp.float32) + b2_ref[...]     # (rows, 256)

    # per-group global max over the N points of each group
    g = jnp.max(f.reshape(tg, n, -1), axis=1)                         # (tg, 256)

    f_bf = f.astype(jnp.bfloat16)          # cast once, reused by W3_f matmul
    g_bf = g.astype(jnp.bfloat16)

    # second_conv first linear on concat([g, f], channels) WITHOUT materializing
    # the concat: feat @ W3 == f @ W3_f + broadcast_over_points(g @ W3_g)
    h2 = jnp.dot(f_bf, w3f_ref[...], preferred_element_type=jnp.float32)   # (rows, 512)
    hg = jnp.dot(g_bf, w3g_ref[...], preferred_element_type=jnp.float32)   # (tg, 512)
    h2 = h2.reshape(tg, n, -1) + hg[:, None, :] + b3_ref[...]              # BN folded
    h2 = jnp.maximum(h2, 0.0)
    h2_bf = h2.reshape(rows, -1).astype(jnp.bfloat16)                      # cast once

    # second_conv second linear: Lin(512, C), then per-group max -> dense store
    y = jnp.dot(h2_bf, w4_ref[...], preferred_element_type=jnp.float32) + b4_ref[...]
    o_ref[...] = jnp.max(y.reshape(tg, n, -1), axis=1).astype(o_ref.dtype)  # (tg, C)


def encoder_pallas(point_groups, prepped, attribute=('xyz',), tg=_TG):
    """point_groups: (B, G, N, K) float. Returns (B, G, encoder_channel)."""
    bs, g, n, _ = point_groups.shape
    assert n % 8 == 0, "N must be a multiple of 8 for per-group sublane reshapes"
    idx = _attribute_index(attribute)
    din = len(idx)
    # contiguous slice when the selected attributes form a dense prefix (xyz-only
    # and most combinations); fancy-index gather only when necessary.
    if idx == list(range(din)):
        x = point_groups[..., :din]
    else:
        x = point_groups[..., jnp.asarray(idx)]
    x = x.astype(jnp.float32)

    bg = bs * g
    tg = min(tg, bg)
    bg_pad = ((bg + tg - 1) // tg) * tg
    x = x.reshape(bg, n, din)
    if bg_pad != bg:
        x = jnp.pad(x, ((0, bg_pad - bg), (0, 0), (0, 0)))      # dummy groups
    if din < _DIN_PAD:
        x = jnp.pad(x, ((0, 0), (0, 0), (0, _DIN_PAD - din)))   # exact zero-pad
    din_p = x.shape[-1]
    x = x.reshape(bg_pad * n, din_p)                            # 2-D row-major view

    c1 = prepped['w1_t'].shape[1]       # 128
    c2 = prepped['w2_t'].shape[1]       # 256
    c3 = prepped['w4_t'].shape[0]       # 512
    cenc = prepped['w4_t'].shape[1]     # encoder_channel

    out = pl.pallas_call(
        functools.partial(_encoder_kernel, n),
        out_shape=jax.ShapeDtypeStruct((bg_pad, cenc), jnp.float32),
        grid_spec=pltpu.PrefetchScalarGridSpec(
            num_scalar_prefetch=0,
            grid=(bg_pad // tg,),
            in_specs=[
                pl.BlockSpec((tg * n, din_p), lambda i: (i, 0)),   # TG groups of points
                pl.BlockSpec((din_p, c1), lambda i: (0, 0)),       # W1^T (BN folded, f32)
                pl.BlockSpec((1, c1), lambda i: (0, 0)),           # b1
                pl.BlockSpec((c1, c2), lambda i: (0, 0)),          # W2^T
                pl.BlockSpec((1, c2), lambda i: (0, 0)),           # b2
                pl.BlockSpec((c2, c3), lambda i: (0, 0)),          # W3_g^T (global half)
                pl.BlockSpec((c2, c3), lambda i: (0, 0)),          # W3_f^T (per-point half)
                pl.BlockSpec((1, c3), lambda i: (0, 0)),           # b3 (BN folded)
                pl.BlockSpec((c3, cenc), lambda i: (0, 0)),        # W4^T
                pl.BlockSpec((1, cenc), lambda i: (0, 0)),         # b4
            ],
            out_specs=pl.BlockSpec((tg, cenc), lambda i: (i, 0)),  # dense (TG, C) tile
        ),
        compiler_params=pltpu.CompilerParams(
            dimension_semantics=("parallel",),
            vmem_limit_bytes=32 * 1024 * 1024,
        ),
    )(x, prepped['w1_t'], prepped['b1'], prepped['w2_t'], prepped['b2'],
      prepped['w3g_t'], prepped['w3f_t'], prepped['b3'],
      prepped['w4_t'], prepped['b4'])

    return out[:bg].reshape(bs, g, cenc)


def encoder_reference(point_groups, p, attribute=('xyz',)):
    """Pure-JAX f32 reference mirroring the PyTorch forward (eval-mode BN)."""
    bs, g, n, _ = point_groups.shape
    idx = _attribute_index(attribute)
    x = point_groups[..., jnp.asarray(idx)].reshape(bs * g, n, len(idx))
    x = x.astype(jnp.float32)

    def bn(h, gamma, beta, mean, var):
        return (h - mean) / jnp.sqrt(var + _BN_EPS) * gamma + beta

    h = jnp.einsum('bnd,od->bno', x, p['w1']) + p['b1']
    h = jnp.maximum(bn(h, p['bn1_gamma'], p['bn1_beta'], p['bn1_mean'], p['bn1_var']), 0.0)
    f = jnp.einsum('bnd,od->bno', h, p['w2']) + p['b2']                 # (BG, N, 256)
    fg = jnp.max(f, axis=1, keepdims=True)                              # (BG, 1, 256)
    feat = jnp.concatenate([jnp.broadcast_to(fg, f.shape), f], axis=-1) # (BG, N, 512)
    h2 = jnp.einsum('bnd,od->bno', feat, p['w3']) + p['b3']
    h2 = jnp.maximum(bn(h2, p['bn2_gamma'], p['bn2_beta'], p['bn2_mean'], p['bn2_var']), 0.0)
    y = jnp.einsum('bnd,od->bno', h2, p['w4']) + p['b4']                # (BG, N, C)
    out = jnp.max(y, axis=1)                                            # (BG, C)
    return out.reshape(bs, g, -1)


if __name__ == "__main__":
    B, G, N = 2, 16, 32       # bg=32 -> 4 grid steps of TG=8 groups (M=256 rows each)
    ENC = 256
    attribute = ('xyz',)
    din = 3

    key = jax.random.PRNGKey(0)
    ks = jax.random.split(key, 17)

    point_groups = jax.random.normal(ks[0], (B, G, N, din), dtype=jnp.float32)

    params = dict(
        w1=jax.random.normal(ks[1], (128, din), jnp.float32) / np.sqrt(float(din)),
        b1=0.02 * jax.random.normal(ks[2], (128,), jnp.float32),
        bn1_gamma=1.0 + 0.1 * jax.random.normal(ks[3], (128,), jnp.float32),
        bn1_beta=0.1 * jax.random.normal(ks[4], (128,), jnp.float32),
        bn1_mean=0.1 * jax.random.normal(ks[5], (128,), jnp.float32),
        bn1_var=jax.random.uniform(ks[6], (128,), jnp.float32, minval=0.5, maxval=1.5),
        w2=jax.random.normal(ks[7], (256, 128), jnp.float32) / np.sqrt(128.0),
        b2=0.02 * jax.random.normal(ks[8], (256,), jnp.float32),
        w3=jax.random.normal(ks[9], (512, 512), jnp.float32) / np.sqrt(512.0),
        b3=0.02 * jax.random.normal(ks[10], (512,), jnp.float32),
        bn2_gamma=1.0 + 0.1 * jax.random.normal(ks[11], (512,), jnp.float32),
        bn2_beta=0.1 * jax.random.normal(ks[12], (512,), jnp.float32),
        bn2_mean=0.1 * jax.random.normal(ks[13], (512,), jnp.float32),
        bn2_var=jax.random.uniform(ks[14], (512,), jnp.float32, minval=0.5, maxval=1.5),
        w4=jax.random.normal(ks[15], (ENC, 512), jnp.float32) / np.sqrt(512.0),
        b4=0.02 * jax.random.normal(ks[16], (ENC,), jnp.float32),
    )

    prepped = prepare_encoder_params(params)

    out = encoder_pallas(point_groups, prepped, attribute)
    out = jax.block_until_ready(out)
    assert out.shape == (B, G, ENC)

    ref = jax.block_until_ready(encoder_reference(point_groups, params, attribute))
    # bf16 MXU operands on layers 2-4 (f32 accumulation, layer-1 in f32) vs the
    # pure-f32 reference -> moderate tolerance.
    np.testing.assert_allclose(np.asarray(out), np.asarray(ref), rtol=3e-2, atol=3e-2)

    print("KERNEL_OK")
</pallas_src>

<mosaic_0001>
module attributes {stable_mosaic.version = 11 : i64} {
  func.func @_encoder_kernel(%arg0: i32, %arg1: memref<256x16xf32, #tpu.memory_space<vmem>>, %arg2: memref<16x128xf32, #tpu.memory_space<vmem>>, %arg3: memref<1x128xf32, #tpu.memory_space<vmem>>, %arg4: memref<128x256xbf16, #tpu.memory_space<vmem>>, %arg5: memref<1x256xf32, #tpu.memory_space<vmem>>, %arg6: memref<256x512xbf16, #tpu.memory_space<vmem>>, %arg7: memref<256x512xbf16, #tpu.memory_space<vmem>>, %arg8: memref<1x512xf32, #tpu.memory_space<vmem>>, %arg9: memref<512x256xbf16, #tpu.memory_space<vmem>>, %arg10: memref<1x256xf32, #tpu.memory_space<vmem>>, %arg11: memref<8x256xf32, #tpu.memory_space<vmem>>) attributes {dimension_semantics = [#tpu.dimension_semantics<parallel>], iteration_bounds = array<i64: 4>, scalar_prefetch = 0 : i64, scratch_operands = 0 : i64, tpu.core_type = #tpu.core_type<tc>, window_params = [{transform_indices = @transform_0, window_bounds = array<i64: 256, 16>}, {pipeline_mode = #tpu.pipeline_mode<synchronous>, transform_indices = @transform_1, window_bounds = array<i64: 16, 128>}, {pipeline_mode = #tpu.pipeline_mode<synchronous>, transform_indices = @transform_2, window_bounds = array<i64: 1, 128>}, {pipeline_mode = #tpu.pipeline_mode<synchronous>, transform_indices = @transform_3, window_bounds = array<i64: 128, 256>}, {pipeline_mode = #tpu.pipeline_mode<synchronous>, transform_indices = @transform_4, window_bounds = array<i64: 1, 256>}, {pipeline_mode = #tpu.pipeline_mode<synchronous>, transform_indices = @transform_5, window_bounds = array<i64: 256, 512>}, {pipeline_mode = #tpu.pipeline_mode<synchronous>, transform_indices = @transform_6, window_bounds = array<i64: 256, 512>}, {pipeline_mode = #tpu.pipeline_mode<synchronous>, transform_indices = @transform_7, window_bounds = array<i64: 1, 512>}, {pipeline_mode = #tpu.pipeline_mode<synchronous>, transform_indices = @transform_8, window_bounds = array<i64: 512, 256>}, {pipeline_mode = #tpu.pipeline_mode<synchronous>, transform_indices = @transform_9, window_bounds = array<i64: 1, 256>}, {transform_indices = @transform_10, window_bounds = array<i64: 8, 256>}]} {
    %c0 = arith.constant 0 : index
    %c0_0 = arith.constant 0 : index
    %0 = vector.load %arg1[%c0, %c0_0] : memref<256x16xf32, #tpu.memory_space<vmem>>, vector<256x16xf32>
    %c0_1 = arith.constant 0 : index
    %c0_2 = arith.constant 0 : index
    %1 = vector.load %arg2[%c0_1, %c0_2] : memref<16x128xf32, #tpu.memory_space<vmem>>, vector<16x128xf32>
    %cst = arith.constant dense<0.000000e+00> : vector<256x128xf32>
    %2 = tpu.matmul %0, %1, %cst {dimension_numbers = #tpu.dot_dimension_numbers<[1], [0], [0], [1], [0, 0, 1, 1], [], []>} : vector<256x16xf32>, vector<16x128xf32>, vector<256x128xf32> -> vector<256x128xf32>
    %c0_3 = arith.constant 0 : index
    %c0_4 = arith.constant 0 : index
    %3 = vector.load %arg3[%c0_3, %c0_4] : memref<1x128xf32, #tpu.memory_space<vmem>>, vector<1x128xf32>
    %4 = vector.broadcast %3 : vector<1x128xf32> to vector<256x128xf32>
    %5 = arith.addf %2, %4 : vector<256x128xf32>
    %cst_5 = arith.constant 0.000000e+00 : f32
    %6 = vector.broadcast %cst_5 : f32 to vector<256x128xf32>
    %7 = arith.maximumf %5, %6 : vector<256x128xf32>
    %8 = arith.truncf %7 : vector<256x128xf32> to vector<256x128xbf16>
    %c0_6 = arith.constant 0 : index
    %c0_7 = arith.constant 0 : index
    %9 = vector.load %arg4[%c0_6, %c0_7] : memref<128x256xbf16, #tpu.memory_space<vmem>>, vector<128x256xbf16>
    %cst_8 = arith.constant dense<0.000000e+00> : vector<256x256xf32>
    %10 = tpu.matmul %8, %9, %cst_8 {dimension_numbers = #tpu.dot_dimension_numbers<[1], [0], [0], [1], [0, 0, 1, 1], [], []>} : vector<256x128xbf16>, vector<128x256xbf16>, vector<256x256xf32> -> vector<256x256xf32>
    %c0_9 = arith.constant 0 : index
    %c0_10 = arith.constant 0 : index
    %11 = vector.load %arg5[%c0_9, %c0_10] : memref<1x256xf32, #tpu.memory_space<vmem>>, vector<1x256xf32>
    %12 = vector.broadcast %11 : vector<1x256xf32> to vector<256x256xf32>
    %13 = arith.addf %10, %12 : vector<256x256xf32>
    %14 = vector.shape_cast %13 : vector<256x256xf32> to vector<8x32x256xf32>
    %cst_11 = arith.constant dense<0xFF800000> : vector<8x256xf32>
    %15 = vector.multi_reduction <maximumf>, %14, %cst_11 [1] : vector<8x32x256xf32> to vector<8x256xf32>
    %16 = arith.truncf %13 : vector<256x256xf32> to vector<256x256xbf16>
    %17 = arith.truncf %15 : vector<8x256xf32> to vector<8x256xbf16>
    %c0_12 = arith.constant 0 : index
    %c0_13 = arith.constant 0 : index
    %18 = vector.load %arg7[%c0_12, %c0_13] : memref<256x512xbf16, #tpu.memory_space<vmem>>, vector<256x512xbf16>
    %cst_14 = arith.constant dense<0.000000e+00> : vector<256x512xf32>
    %19 = tpu.matmul %16, %18, %cst_14 {dimension_numbers = #tpu.dot_dimension_numbers<[1], [0], [0], [1], [0, 0, 1, 1], [], []>} : vector<256x256xbf16>, vector<256x512xbf16>, vector<256x512xf32> -> vector<256x512xf32>
    %c0_15 = arith.constant 0 : index
    %c0_16 = arith.constant 0 : index
    %20 = vector.load %arg6[%c0_15, %c0_16] : memref<256x512xbf16, #tpu.memory_space<vmem>>, vector<256x512xbf16>
    %cst_17 = arith.constant dense<0.000000e+00> : vector<8x512xf32>
    %21 = tpu.matmul %17, %20, %cst_17 {dimension_numbers = #tpu.dot_dimension_numbers<[1], [0], [0], [1], [0, 0, 1, 1], [], []>} : vector<8x256xbf16>, vector<256x512xbf16>, vector<8x512xf32> -> vector<8x512xf32>
    %22 = vector.shape_cast %19 : vector<256x512xf32> to vector<8x32x512xf32>
    %23 = vector.shape_cast %21 : vector<8x512xf32> to vector<8x1x512xf32>
    %24 = vector.broadcast %23 : vector<8x1x512xf32> to vector<8x32x512xf32>
    %25 = arith.addf %22, %24 : vector<8x32x512xf32>
    %c0_18 = arith.constant 0 : index
    %c0_19 = arith.constant 0 : index
    %26 = vector.load %arg8[%c0_18, %c0_19] : memref<1x512xf32, #tpu.memory_space<vmem>>, vector<1x512xf32>
    %27 = vector.shape_cast %26 : vector<1x512xf32> to vector<1x1x512xf32>
    %28 = vector.broadcast %27 : vector<1x1x512xf32> to vector<8x32x512xf32>
    %29 = arith.addf %25, %28 : vector<8x32x512xf32>
    %cst_20 = arith.constant 0.000000e+00 : f32
    %30 = vector.broadcast %cst_20 : f32 to vector<8x32x512xf32>
    %31 = arith.maximumf %29, %30 : vector<8x32x512xf32>
    %32 = vector.shape_cast %31 : vector<8x32x512xf32> to vector<256x512xf32>
    %33 = arith.truncf %32 : vector<256x512xf32> to vector<256x512xbf16>
    %c0_21 = arith.constant 0 : index
    %c0_22 = arith.constant 0 : index
    %34 = vector.load %arg9[%c0_21, %c0_22] : memref<512x256xbf16, #tpu.memory_space<vmem>>, vector<512x256xbf16>
    %cst_23 = arith.constant dense<0.000000e+00> : vector<256x256xf32>
    %35 = tpu.matmul %33, %34, %cst_23 {dimension_numbers = #tpu.dot_dimension_numbers<[1], [0], [0], [1], [0, 0, 1, 1], [], []>} : vector<256x512xbf16>, vector<512x256xbf16>, vector<256x256xf32> -> vector<256x256xf32>
    %c0_24 = arith.constant 0 : index
    %c0_25 = arith.constant 0 : index
    %36 = vector.load %arg10[%c0_24, %c0_25] : memref<1x256xf32, #tpu.memory_space<vmem>>, vector<1x256xf32>
    %37 = vector.broadcast %36 : vector<1x256xf32> to vector<256x256xf32>
    %38 = arith.addf %35, %37 : vector<256x256xf32>
    %39 = vector.shape_cast %38 : vector<256x256xf32> to vector<8x32x256xf32>
    %cst_26 = arith.constant dense<0xFF800000> : vector<8x256xf32>
    %40 = vector.multi_reduction <maximumf>, %39, %cst_26 [1] : vector<8x32x256xf32> to vector<8x256xf32>
    %c0_27 = arith.constant 0 : index
    %c0_28 = arith.constant 0 : index
    %41 = vector.load %arg11[%c0_27, %c0_28] : memref<8x256xf32, #tpu.memory_space<vmem>>, vector<8x256xf32>
    tpu.vector_store %arg11[%c0_27, %c0_28], %40 {strides = array<i32>} : memref<8x256xf32, #tpu.memory_space<vmem>>, vector<8x256xf32>,
    return
  }
  func.func @transform_0(%arg0: i32) -> (i32, i32) {
    %c0_i32 = arith.constant 0 : i32
    %c0_i32_0 = arith.constant 0 : i32
    return %arg0, %c0_i32 : i32, i32
  }
  func.func @transform_1(%arg0: i32) -> (i32, i32) {
    %c0_i32 = arith.constant 0 : i32
    %c0_i32_0 = arith.constant 0 : i32
    %c0_i32_1 = arith.constant 0 : i32
    return %c0_i32, %c0_i32_0 : i32, i32
  }
  func.func @transform_2(%arg0: i32) -> (i32, i32) {
    %c0_i32 = arith.constant 0 : i32
    %c0_i32_0 = arith.constant 0 : i32
    %c0_i32_1 = arith.constant 0 : i32
    return %c0_i32, %c0_i32_0 : i32, i32
  }
  func.func @transform_3(%arg0: i32) -> (i32, i32) {
    %c0_i32 = arith.constant 0 : i32
    %c0_i32_0 = arith.constant 0 : i32
    %c0_i32_1 = arith.constant 0 : i32
    return %c0_i32, %c0_i32_0 : i32, i32
  }
  func.func @transform_4(%arg0: i32) -> (i32, i32) {
    %c0_i32 = arith.constant 0 : i32
    %c0_i32_0 = arith.constant 0 : i32
    %c0_i32_1 = arith.constant 0 : i32
    return %c0_i32, %c0_i32_0 : i32, i32
  }
  func.func @transform_5(%arg0: i32) -> (i32, i32) {
    %c0_i32 = arith.constant 0 : i32
    %c0_i32_0 = arith.constant 0 : i32
    %c0_i32_1 = arith.constant 0 : i32
    return %c0_i32, %c0_i32_0 : i32, i32
  }
  func.func @transform_6(%arg0: i32) -> (i32, i32) {
    %c0_i32 = arith.constant 0 : i32
    %c0_i32_0 = arith.constant 0 : i32
    %c0_i32_1 = arith.constant 0 : i32
    return %c0_i32, %c0_i32_0 : i32, i32
  }
  func.func @transform_7(%arg0: i32) -> (i32, i32) {
    %c0_i32 = arith.constant 0 : i32
    %c0_i32_0 = arith.constant 0 : i32
    %c0_i32_1 = arith.constant 0 : i32
    return %c0_i32, %c0_i32_0 : i32, i32
  }
  func.func @transform_8(%arg0: i32) -> (i32, i32) {
    %c0_i32 = arith.constant 0 : i32
    %c0_i32_0 = arith.constant 0 : i32
    %c0_i32_1 = arith.constant 0 : i32
    return %c0_i32, %c0_i32_0 : i32, i32
  }
  func.func @transform_9(%arg0: i32) -> (i32, i32) {
    %c0_i32 = arith.constant 0 : i32
    %c0_i32_0 = arith.constant 0 : i32
    %c0_i32_1 = arith.constant 0 : i32
    return %c0_i32, %c0_i32_0 : i32, i32
  }
  func.func @transform_10(%arg0: i32) -> (i32, i32) {
    %c0_i32 = arith.constant 0 : i32
    %c0_i32_0 = arith.constant 0 : i32
    return %arg0, %c0_i32 : i32, i32
  }
}

</mosaic_0001>

<llo_original>
// kernel: tpu_custom_call.1
$region0: #{tpu_custom_call.1}
  #allocation0 [shape = 'u32[]', space=smem, size = 0x4, offset = 0x4, fixed_abs, tag = 'smem constant byte address 0x4 - core index']
  #allocation1 [shape = 'u32[72,128]{1,0:T(1,128)}', space=vmem, size = 0x9000, scoped, tag = 'internal scratch']
  %s0 = inlined_call_operand.vmem [shape: f32[1024,16], index: 0, kind: input, shape index: {}]
  %s1 = inlined_call_operand.hbm [shape: f32[16,128], index: 1, kind: input, shape index: {}]
  %s2 = inlined_call_operand.hbm [shape: f32[1,128], index: 2, kind: input, shape index: {}]
  %s3 = inlined_call_operand.vmem [shape: bf16[128,256], index: 3, kind: input, shape index: {}]
  %s4 = inlined_call_operand.hbm [shape: f32[1,256], index: 4, kind: input, shape index: {}]
  %s5 = inlined_call_operand.vmem [shape: bf16[256,512], index: 5, kind: input, shape index: {}]
  %s6 = inlined_call_operand.vmem [shape: bf16[256,512], index: 6, kind: input, shape index: {}]
  %s7 = inlined_call_operand.hbm [shape: f32[1,512], index: 7, kind: input, shape index: {}]
  %s8 = inlined_call_operand.hbm [shape: bf16[512,256], index: 8, kind: input, shape index: {}]
  %s9 = inlined_call_operand.hbm [shape: f32[1,256], index: 9, kind: input, shape index: {}]
  %s10 = inlined_call_operand.hbm [shape: f32[32,256], index: 10, kind: output, shape index: {}]
  %s11 = sld [smem:[#allocation0]]
  $region97: #{tpu_custom_call.1} parent=0
    _
  %s13 = ssub.s32 1, %s11
  %s14 = scalar_select 0, %s13, %s11
  $region1: #{tpu_custom_call.1} parent=0
    #allocation2 [shape = 'u8[8192]{0}', space=vmem, size = 0x2000, scoped, tag = 'input window, operand 1, single buffered']
    #allocation3 [shape = 's32[2]{0}', space=sflag, size = 0x8, scoped, tag = 'scoped memory for tpu_custom_call.1']
    #allocation4 [shape = 's32[2]{0}', space=sflag, size = 0x8, scoped, tag = 'scoped memory for tpu_custom_call.1']
    #allocation5 [shape = 'u8[512]{0}', space=vmem, size = 0x400, scoped, tag = 'input window, operand 2, single buffered']
    #allocation6 [shape = 's32[1]{0}', space=sflag, size = 0x4, scoped, tag = 'scoped memory for tpu_custom_call.1']
    #allocation7 [shape = 'u8[1024]{0}', space=vmem, size = 0x400, scoped, tag = 'input window, operand 4, single buffered']
    #allocation8 [shape = 'u8[2048]{0}', space=vmem, size = 0x800, scoped, tag = 'input window, operand 7, single buffered']
    #allocation9 [shape = 's32[1]{0}', space=sflag, size = 0x4, scoped, tag = 'scoped memory for tpu_custom_call.1']
    #allocation10 [shape = 'u8[262144]{0}', space=vmem, size = 0x40000, scoped, tag = 'input window, operand 8, single buffered']
    #allocation11 [shape = 'u8[1024]{0}', space=vmem, size = 0x400, scoped, tag = 'input window, operand 9, single buffered']
    #allocation12 [shape = 's32[1]{0}', space=sflag, size = 0x4, scoped, tag = 'scoped memory for tpu_custom_call.1']
    #allocation13 [shape = 'u8[16384]{0}', space=vmem, size = 0x4000, scoped, tag = 'output window, operand 0']
    %15 = vsyncpa [#allocation3], 0
    %16 = vsyncpa [#allocation6], 0
    %17 = vsyncpa [#allocation9], 0
    %18 = vsyncpa [#allocation12], 0
    %19 = vsyncpa [#allocation4], 0
    %s20 = scalar_lea.sflag [#allocation4], 1
    %21 = vsyncpa %s20, 0
    loop: start=0, step=1, limit=6
    $region2: #{tpu_custom_call.1} parent=1 // loop_pre_header
      _
    $region3: #{tpu_custom_call.1} parent=1 // loop_header
      %s23 = sphi 0, %s27
      %p24 = scmp.ge.s32.totalorder %s23, 6
      %s33 = sphi 0, %s35
      %s36 = sphi 0, %s33
      %s37 = sphi 0, %s36
      %s53 = sphi 0, %s37
      %s57 = sphi 0, %s57
      %s59 = sphi 0, %s57
      %s60 = sphi 0, %s59
      %s74 = sphi 0, %s60
      %s78 = sphi 0, %s78
      %s80 = sphi 0, %s78
      %s81 = sphi 0, %s80
      %s95 = sphi 0, %s81
      %s99 = sphi 0, %s99
      %s101 = sphi 0, %s99
      %s102 = sphi 0, %s101
      %s116 = sphi 0, %s102
      %s120 = sphi 0, %s120
      %s122 = sphi 0, %s120
      %s123 = sphi 0, %s122
      %s137 = sphi 0, %s123
      %s141 = sphi 0, %s141
      %s143 = sphi 0, %s141
      %s144 = sphi 0, %s143
      %s158 = sphi 0, %s144
      %s162 = sphi 0, %s162
      %s164 = sphi 0, %s162
      %s165 = sphi 0, %s164
      %s179 = sphi 0, %s165
      %s183 = sphi 0, %s183
      %s185 = sphi 0, %s183
      %s186 = sphi 0, %s185
      %s200 = sphi 0, %s186
      %s204 = sphi 0, %s204
      %s206 = sphi 0, %s204
      %s207 = sphi 0, %s206
      %s221 = sphi 0, %s207
      %s225 = sphi 0, %s225
      %s227 = sphi 0, %s225
      %s228 = sphi 0, %s227
      %s242 = sphi 0, %s228
      %s248 = sphi 0, %s250
      %s251 = sphi 0, %s248
      %s252 = sphi 0, %s251
      %s268 = sphi 0, %s252
    $region4: #{tpu_custom_call.1} parent=1 // loop_header_branch
      %26 = sbr.rel (%p24) target = $region8
    $region5: #{tpu_custom_call.1} parent=1 // loop_body
      %s28 = ssub.s32 %s23, 1
      %s29 = ssub.s32 %s23, 2
      %s30 = sadd.s32 %s23, 1
      %s31 = ssub.s32 %s23, %s30
      %p32 = scmp.eq.s32.totalorder %s31, 0
      %s34 = sadd.s32 %s33, 1
      %s35 = scalar_select %p32, %s33, %s34
      %p38 = pneg %p32
      %p39 = scmp.eq.s32.totalorder %s23, 3
      %p40 = por %p38, %p39
      %p41 = scmp.ne.s32.totalorder %s33, %s36
      %p42 = scmp.eq.s32.totalorder %s23, 0
      %p43 = por %p41, %p42
      %p44 = scmp.ne.s32.totalorder %s33, %s36
      %p45 = scmp.eq.s32.totalorder %s28, 3
      %p46 = por %p44, %p45
      %p47 = scmp.ne.s32.totalorder %s36, %s37
      %p48 = scmp.eq.s32.totalorder %s28, 0
      %p49 = por %p47, %p48
      %p50 = scmp.ne.s32.totalorder %s36, %s37
      %p51 = scmp.eq.s32.totalorder %s29, 3
      %p52 = por %p50, %p51
      %p54 = scmp.ne.s32.totalorder %s37, %s53
      %p55 = scmp.eq.s32.totalorder %s29, 0
      %p56 = por %p54, %p55
      %s58 = sadd.s32 %s57, 1
      %p61 = scmp.eq.s32.totalorder %s23, 3
      %p62 = scmp.ne.s32.totalorder %s57, %s59
      %p63 = scmp.eq.s32.totalorder %s23, 0
      %p64 = por %p62, %p63
      %p65 = scmp.ne.s32.totalorder %s57, %s59
      %p66 = scmp.eq.s32.totalorder %s28, 3
      %p67 = por %p65, %p66
      %p68 = scmp.ne.s32.totalorder %s59, %s60
      %p69 = scmp.eq.s32.totalorder %s28, 0
      %p70 = por %p68, %p69
      %p71 = scmp.ne.s32.totalorder %s59, %s60
      %p72 = scmp.eq.s32.totalorder %s29, 3
      %p73 = por %p71, %p72
      %p75 = scmp.ne.s32.totalorder %s60, %s74
      %p76 = scmp.eq.s32.totalorder %s29, 0
      %p77 = por %p75, %p76
      %s79 = sadd.s32 %s78, 1
      %p82 = scmp.eq.s32.totalorder %s23, 3
      %p83 = scmp.ne.s32.totalorder %s78, %s80
      %p84 = scmp.eq.s32.totalorder %s23, 0
      %p85 = por %p83, %p84
      %p86 = scmp.ne.s32.totalorder %s78, %s80
      %p87 = scmp.eq.s32.totalorder %s28, 3
      %p88 = por %p86, %p87
      %p89 = scmp.ne.s32.totalorder %s80, %s81
      %p90 = scmp.eq.s32.totalorder %s28, 0
      %p91 = por %p89, %p90
      %p92 = scmp.ne.s32.totalorder %s80, %s81
      %p93 = scmp.eq.s32.totalorder %s29, 3
      %p94 = por %p92, %p93
      %p96 = scmp.ne.s32.totalorder %s81, %s95
      %p97 = scmp.eq.s32.totalorder %s29, 0
      %p98 = por %p96, %p97
      %s100 = sadd.s32 %s99, 1
      %p103 = scmp.eq.s32.totalorder %s23, 3
      %p104 = scmp.ne.s32.totalorder %s99, %s101
      %p105 = scmp.eq.s32.totalorder %s23, 0
      %p106 = por %p104, %p105
      %p107 = scmp.ne.s32.totalorder %s99, %s101
      %p108 = scmp.eq.s32.totalorder %s28, 3
      %p109 = por %p107, %p108
      %p110 = scmp.ne.s32.totalorder %s101, %s102
      %p111 = scmp.eq.s32.totalorder %s28, 0
      %p112 = por %p110, %p111
      %p113 = scmp.ne.s32.totalorder %s101, %s102
      %p114 = scmp.eq.s32.totalorder %s29, 3
      %p115 = por %p113, %p114
      %p117 = scmp.ne.s32.totalorder %s102, %s116
      %p118 = scmp.eq.s32.totalorder %s29, 0
      %p119 = por %p117, %p118
      %s121 = sadd.s32 %s120, 1
      %p124 = scmp.eq.s32.totalorder %s23, 3
      %p125 = scmp.ne.s32.totalorder %s120, %s122
      %p126 = scmp.eq.s32.totalorder %s23, 0
      %p127 = por %p125, %p126
      %p128 = scmp.ne.s32.totalorder %s120, %s122
      %p129 = scmp.eq.s32.totalorder %s28, 3
      %p130 = por %p128, %p129
      %p131 = scmp.ne.s32.totalorder %s122, %s123
      %p132 = scmp.eq.s32.totalorder %s28, 0
      %p133 = por %p131, %p132
      %p134 = scmp.ne.s32.totalorder %s122, %s123
      %p135 = scmp.eq.s32.totalorder %s29, 3
      %p136 = por %p134, %p135
      %p138 = scmp.ne.s32.totalorder %s123, %s137
      %p139 = scmp.eq.s32.totalorder %s29, 0
      %p140 = por %p138, %p139
      %s142 = sadd.s32 %s141, 1
      %p145 = scmp.eq.s32.totalorder %s23, 3
      %p146 = scmp.ne.s32.totalorder %s141, %s143
      %p147 = scmp.eq.s32.totalorder %s23, 0
      %p148 = por %p146, %p147
      %p149 = scmp.ne.s32.totalorder %s141, %s143
      %p150 = scmp.eq.s32.totalorder %s28, 3
      %p151 = por %p149, %p150
      %p152 = scmp.ne.s32.totalorder %s143, %s144
      %p153 = scmp.eq.s32.totalorder %s28, 0
      %p154 = por %p152, %p153
      %p155 = scmp.ne.s32.totalorder %s143, %s144
      %p156 = scmp.eq.s32.totalorder %s29, 3
      %p157 = por %p155, %p156
      %p159 = scmp.ne.s32.totalorder %s144, %s158
      %p160 = scmp.eq.s32.totalorder %s29, 0
      %p161 = por %p159, %p160
      %s163 = sadd.s32 %s162, 1
      %p166 = scmp.eq.s32.totalorder %s23, 3
      %p167 = scmp.ne.s32.totalorder %s162, %s164
      %p168 = scmp.eq.s32.totalorder %s23, 0
      %p169 = por %p167, %p168
      %p170 = scmp.ne.s32.totalorder %s162, %s164
      %p171 = scmp.eq.s32.totalorder %s28, 3
      %p172 = por %p170, %p171
      %p173 = scmp.ne.s32.totalorder %s164, %s165
      %p174 = scmp.eq.s32.totalorder %s28, 0
      %p175 = por %p173, %p174
      %p176 = scmp.ne.s32.totalorder %s164, %s165
      %p177 = scmp.eq.s32.totalorder %s29, 3
      %p178 = por %p176, %p177
      %p180 = scmp.ne.s32.totalorder %s165, %s179
      %p181 = scmp.eq.s32.totalorder %s29, 0
      %p182 = por %p180, %p181
      %s184 = sadd.s32 %s183, 1
      %p187 = scmp.eq.s32.totalorder %s23, 3
      %p188 = scmp.ne.s32.totalorder %s183, %s185
      %p189 = scmp.eq.s32.totalorder %s23, 0
      %p190 = por %p188, %p189
      %p191 = scmp.ne.s32.totalorder %s183, %s185
      %p192 = scmp.eq.s32.totalorder %s28, 3
      %p193 = por %p191, %p192
      %p194 = scmp.ne.s32.totalorder %s185, %s186
      %p195 = scmp.eq.s32.totalorder %s28, 0
      %p196 = por %p194, %p195
      %p197 = scmp.ne.s32.totalorder %s185, %s186
      %p198 = scmp.eq.s32.totalorder %s29, 3
      %p199 = por %p197, %p198
      %p201 = scmp.ne.s32.totalorder %s186, %s200
      %p202 = scmp.eq.s32.totalorder %s29, 0
      %p203 = por %p201, %p202
      %s205 = sadd.s32 %s204, 1
      %p208 = scmp.eq.s32.totalorder %s23, 3
      %p209 = scmp.ne.s32.totalorder %s204, %s206
      %p210 = scmp.eq.s32.totalorder %s23, 0
      %p211 = por %p209, %p210
      %p212 = scmp.ne.s32.totalorder %s204, %s206
      %p213 = scmp.eq.s32.totalorder %s28, 3
      %p214 = por %p212, %p213
      %p215 = scmp.ne.s32.totalorder %s206, %s207
      %p216 = scmp.eq.s32.totalorder %s28, 0
      %p217 = por %p215, %p216
      %p218 = scmp.ne.s32.totalorder %s206, %s207
      %p219 = scmp.eq.s32.totalorder %s29, 3
      %p220 = por %p218, %p219
      %p222 = scmp.ne.s32.totalorder %s207, %s221
      %p223 = scmp.eq.s32.totalorder %s29, 0
      %p224 = por %p222, %p223
      %s226 = sadd.s32 %s225, 1
      %p229 = scmp.eq.s32.totalorder %s23, 3
      %p230 = scmp.ne.s32.totalorder %s225, %s227
      %p231 = scmp.eq.s32.totalorder %s23, 0
      %p232 = por %p230, %p231
      %p233 = scmp.ne.s32.totalorder %s225, %s227
      %p234 = scmp.eq.s32.totalorder %s28, 3
      %p235 = por %p233, %p234
      %p236 = scmp.ne.s32.totalorder %s227, %s228
      %p237 = scmp.eq.s32.totalorder %s28, 0
      %p238 = por %p236, %p237
      %p239 = scmp.ne.s32.totalorder %s227, %s228
      %p240 = scmp.eq.s32.totalorder %s29, 3
      %p241 = por %p239, %p240
      %p243 = scmp.ne.s32.totalorder %s228, %s242
      %p244 = scmp.eq.s32.totalorder %s29, 0
      %p245 = por %p243, %p244
      %s246 = ssub.s32 %s23, %s30
      %p247 = scmp.eq.s32.totalorder %s246, 0
      %s249 = sadd.s32 %s248, 1
      %s250 = scalar_select %p247, %s248, %s249
      %p253 = pneg %p247
      %p254 = scmp.eq.s32.totalorder %s23, 3
      %p255 = por %p253, %p254
      %p256 = scmp.ne.s32.totalorder %s248, %s251
      %p257 = scmp.eq.s32.totalorder %s23, 0
      %p258 = por %p256, %p257
      %p259 = scmp.ne.s32.totalorder %s248, %s251
      %p260 = scmp.eq.s32.totalorder %s28, 3
      %p261 = por %p259, %p260
      %p262 = scmp.ne.s32.totalorder %s251, %s252
      %p263 = scmp.eq.s32.totalorder %s28, 0
      %p264 = por %p262, %p263
      %p265 = scmp.ne.s32.totalorder %s251, %s252
      %p266 = scmp.eq.s32.totalorder %s29, 3
      %p267 = por %p265, %p266
      %p269 = scmp.ne.s32.totalorder %s252, %s268
      %p270 = scmp.eq.s32.totalorder %s29, 0
      %p271 = por %p269, %p270
      %p272 = scmp.le.s32.totalorder 1, %s23
      %p273 = scmp.lt.s32.totalorder %s23, 5
      %p274 = pnand %p272, %p273
      %p275 = pneg %p274
      // Predicated region
      $region9: #{tpu_custom_call.1} parent=5 // pred_check
        _
      $region10: #{tpu_custom_call.1} parent=5 // pred_check_branch
        %277 = sbr.rel (%p274) target = $region12
      $region11: #{tpu_custom_call.1} parent=5 // pred_region
        %s278 = ssub.s32 %s23, 1
        // Predicated region
        $region13: #{tpu_custom_call.1} parent=11 // pred_check
          %p279 = pneg %p70
        $region14: #{tpu_custom_call.1} parent=11 // pred_check_branch
          %281 = sbr.rel (%p279) target = $region16
        $region15: #{tpu_custom_call.1} parent=11 // pred_region
          %283 = vsyncadd [#allocation3], 0
          %s284 = sshll.u32 %s1, 4
          %s285 = int_to_ptr.hbm [resolvable:$true] %s284
          %s286 = sshll.u32 [#allocation2], 4
          %s287 = int_to_ptr.vmem [resolvable:$true] %s286
          %292 = dma.hbm_to_vmem [thread:$0]  %s285, 256, %s287, [#allocation3], 128, 128, 8
        $region16: #{tpu_custom_call.1} parent=11 // pred_fallthru
          _
        // Predicated region
        $region17: #{tpu_custom_call.1} parent=11 // pred_check
          %p293 = pneg %p91
        $region18: #{tpu_custom_call.1} parent=11 // pred_check_branch
          %295 = sbr.rel (%p293) target = $region20
        $region19: #{tpu_custom_call.1} parent=11 // pred_region
          %297 = vsyncadd [#allocation6], 0
          %s299 = sshll.u32 %s2, 4
          %s300 = int_to_ptr.hbm [resolvable:$true] %s299
          %s301 = sshll.u32 [#allocation5], 4
          %s302 = int_to_ptr.vmem [resolvable:$true] %s301
          %304 = dma.hbm_to_vmem [thread:$0]  %s300, 16, %s302, [#allocation6]
        $region20: #{tpu_custom_call.1} parent=11 // pred_fallthru
          _
        // Predicated region
        $region21: #{tpu_custom_call.1} parent=11 // pred_check
          %p305 = pneg %p112
        $region22: #{tpu_custom_call.1} parent=11 // pred_check_branch
          %307 = sbr.rel (%p305) target = $region24
        $region23: #{tpu_custom_call.1} parent=11 // pred_region
          _
        $region24: #{tpu_custom_call.1} parent=11 // pred_fallthru
          _
        // Predicated region
        $region25: #{tpu_custom_call.1} parent=11 // pred_check
          %p308 = pneg %p133
        $region26: #{tpu_custom_call.1} parent=11 // pred_check_branch
          %310 = sbr.rel (%p308) target = $region28
        $region27: #{tpu_custom_call.1} parent=11 // pred_region
          %312 = vsyncadd [#allocation6], 0
          %s314 = sshll.u32 %s4, 4
          %s315 = int_to_ptr.hbm [resolvable:$true] %s314
          %s316 = sshll.u32 [#allocation7], 4
          %s317 = int_to_ptr.vmem [resolvable:$true] %s316
          %319 = dma.hbm_to_vmem [thread:$0]  %s315, 32, %s317, [#allocation6]
        $region28: #{tpu_custom_call.1} parent=11 // pred_fallthru
          _
        // Predicated region
        $region29: #{tpu_custom_call.1} parent=11 // pred_check
          %p320 = pneg %p154
        $region30: #{tpu_custom_call.1} parent=11 // pred_check_branch
          %322 = sbr.rel (%p320) target = $region32
        $region31: #{tpu_custom_call.1} parent=11 // pred_region
          _
        $region32: #{tpu_custom_call.1} parent=11 // pred_fallthru
          _
        // Predicated region
        $region33: #{tpu_custom_call.1} parent=11 // pred_check
          %p323 = pneg %p175
        $region34: #{tpu_custom_call.1} parent=11 // pred_check_branch
          %325 = sbr.rel (%p323) target = $region36
        $region35: #{tpu_custom_call.1} parent=11 // pred_region
          _
        $region36: #{tpu_custom_call.1} parent=11 // pred_fallthru
          _
        // Predicated region
        $region37: #{tpu_custom_call.1} parent=11 // pred_check
          %p326 = pneg %p196
        $region38: #{tpu_custom_call.1} parent=11 // pred_check_branch
          %328 = sbr.rel (%p326) target = $region40
        $region39: #{tpu_custom_call.1} parent=11 // pred_region
          %330 = vsyncadd [#allocation9], 0
          %s332 = sshll.u32 %s7, 4
          %s333 = int_to_ptr.hbm [resolvable:$true] %s332
          %s334 = sshll.u32 [#allocation8], 4
          %s335 = int_to_ptr.vmem [resolvable:$true] %s334
          %337 = dma.hbm_to_vmem [thread:$0]  %s333, 64, %s335, [#allocation9]
        $region40: #{tpu_custom_call.1} parent=11 // pred_fallthru
          _
        // Predicated region
        $region41: #{tpu_custom_call.1} parent=11 // pred_check
          %p338 = pneg %p217
        $region42: #{tpu_custom_call.1} parent=11 // pred_check_branch
          %340 = sbr.rel (%p338) target = $region44
        $region43: #{tpu_custom_call.1} parent=11 // pred_region
          %342 = vsyncadd [#allocation9], 0
          %s343 = sshll.u32 %s8, 4
          %s344 = int_to_ptr.hbm [resolvable:$true] %s343
          %s345 = sshll.u32 [#allocation10], 4
          %s346 = int_to_ptr.vmem [resolvable:$true] %s345
          %351 = dma.hbm_to_vmem [thread:$0]  %s344, 8192, %s346, [#allocation9], 128, 128, 8
        $region44: #{tpu_custom_call.1} parent=11 // pred_fallthru
          _
        // Predicated region
        $region45: #{tpu_custom_call.1} parent=11 // pred_check
          %p352 = pneg %p238
        $region46: #{tpu_custom_call.1} parent=11 // pred_check_branch
          %354 = sbr.rel (%p352) target = $region48
        $region47: #{tpu_custom_call.1} parent=11 // pred_region
          %356 = vsyncadd [#allocation12], 0
          %s358 = sshll.u32 %s9, 4
          %s359 = int_to_ptr.hbm [resolvable:$true] %s358
          %s360 = sshll.u32 [#allocation11], 4
          %s361 = int_to_ptr.vmem [resolvable:$true] %s360
          %363 = dma.hbm_to_vmem [thread:$0]  %s359, 32, %s361, [#allocation12]
        $region48: #{tpu_custom_call.1} parent=11 // pred_fallthru
          _
      $region12: #{tpu_custom_call.1} parent=5 // pred_fallthru
        _
      %p364 = scmp.lt.s32.totalorder %s23, 4
      // Predicated region
      $region49: #{tpu_custom_call.1} parent=5 // pred_check
        %p365 = pneg %p364
      $region50: #{tpu_custom_call.1} parent=5 // pred_check_branch
        %367 = sbr.rel (%p365) target = $region52
      $region51: #{tpu_custom_call.1} parent=5 // pred_region
        // Predicated region
        $region53: #{tpu_custom_call.1} parent=51 // pred_check
          %p368 = pneg %p43
        $region54: #{tpu_custom_call.1} parent=51 // pred_check_branch
          %370 = sbr.rel (%p368) target = $region56
        $region55: #{tpu_custom_call.1} parent=51 // pred_region
          %s371 = smul.u32 32, %s23
          %p372 = scmp.lt.s32.totalorder %s371, 127
          %s373 = scalar_select %p372, %s371, 127
          %s374 = smul.addr %s373, 8
          %s375 = scalar_lea.vmem %s0, %s374
          %s376 = smul.u32 32, %s23
        $region56: #{tpu_custom_call.1} parent=51 // pred_fallthru
          _
      $region52: #{tpu_custom_call.1} parent=5 // pred_fallthru
        _
      %p377 = scmp.le.s32.totalorder 1, %s23
      %p378 = scmp.lt.s32.totalorder %s23, 5
      %p379 = pnand %p377, %p378
      %p380 = pneg %p379
      // Predicated region
      $region57: #{tpu_custom_call.1} parent=5 // pred_check
        _
      $region58: #{tpu_custom_call.1} parent=5 // pred_check_branch
        %382 = sbr.rel (%p379) target = $region60
      $region59: #{tpu_custom_call.1} parent=5 // pred_region
        %s383 = ssub.s32 %s23, 1
        // Predicated region
        $region61: #{tpu_custom_call.1} parent=59 // pred_check
          %p384 = pneg %p70
        $region62: #{tpu_custom_call.1} parent=59 // pred_check_branch
          %386 = sbr.rel (%p384) target = $region64
        $region63: #{tpu_custom_call.1} parent=59 // pred_region
          %388 = dma.done [#allocation3], 256
        $region64: #{tpu_custom_call.1} parent=59 // pred_fallthru
          _
        // Predicated region
        $region65: #{tpu_custom_call.1} parent=59 // pred_check
          %p389 = pneg %p91
        $region66: #{tpu_custom_call.1} parent=59 // pred_check_branch
          %391 = sbr.rel (%p389) target = $region68
        $region67: #{tpu_custom_call.1} parent=59 // pred_region
          %393 = dma.done [#allocation6], 16
        $region68: #{tpu_custom_call.1} parent=59 // pred_fallthru
          _
        // Predicated region
        $region69: #{tpu_custom_call.1} parent=59 // pred_check
          %p394 = pneg %p133
        $region70: #{tpu_custom_call.1} parent=59 // pred_check_branch
          %396 = sbr.rel (%p394) target = $region72
        $region71: #{tpu_custom_call.1} parent=59 // pred_region
          %398 = dma.done [#allocation6], 32
        $region72: #{tpu_custom_call.1} parent=59 // pred_fallthru
          _
        // Predicated region
        $region73: #{tpu_custom_call.1} parent=59 // pred_check
          %p399 = pneg %p196
        $region74: #{tpu_custom_call.1} parent=59 // pred_check_branch
          %401 = sbr.rel (%p399) target = $region76
        $region75: #{tpu_custom_call.1} parent=59 // pred_region
          %403 = dma.done [#allocation9], 64
        $region76: #{tpu_custom_call.1} parent=59 // pred_fallthru
          _
        // Predicated region
        $region77: #{tpu_custom_call.1} parent=59 // pred_check
          %p404 = pneg %p217
        $region78: #{tpu_custom_call.1} parent=59 // pred_check_branch
          %406 = sbr.rel (%p404) target = $region80
        $region79: #{tpu_custom_call.1} parent=59 // pred_region
          %408 = dma.done [#allocation9], 8192
        $region80: #{tpu_custom_call.1} parent=59 // pred_fallthru
          _
        // Predicated region
        $region81: #{tpu_custom_call.1} parent=59 // pred_check
          %p409 = pneg %p238
        $region82: #{tpu_custom_call.1} parent=59 // pred_check_branch
          %411 = sbr.rel (%p409) target = $region84
        $region83: #{tpu_custom_call.1} parent=59 // pred_region
          %413 = dma.done [#allocation12], 32
        $region84: #{tpu_custom_call.1} parent=59 // pred_fallthru
          _
        %s414 = smul.u32 32, %s28
        %p415 = scmp.lt.s32.totalorder %s414, 127
        %s416 = scalar_select %p415, %s414, 127
        %s417 = smul.addr %s416, 8
        %s418 = scalar_lea.vmem %s0, %s417
        %p419 = pneg %p49
        %p420 = pneg %p46
        %p421 = pneg %p70
        %p422 = pneg %p67
        %p423 = pneg %p91
        %p424 = pneg %p88
        %p425 = pneg %p112
        %p426 = pneg %p109
        %p427 = pneg %p133
        %p428 = pneg %p130
        %p429 = pneg %p154
        %p430 = pneg %p151
        %p431 = pneg %p175
        %p432 = pneg %p172
        %p433 = pneg %p196
        %p434 = pneg %p193
        %p435 = pneg %p217
        %p436 = pneg %p214
        %p437 = pneg %p238
        %p438 = pneg %p235
        %p439 = pneg %p264
        %p440 = pneg %p261
        %s441 = sand.u32 %s251, 1
        %s442 = scalar_lea.sflag [#allocation4], %s441
        %s443 = sand.u32 %s251, 1
        %s444 = smul.addr %s443, 16
        %s445 = scalar_lea.vmem [#allocation13], %s444
        %s446 = smul.u32 32, %s28
        %p447 = scmp.lt.s32.totalorder %s446, 127
        %s448 = scalar_select %p447, %s446, 127
        %s449 = smul.addr %s448, 8
        %s450 = scalar_lea.vmem %s0, %s449
        %s451 = smul.u32 32, %s28
        %v452 = vld [vmem:[%s450] sm:$0xff]
        %v453 = vld [vmem:[%s450 + $0x8] sm:$0xff]
        %v454 = vld [vmem:[%s450 + $0x10] sm:$0xff]
        %v455 = vld [vmem:[%s450 + $0x18] sm:$0xff]
        %v456 = vld [vmem:[%s450 + $0x20] sm:$0xff]
        %v457 = vld [vmem:[%s450 + $0x28] sm:$0xff]
        %v458 = vld [vmem:[%s450 + $0x30] sm:$0xff]
        %v459 = vld [vmem:[%s450 + $0x38] sm:$0xff]
        %v460 = vld [vmem:[%s450 + $0x40] sm:$0xff]
        %v461 = vld [vmem:[%s450 + $0x48] sm:$0xff]
        %v462 = vld [vmem:[%s450 + $0x50] sm:$0xff]
        %v463 = vld [vmem:[%s450 + $0x58] sm:$0xff]
        %v464 = vld [vmem:[%s450 + $0x60] sm:$0xff]
        %v465 = vld [vmem:[%s450 + $0x68] sm:$0xff]
        %v466 = vld [vmem:[%s450 + $0x70] sm:$0xff]
        %v467 = vld [vmem:[%s450 + $0x78] sm:$0xff]
        %v468 = vld [vmem:[%s450 + $0x80] sm:$0xff]
        %v469 = vld [vmem:[%s450 + $0x88] sm:$0xff]
        %v470 = vld [vmem:[%s450 + $0x90] sm:$0xff]
        %v471 = vld [vmem:[%s450 + $0x98] sm:$0xff]
        %v472 = vld [vmem:[%s450 + $0xa0] sm:$0xff]
        %v473 = vld [vmem:[%s450 + $0xa8] sm:$0xff]
        %v474 = vld [vmem:[%s450 + $0xb0] sm:$0xff]
        %v475 = vld [vmem:[%s450 + $0xb8] sm:$0xff]
        %v476 = vld [vmem:[%s450 + $0xc0] sm:$0xff]
        %v477 = vld [vmem:[%s450 + $0xc8] sm:$0xff]
        %v478 = vld [vmem:[%s450 + $0xd0] sm:$0xff]
        %v479 = vld [vmem:[%s450 + $0xd8] sm:$0xff]
        %v480 = vld [vmem:[%s450 + $0xe0] sm:$0xff]
        %v481 = vld [vmem:[%s450 + $0xe8] sm:$0xff]
        %v482 = vld [vmem:[%s450 + $0xf0] sm:$0xff]
        %v483 = vld [vmem:[%s450 + $0xf8] sm:$0xff]
        %v484 = vld [vmem:[#allocation2] sm:$0xff]
        %v485 = vld [vmem:[#allocation2 + $0x8] sm:$0xff]
        %v486 = vld [vmem:[#allocation5] sm:$0x1]
        %v488 = vperm.slane %v486, 0
        %vm490 = vcmask 130048
        %v492 = vsel %vm490, %v452, 0
        %v495 = vsel %vm490, %v453, 0
        %v498 = vsel %vm490, %v454, 0
        %v501 = vsel %vm490, %v455, 0
        %v504 = vsel %vm490, %v456, 0
        %v507 = vsel %vm490, %v457, 0
        %v510 = vsel %vm490, %v458, 0
        %v513 = vsel %vm490, %v459, 0
        %v516 = vsel %vm490, %v460, 0
        %v519 = vsel %vm490, %v461, 0
        %v522 = vsel %vm490, %v462, 0
        %v525 = vsel %vm490, %v463, 0
        %v528 = vsel %vm490, %v464, 0
        %v531 = vsel %vm490, %v465, 0
        %v534 = vsel %vm490, %v466, 0
        %v537 = vsel %vm490, %v467, 0
        %v540 = vsel %vm490, %v468, 0
        %v543 = vsel %vm490, %v469, 0
        %v546 = vsel %vm490, %v470, 0
        %v549 = vsel %vm490, %v471, 0
        %v552 = vsel %vm490, %v472, 0
        %v555 = vsel %vm490, %v473, 0
        %v558 = vsel %vm490, %v474, 0
        %v561 = vsel %vm490, %v475, 0
        %v564 = vsel %vm490, %v476, 0
        %v567 = vsel %vm490, %v477, 0
        %v570 = vsel %vm490, %v478, 0
        %v573 = vsel %vm490, %v479, 0
        %v576 = vsel %vm490, %v480, 0
        %v579 = vsel %vm490, %v481, 0
        %v582 = vsel %vm490, %v482, 0
        %v585 = vsel %vm490, %v483, 0
        %587 = vmatpush.msra.mxu0 0.0
        %588 = vmatpush.msra.mxu0 0.0
        %589 = vmatpush.msra.mxu0 0.0
        %590 = vmatpush.msra.mxu0 0.0
        %591 = vmatpush.msra.mxu0 0.0
        %592 = vmatpush.msra.mxu0 0.0
        %593 = vmatpush.msra.mxu0 0.0
        %594 = vmatpush.msra.mxu0 0.0
        %595 = vmatpush.msra.mxu0 0.0
        %596 = vmatpush.msra.mxu0 0.0
        %597 = vmatpush.msra.mxu0 0.0
        %598 = vmatpush.msra.mxu0 0.0
        %599 = vmatpush.msra.mxu0 0.0
        %600 = vmatpush.msra.mxu0 0.0
        %601 = vmatpush.msra.mxu0 %v485
        %602 = vmatpush.msra.mxu0 %v484
        %603 = vmatmul.f32.gmra.mxu0 %v492
        %v604 = vpop.f32.mrf.mxu0
        %v605 = vadd.f32 %v488, %v604
        %606 = vmatmul.f32.gmra.mxu0 %v495
        %v607 = vpop.f32.mrf.mxu0
        %v608 = vadd.f32 %v488, %v607
        %609 = vmatmul.f32.gmra.mxu0 %v498
        %v610 = vpop.f32.mrf.mxu0
        %v611 = vadd.f32 %v488, %v610
        %612 = vmatmul.f32.gmra.mxu0 %v501
        %v613 = vpop.f32.mrf.mxu0
        %v614 = vadd.f32 %v488, %v613
        %615 = vmatmul.f32.gmra.mxu0 %v504
        %v616 = vpop.f32.mrf.mxu0
        %v617 = vadd.f32 %v488, %v616
        %618 = vmatmul.f32.gmra.mxu0 %v507
        %v619 = vpop.f32.mrf.mxu0
        %v620 = vadd.f32 %v488, %v619
        %621 = vmatmul.f32.gmra.mxu0 %v510
        %v622 = vpop.f32.mrf.mxu0
        %v623 = vadd.f32 %v488, %v622
        %624 = vmatmul.f32.gmra.mxu0 %v513
        %v625 = vpop.f32.mrf.mxu0
        %v626 = vadd.f32 %v488, %v625
        %627 = vmatmul.f32.gmra.mxu0 %v516
        %v628 = vpop.f32.mrf.mxu0
        %v629 = vadd.f32 %v488, %v628
        %630 = vmatmul.f32.gmra.mxu0 %v519
        %v631 = vpop.f32.mrf.mxu0
        %v632 = vadd.f32 %v488, %v631
        %633 = vmatmul.f32.gmra.mxu0 %v522
        %v634 = vpop.f32.mrf.mxu0
        %v635 = vadd.f32 %v488, %v634
        %636 = vmatmul.f32.gmra.mxu0 %v525
        %v637 = vpop.f32.mrf.mxu0
        %v638 = vadd.f32 %v488, %v637
        %639 = vmatmul.f32.gmra.mxu0 %v528
        %v640 = vpop.f32.mrf.mxu0
        %v641 = vadd.f32 %v488, %v640
        %642 = vmatmul.f32.gmra.mxu0 %v531
        %v643 = vpop.f32.mrf.mxu0
        %v644 = vadd.f32 %v488, %v643
        %645 = vmatmul.f32.gmra.mxu0 %v534
        %v646 = vpop.f32.mrf.mxu0
        %v647 = vadd.f32 %v488, %v646
        %648 = vmatmul.f32.gmra.mxu0 %v537
        %v649 = vpop.f32.mrf.mxu0
        %v650 = vadd.f32 %v488, %v649
        %651 = vmatmul.f32.gmra.mxu0 %v540
        %v652 = vpop.f32.mrf.mxu0
        %v653 = vadd.f32 %v488, %v652
        %654 = vmatmul.f32.gmra.mxu0 %v543
        %v655 = vpop.f32.mrf.mxu0
        %v656 = vadd.f32 %v488, %v655
        %657 = vmatmul.f32.gmra.mxu0 %v546
        %v658 = vpop.f32.mrf.mxu0
        %v659 = vadd.f32 %v488, %v658
        %660 = vmatmul.f32.gmra.mxu0 %v549
        %v661 = vpop.f32.mrf.mxu0
        %v662 = vadd.f32 %v488, %v661
        %663 = vmatmul.f32.gmra.mxu0 %v552
        %v664 = vpop.f32.mrf.mxu0
        %v665 = vadd.f32 %v488, %v664
        %666 = vmatmul.f32.gmra.mxu0 %v555
        %v667 = vpop.f32.mrf.mxu0
        %v668 = vadd.f32 %v488, %v667
        %669 = vmatmul.f32.gmra.mxu0 %v558
        %v670 = vpop.f32.mrf.mxu0
        %v671 = vadd.f32 %v488, %v670
        %672 = vmatmul.f32.gmra.mxu0 %v561
        %v673 = vpop.f32.mrf.mxu0
        %v674 = vadd.f32 %v488, %v673
        %675 = vmatmul.f32.gmra.mxu0 %v564
        %v676 = vpop.f32.mrf.mxu0
        %v677 = vadd.f32 %v488, %v676
        %678 = vmatmul.f32.gmra.mxu0 %v567
        %v679 = vpop.f32.mrf.mxu0
        %v680 = vadd.f32 %v488, %v679
        %681 = vmatmul.f32.gmra.mxu0 %v570
        %v682 = vpop.f32.mrf.mxu0
        %v683 = vadd.f32 %v488, %v682
        %684 = vmatmul.f32.gmra.mxu0 %v573
        %v685 = vpop.f32.mrf.mxu0
        %v686 = vadd.f32 %v488, %v685
        %687 = vmatmul.f32.gmra.mxu0 %v576
        %v688 = vpop.f32.mrf.mxu0
        %v689 = vadd.f32 %v488, %v688
        %690 = vmatmul.f32.gmra.mxu0 %v579
        %v691 = vpop.f32.mrf.mxu0
        %v692 = vadd.f32 %v488, %v691
        %693 = vmatmul.f32.gmra.mxu0 %v582
        %v694 = vpop.f32.mrf.mxu0
        %v695 = vadd.f32 %v488, %v694
        %696 = vmatmul.f32.gmra.mxu0 %v585
        %v697 = vpop.f32.mrf.mxu0
        %v698 = vadd.f32 %v488, %v697
        %699 = vdwg.mxu0
        %v700 = vmax.f32 %v605, 0.0
        %v701 = vmax.f32 %v608, 0.0
        %v702 = vmax.f32 %v611, 0.0
        %v703 = vmax.f32 %v614, 0.0
        %v704 = vmax.f32 %v617, 0.0
        %v705 = vmax.f32 %v620, 0.0
        %v706 = vmax.f32 %v623, 0.0
        %v707 = vmax.f32 %v626, 0.0
        %v708 = vmax.f32 %v629, 0.0
        %v709 = vmax.f32 %v632, 0.0
        %v710 = vmax.f32 %v635, 0.0
        %v711 = vmax.f32 %v638, 0.0
        %v712 = vmax.f32 %v641, 0.0
        %v713 = vmax.f32 %v644, 0.0
        %v714 = vmax.f32 %v647, 0.0
        %v715 = vmax.f32 %v650, 0.0
        %v716 = vmax.f32 %v653, 0.0
        %v717 = vmax.f32 %v656, 0.0
        %v718 = vmax.f32 %v659, 0.0
        %v719 = vmax.f32 %v662, 0.0
        %v720 = vmax.f32 %v665, 0.0
        %v721 = vmax.f32 %v668, 0.0
        %v722 = vmax.f32 %v671, 0.0
        %v723 = vmax.f32 %v674, 0.0
        %v724 = vmax.f32 %v677, 0.0
        %v725 = vmax.f32 %v680, 0.0
        %v726 = vmax.f32 %v683, 0.0
        %v727 = vmax.f32 %v686, 0.0
        %v728 = vmax.f32 %v689, 0.0
        %v729 = vmax.f32 %v692, 0.0
        %v730 = vmax.f32 %v695, 0.0
        %v731 = vmax.f32 %v698, 0.0
        %v732 = vpack.c.bf16 %v701, %v700
        %v733 = vpack.c.bf16 %v703, %v702
        %v734 = vpack.c.bf16 %v705, %v704
        %v735 = vpack.c.bf16 %v707, %v706
        %v736 = vpack.c.bf16 %v709, %v708
        %v737 = vpack.c.bf16 %v711, %v710
        %v738 = vpack.c.bf16 %v713, %v712
        %v739 = vpack.c.bf16 %v715, %v714
        %v740 = vpack.c.bf16 %v717, %v716
        %v741 = vpack.c.bf16 %v719, %v718
        %v742 = vpack.c.bf16 %v721, %v720
        %v743 = vpack.c.bf16 %v723, %v722
        %v744 = vpack.c.bf16 %v725, %v724
        %v745 = vpack.c.bf16 %v727, %v726
        %v746 = vpack.c.bf16 %v729, %v728
        %v747 = vpack.c.bf16 %v731, %v730
        %v748 = vld [vmem:[%s3] sm:$0xff]
        %v749 = vld [vmem:[%s3 + $0x8] sm:$0xff]
        %v750 = vld [vmem:[%s3 + $0x10] sm:$0xff]
        %v751 = vld [vmem:[%s3 + $0x18] sm:$0xff]
        %v752 = vld [vmem:[%s3 + $0x20] sm:$0xff]
        %v753 = vld [vmem:[%s3 + $0x28] sm:$0xff]
        %v754 = vld [vmem:[%s3 + $0x30] sm:$0xff]
        %v755 = vld [vmem:[%s3 + $0x38] sm:$0xff]
        %v756 = vld [vmem:[%s3 + $0x40] sm:$0xff]
        %v757 = vld [vmem:[%s3 + $0x48] sm:$0xff]
        %v758 = vld [vmem:[%s3 + $0x50] sm:$0xff]
        %v759 = vld [vmem:[%s3 + $0x58] sm:$0xff]
        %v760 = vld [vmem:[%s3 + $0x60] sm:$0xff]
        %v761 = vld [vmem:[%s3 + $0x68] sm:$0xff]
        %v762 = vld [vmem:[%s3 + $0x70] sm:$0xff]
        %v763 = vld [vmem:[%s3 + $0x78] sm:$0xff]
        %v764 = vld [vmem:[#allocation7] sm:$0x3]
        %v766 = vperm.slane %v764, 0
        %v767 = vperm.slane %v764, 1
        %v786 = vunpack.c.l.b16 %v748
        %v787 = vunpack.c.h.b16 %v748
        %v788 = vunpack.c.l.b16 %v749
        %v789 = vunpack.c.h.b16 %v749
        %v790 = vunpack.c.l.b16 %v750
        %v791 = vunpack.c.h.b16 %v750
        %v792 = vunpack.c.l.b16 %v751
        %v793 = vunpack.c.h.b16 %v751
        %v794 = vunpack.c.l.b16 %v752
        %v795 = vunpack.c.h.b16 %v752
        %v796 = vunpack.c.l.b16 %v753
        %v797 = vunpack.c.h.b16 %v753
        %v798 = vunpack.c.l.b16 %v754
        %v799 = vunpack.c.h.b16 %v754
        %v800 = vunpack.c.l.b16 %v755
        %v801 = vunpack.c.h.b16 %v755
        %v802 = vunpack.c.l.b16 %v756
        %v803 = vunpack.c.h.b16 %v756
        %v804 = vunpack.c.l.b16 %v757
        %v805 = vunpack.c.h.b16 %v757
        %v806 = vunpack.c.l.b16 %v758
        %v807 = vunpack.c.h.b16 %v758
        %v808 = vunpack.c.l.b16 %v759
        %v809 = vunpack.c.h.b16 %v759
        %v810 = vunpack.c.l.b16 %v760
        %v811 = vunpack.c.h.b16 %v760
        %v812 = vunpack.c.l.b16 %v761
        %v813 = vunpack.c.h.b16 %v761
        %v814 = vunpack.c.l.b16 %v762
        %v815 = vunpack.c.h.b16 %v762
        %v816 = vunpack.c.l.b16 %v763
        %v817 = vunpack.c.h.b16 %v763
        %v818 = vpack.c.b16 %v788, %v786
        %v819 = vpack.c.b16 %v789, %v787
        %v820 = vpack.c.b16 %v792, %v790
        %v821 = vpack.c.b16 %v793, %v791
        %v822 = vpack.c.b16 %v796, %v794
        %v823 = vpack.c.b16 %v797, %v795
        %v824 = vpack.c.b16 %v800, %v798
        %v825 = vpack.c.b16 %v801, %v799
        %v826 = vpack.c.b16 %v804, %v802
        %v827 = vpack.c.b16 %v805, %v803
        %v828 = vpack.c.b16 %v808, %v806
        %v829 = vpack.c.b16 %v809, %v807
        %v830 = vpack.c.b16 %v812, %v810
        %v831 = vpack.c.b16 %v813, %v811
        %v832 = vpack.c.b16 %v816, %v814
        %v833 = vpack.c.b16 %v817, %v815
        %850 = vmatpush.bf16.msra.mxu0 %v832
        %851 = vmatpush.bf16.msra.mxu0 %v830
        %852 = vmatpush.bf16.msra.mxu0 %v828
        %853 = vmatpush.bf16.msra.mxu0 %v826
        %854 = vmatpush.bf16.msra.mxu0 %v824
        %855 = vmatpush.bf16.msra.mxu0 %v822
        %856 = vmatpush.bf16.msra.mxu0 %v820
        %857 = vmatpush.bf16.msra.mxu0 %v818
        %858 = vmatmul.bf16.gmra.mxu0 %v732
        %v859 = vpop.f32.mrf.mxu0
        %v860 = vadd.f32 %v766, %v859
        %v861 = vpop.f32.mrf.mxu0
        %v862 = vadd.f32 %v766, %v861
        %863 = vmatmul.bf16.gmra.mxu0 %v733
        %v864 = vpop.f32.mrf.mxu0
        %v865 = vadd.f32 %v766, %v864
        %v866 = vpop.f32.mrf.mxu0
        %v867 = vadd.f32 %v766, %v866
        %868 = vmatmul.bf16.gmra.mxu0 %v734
        %v869 = vpop.f32.mrf.mxu0
        %v870 = vadd.f32 %v766, %v869
        %v871 = vpop.f32.mrf.mxu0
        %v872 = vadd.f32 %v766, %v871
        %873 = vmatmul.bf16.gmra.mxu0 %v735
        %v874 = vpop.f32.mrf.mxu0
        %v875 = vadd.f32 %v766, %v874
        %v876 = vpop.f32.mrf.mxu0
        %v877 = vadd.f32 %v766, %v876
        %878 = vmatmul.bf16.gmra.mxu0 %v736
        %v879 = vpop.f32.mrf.mxu0
        %v880 = vadd.f32 %v766, %v879
        %v881 = vpop.f32.mrf.mxu0
        %v882 = vadd.f32 %v766, %v881
        %883 = vmatmul.bf16.gmra.mxu0 %v737
        %v884 = vpop.f32.mrf.mxu0
        %v885 = vadd.f32 %v766, %v884
        %v886 = vpop.f32.mrf.mxu0
        %v887 = vadd.f32 %v766, %v886
        %888 = vmatmul.bf16.gmra.mxu0 %v738
        %v889 = vpop.f32.mrf.mxu0
        %v890 = vadd.f32 %v766, %v889
        %v891 = vpop.f32.mrf.mxu0
        %v892 = vadd.f32 %v766, %v891
        %893 = vmatmul.bf16.gmra.mxu0 %v739
        %v894 = vpop.f32.mrf.mxu0
        %v895 = vadd.f32 %v766, %v894
        %v896 = vpop.f32.mrf.mxu0
        %v897 = vadd.f32 %v766, %v896
        %898 = vmatmul.bf16.gmra.mxu0 %v740
        %v899 = vpop.f32.mrf.mxu0
        %v900 = vadd.f32 %v766, %v899
        %v901 = vpop.f32.mrf.mxu0
        %v902 = vadd.f32 %v766, %v901
        %903 = vmatmul.bf16.gmra.mxu0 %v741
        %v904 = vpop.f32.mrf.mxu0
        %v905 = vadd.f32 %v766, %v904
        %v906 = vpop.f32.mrf.mxu0
        %v907 = vadd.f32 %v766, %v906
        %908 = vmatmul.bf16.gmra.mxu0 %v742
        %v909 = vpop.f32.mrf.mxu0
        %v910 = vadd.f32 %v766, %v909
        %v911 = vpop.f32.mrf.mxu0
        %v912 = vadd.f32 %v766, %v911
        %913 = vmatmul.bf16.gmra.mxu0 %v743
        %v914 = vpop.f32.mrf.mxu0
        %v915 = vadd.f32 %v766, %v914
        %v916 = vpop.f32.mrf.mxu0
        %v917 = vadd.f32 %v766, %v916
        %918 = vmatmul.bf16.gmra.mxu0 %v744
        %v919 = vpop.f32.mrf.mxu0
        %v920 = vadd.f32 %v766, %v919
        %v921 = vpop.f32.mrf.mxu0
        %v922 = vadd.f32 %v766, %v921
        %923 = vmatmul.bf16.gmra.mxu0 %v745
        %v924 = vpop.f32.mrf.mxu0
        %v925 = vadd.f32 %v766, %v924
        %v926 = vpop.f32.mrf.mxu0
        %v927 = vadd.f32 %v766, %v926
        %928 = vmatmul.bf16.gmra.mxu0 %v746
        %v929 = vpop.f32.mrf.mxu0
        %v930 = vadd.f32 %v766, %v929
        %v931 = vpop.f32.mrf.mxu0
        %v932 = vadd.f32 %v766, %v931
        %933 = vmatmul.bf16.gmra.mxu0 %v747
        %v934 = vpop.f32.mrf.mxu0
        %v935 = vadd.f32 %v766, %v934
        %v936 = vpop.f32.mrf.mxu0
        %v937 = vadd.f32 %v766, %v936
        %938 = vdwg.mxu0
        %939 = vmatpush.bf16.msra.mxu0 %v833
        %940 = vmatpush.bf16.msra.mxu0 %v831
        %941 = vmatpush.bf16.msra.mxu0 %v829
        %942 = vmatpush.bf16.msra.mxu0 %v827
        %943 = vmatpush.bf16.msra.mxu0 %v825
        %944 = vmatpush.bf16.msra.mxu0 %v823
        %945 = vmatpush.bf16.msra.mxu0 %v821
        %946 = vmatpush.bf16.msra.mxu0 %v819
        %947 = vmatmul.bf16.gmra.mxu0 %v732
        %v948 = vpop.f32.mrf.mxu0
        %v949 = vadd.f32 %v767, %v948
        %v950 = vpop.f32.mrf.mxu0
        %v951 = vadd.f32 %v767, %v950
        %952 = vmatmul.bf16.gmra.mxu0 %v733
        %v953 = vpop.f32.mrf.mxu0
        %v954 = vadd.f32 %v767, %v953
        %v955 = vpop.f32.mrf.mxu0
        %v956 = vadd.f32 %v767, %v955
        %957 = vmatmul.bf16.gmra.mxu0 %v734
        %v958 = vpop.f32.mrf.mxu0
        %v959 = vadd.f32 %v767, %v958
        %v960 = vpop.f32.mrf.mxu0
        %v961 = vadd.f32 %v767, %v960
        %962 = vmatmul.bf16.gmra.mxu0 %v735
        %v963 = vpop.f32.mrf.mxu0
        %v964 = vadd.f32 %v767, %v963
        %v965 = vpop.f32.mrf.mxu0
        %v966 = vadd.f32 %v767, %v965
        %967 = vmatmul.bf16.gmra.mxu0 %v736
        %v968 = vpop.f32.mrf.mxu0
        %v969 = vadd.f32 %v767, %v968
        %v970 = vpop.f32.mrf.mxu0
        %v971 = vadd.f32 %v767, %v970
        %972 = vmatmul.bf16.gmra.mxu0 %v737
        %v973 = vpop.f32.mrf.mxu0
        %v974 = vadd.f32 %v767, %v973
        %v975 = vpop.f32.mrf.mxu0
        %v976 = vadd.f32 %v767, %v975
        %977 = vmatmul.bf16.gmra.mxu0 %v738
        %v978 = vpop.f32.mrf.mxu0
        %v979 = vadd.f32 %v767, %v978
        %v980 = vpop.f32.mrf.mxu0
        %v981 = vadd.f32 %v767, %v980
        %982 = vmatmul.bf16.gmra.mxu0 %v739
        %v983 = vpop.f32.mrf.mxu0
        %v984 = vadd.f32 %v767, %v983
        %v985 = vpop.f32.mrf.mxu0
        %v986 = vadd.f32 %v767, %v985
        %987 = vmatmul.bf16.gmra.mxu0 %v740
        %v988 = vpop.f32.mrf.mxu0
        %v989 = vadd.f32 %v767, %v988
        %v990 = vpop.f32.mrf.mxu0
        %v991 = vadd.f32 %v767, %v990
        %992 = vmatmul.bf16.gmra.mxu0 %v741
        %v993 = vpop.f32.mrf.mxu0
        %v994 = vadd.f32 %v767, %v993
        %v995 = vpop.f32.mrf.mxu0
        %v996 = vadd.f32 %v767, %v995
        %997 = vmatmul.bf16.gmra.mxu0 %v742
        %v998 = vpop.f32.mrf.mxu0
        %v999 = vadd.f32 %v767, %v998
        %v1000 = vpop.f32.mrf.mxu0
        %v1001 = vadd.f32 %v767, %v1000
        %1002 = vmatmul.bf16.gmra.mxu0 %v743
        %v1003 = vpop.f32.mrf.mxu0
        %v1004 = vadd.f32 %v767, %v1003
        %v1005 = vpop.f32.mrf.mxu0
        %v1006 = vadd.f32 %v767, %v1005
        %1007 = vmatmul.bf16.gmra.mxu0 %v744
        %v1008 = vpop.f32.mrf.mxu0
        %v1009 = vadd.f32 %v767, %v1008
        %v1010 = vpop.f32.mrf.mxu0
        %v1011 = vadd.f32 %v767, %v1010
        %1012 = vmatmul.bf16.gmra.mxu0 %v745
        %v1013 = vpop.f32.mrf.mxu0
        %v1014 = vadd.f32 %v767, %v1013
        %v1015 = vpop.f32.mrf.mxu0
        %v1016 = vadd.f32 %v767, %v1015
        %1017 = vmatmul.bf16.gmra.mxu0 %v746
        %v1018 = vpop.f32.mrf.mxu0
        %v1019 = vadd.f32 %v767, %v1018
        %v1020 = vpop.f32.mrf.mxu0
        %v1021 = vadd.f32 %v767, %v1020
        %1022 = vmatmul.bf16.gmra.mxu0 %v747
        %v1023 = vpop.f32.mrf.mxu0
        %v1024 = vadd.f32 %v767, %v1023
        %v1025 = vpop.f32.mrf.mxu0
        %v1026 = vadd.f32 %v767, %v1025
        %1027 = vdwg.mxu0
        %v1028 = vmax.f32 %v860, %v862
        %v1029 = vmax.f32 %v1028, %v865
        %v1030 = vmax.f32 %v1029, %v867
        %v1031 = vrot.slane %v1030, 4
        %v1032 = vmax.f32 %v1030, %v1031
        %v1033 = vrot.slane %v1032, 2
        %v1034 = vmax.f32 %v1032, %v1033
        %v1035 = vrot.slane %v1034, 1
        %v1036 = vmax.f32 %v1034, %v1035
        %v1037 = vmax.f32 %v949, %v951
        %v1038 = vmax.f32 %v1037, %v954
        %v1039 = vmax.f32 %v1038, %v956
        %v1040 = vrot.slane %v1039, 4
        %v1041 = vmax.f32 %v1039, %v1040
        %v1042 = vrot.slane %v1041, 2
        %v1043 = vmax.f32 %v1041, %v1042
        %v1044 = vrot.slane %v1043, 1
        %v1045 = vmax.f32 %v1043, %v1044
        %v1046 = vmax.f32 %v870, %v872
        %v1047 = vmax.f32 %v1046, %v875
        %v1048 = vmax.f32 %v1047, %v877
        %v1049 = vrot.slane %v1048, 4
        %v1050 = vmax.f32 %v1048, %v1049
        %v1051 = vrot.slane %v1050, 2
        %v1052 = vmax.f32 %v1050, %v1051
        %v1053 = vrot.slane %v1052, 1
        %v1054 = vmax.f32 %v1052, %v1053
        %v1055 = vmax.f32 %v959, %v961
        %v1056 = vmax.f32 %v1055, %v964
        %v1057 = vmax.f32 %v1056, %v966
        %v1058 = vrot.slane %v1057, 4
        %v1059 = vmax.f32 %v1057, %v1058
        %v1060 = vrot.slane %v1059, 2
        %v1061 = vmax.f32 %v1059, %v1060
        %v1062 = vrot.slane %v1061, 1
        %v1063 = vmax.f32 %v1061, %v1062
        %v1064 = vmax.f32 %v880, %v882
        %v1065 = vmax.f32 %v1064, %v885
        %v1066 = vmax.f32 %v1065, %v887
        %v1067 = vrot.slane %v1066, 4
        %v1068 = vmax.f32 %v1066, %v1067
        %v1069 = vrot.slane %v1068, 2
        %v1070 = vmax.f32 %v1068, %v1069
        %v1071 = vrot.slane %v1070, 1
        %v1072 = vmax.f32 %v1070, %v1071
        %v1073 = vmax.f32 %v969, %v971
        %v1074 = vmax.f32 %v1073, %v974
        %v1075 = vmax.f32 %v1074, %v976
        %v1076 = vrot.slane %v1075, 4
        %v1077 = vmax.f32 %v1075, %v1076
        %v1078 = vrot.slane %v1077, 2
        %v1079 = vmax.f32 %v1077, %v1078
        %v1080 = vrot.slane %v1079, 1
        %v1081 = vmax.f32 %v1079, %v1080
        %v1082 = vmax.f32 %v890, %v892
        %v1083 = vmax.f32 %v1082, %v895
        %v1084 = vmax.f32 %v1083, %v897
        %v1085 = vrot.slane %v1084, 4
        %v1086 = vmax.f32 %v1084, %v1085
        %v1087 = vrot.slane %v1086, 2
        %v1088 = vmax.f32 %v1086, %v1087
        %v1089 = vrot.slane %v1088, 1
        %v1090 = vmax.f32 %v1088, %v1089
        %v1091 = vmax.f32 %v979, %v981
        %v1092 = vmax.f32 %v1091, %v984
        %v1093 = vmax.f32 %v1092, %v986
        %v1094 = vrot.slane %v1093, 4
        %v1095 = vmax.f32 %v1093, %v1094
        %v1096 = vrot.slane %v1095, 2
        %v1097 = vmax.f32 %v1095, %v1096
        %v1098 = vrot.slane %v1097, 1
        %v1099 = vmax.f32 %v1097, %v1098
        %v1100 = vmax.f32 %v900, %v902
        %v1101 = vmax.f32 %v1100, %v905
        %v1102 = vmax.f32 %v1101, %v907
        %v1103 = vrot.slane %v1102, 4
        %v1104 = vmax.f32 %v1102, %v1103
        %v1105 = vrot.slane %v1104, 2
        %v1106 = vmax.f32 %v1104, %v1105
        %v1107 = vrot.slane %v1106, 1
        %v1108 = vmax.f32 %v1106, %v1107
        %v1109 = vmax.f32 %v989, %v991
        %v1110 = vmax.f32 %v1109, %v994
        %v1111 = vmax.f32 %v1110, %v996
        %v1112 = vrot.slane %v1111, 4
        %v1113 = vmax.f32 %v1111, %v1112
        %v1114 = vrot.slane %v1113, 2
        %v1115 = vmax.f32 %v1113, %v1114
        %v1116 = vrot.slane %v1115, 1
        %v1117 = vmax.f32 %v1115, %v1116
        %v1118 = vmax.f32 %v910, %v912
        %v1119 = vmax.f32 %v1118, %v915
        %v1120 = vmax.f32 %v1119, %v917
        %v1121 = vrot.slane %v1120, 4
        %v1122 = vmax.f32 %v1120, %v1121
        %v1123 = vrot.slane %v1122, 2
        %v1124 = vmax.f32 %v1122, %v1123
        %v1125 = vrot.slane %v1124, 1
        %v1126 = vmax.f32 %v1124, %v1125
        %v1127 = vmax.f32 %v999, %v1001
        %v1128 = vmax.f32 %v1127, %v1004
        %v1129 = vmax.f32 %v1128, %v1006
        %v1130 = vrot.slane %v1129, 4
        %v1131 = vmax.f32 %v1129, %v1130
        %v1132 = vrot.slane %v1131, 2
        %v1133 = vmax.f32 %v1131, %v1132
        %v1134 = vrot.slane %v1133, 1
        %v1135 = vmax.f32 %v1133, %v1134
        %v1136 = vmax.f32 %v920, %v922
        %v1137 = vmax.f32 %v1136, %v925
        %v1138 = vmax.f32 %v1137, %v927
        %v1139 = vrot.slane %v1138, 4
        %v1140 = vmax.f32 %v1138, %v1139
        %v1141 = vrot.slane %v1140, 2
        %v1142 = vmax.f32 %v1140, %v1141
        %v1143 = vrot.slane %v1142, 1
        %v1144 = vmax.f32 %v1142, %v1143
        %v1145 = vmax.f32 %v1009, %v1011
        %v1146 = vmax.f32 %v1145, %v1014
        %v1147 = vmax.f32 %v1146, %v1016
        %v1148 = vrot.slane %v1147, 4
        %v1149 = vmax.f32 %v1147, %v1148
        %v1150 = vrot.slane %v1149, 2
        %v1151 = vmax.f32 %v1149, %v1150
        %v1152 = vrot.slane %v1151, 1
        %v1153 = vmax.f32 %v1151, %v1152
        %v1154 = vmax.f32 %v930, %v932
        %v1155 = vmax.f32 %v1154, %v935
        %v1156 = vmax.f32 %v1155, %v937
        %v1157 = vrot.slane %v1156, 4
        %v1158 = vmax.f32 %v1156, %v1157
        %v1159 = vrot.slane %v1158, 2
        %v1160 = vmax.f32 %v1158, %v1159
        %v1161 = vrot.slane %v1160, 1
        %v1162 = vmax.f32 %v1160, %v1161
        %v1163 = vmax.f32 %v1019, %v1021
        %v1164 = vmax.f32 %v1163, %v1024
        %v1165 = vmax.f32 %v1164, %v1026
        %v1166 = vrot.slane %v1165, 4
        %v1167 = vmax.f32 %v1165, %v1166
        %v1168 = vrot.slane %v1167, 2
        %v1169 = vmax.f32 %v1167, %v1168
        %v1170 = vrot.slane %v1169, 1
        %v1171 = vmax.f32 %v1169, %v1170
        %v1172 = vpack.c.bf16 %v862, %v860
        %v1173 = vpack.c.bf16 %v951, %v949
        %v1174 = vpack.c.bf16 %v867, %v865
        %v1175 = vpack.c.bf16 %v956, %v954
        %v1176 = vpack.c.bf16 %v872, %v870
        %v1177 = vpack.c.bf16 %v961, %v959
        %v1178 = vpack.c.bf16 %v877, %v875
        %v1179 = vpack.c.bf16 %v966, %v964
        %v1180 = vpack.c.bf16 %v882, %v880
        %v1181 = vpack.c.bf16 %v971, %v969
        %v1182 = vpack.c.bf16 %v887, %v885
        %v1183 = vpack.c.bf16 %v976, %v974
        %v1184 = vpack.c.bf16 %v892, %v890
        %v1185 = vpack.c.bf16 %v981, %v979
        %v1186 = vpack.c.bf16 %v897, %v895
        %v1187 = vpack.c.bf16 %v986, %v984
        %v1188 = vpack.c.bf16 %v902, %v900
        %v1189 = vpack.c.bf16 %v991, %v989
        %v1190 = vpack.c.bf16 %v907, %v905
        %v1191 = vpack.c.bf16 %v996, %v994
        %v1192 = vpack.c.bf16 %v912, %v910
        %v1193 = vpack.c.bf16 %v1001, %v999
        %v1194 = vpack.c.bf16 %v917, %v915
        %v1195 = vpack.c.bf16 %v1006, %v1004
        %v1196 = vpack.c.bf16 %v922, %v920
        %v1197 = vpack.c.bf16 %v1011, %v1009
        %v1198 = vpack.c.bf16 %v927, %v925
        %v1199 = vpack.c.bf16 %v1016, %v1014
        %v1200 = vpack.c.bf16 %v932, %v930
        %v1201 = vpack.c.bf16 %v1021, %v1019
        %v1202 = vpack.c.bf16 %v937, %v935
        %v1203 = vpack.c.bf16 %v1026, %v1024
        %v1204 = vpack.c.bf16 %v1036, %v1036
        %v1205 = vpack.c.bf16 %v1045, %v1045
        %v1206 = vpack.c.bf16 %v1054, %v1054
        %v1207 = vpack.c.bf16 %v1063, %v1063
        %v1208 = vpack.c.bf16 %v1072, %v1072
        %v1209 = vpack.c.bf16 %v1081, %v1081
        %v1210 = vpack.c.bf16 %v1090, %v1090
        %v1211 = vpack.c.bf16 %v1099, %v1099
        %v1212 = vpack.c.bf16 %v1108, %v1108
        %v1213 = vpack.c.bf16 %v1117, %v1117
        %v1214 = vpack.c.bf16 %v1126, %v1126
        %v1215 = vpack.c.bf16 %v1135, %v1135
        %v1216 = vpack.c.bf16 %v1144, %v1144
        %v1217 = vpack.c.bf16 %v1153, %v1153
        %v1218 = vpack.c.bf16 %v1162, %v1162
        %v1219 = vpack.c.bf16 %v1171, %v1171
        %v1220 = vld [vmem:[%s6] sm:$0xff]
        %v1221 = vld [vmem:[%s6 + $0x8] sm:$0xff]
        %v1222 = vld [vmem:[%s6 + $0x10] sm:$0xff]
        %v1223 = vld [vmem:[%s6 + $0x18] sm:$0xff]
        %v1224 = vld [vmem:[%s6 + $0x20] sm:$0xff]
        %v1225 = vld [vmem:[%s6 + $0x28] sm:$0xff]
        %v1226 = vld [vmem:[%s6 + $0x30] sm:$0xff]
        %v1227 = vld [vmem:[%s6 + $0x38] sm:$0xff]
        %v1228 = vld [vmem:[%s6 + $0x40] sm:$0xff]
        %v1229 = vld [vmem:[%s6 + $0x48] sm:$0xff]
        %v1230 = vld [vmem:[%s6 + $0x50] sm:$0xff]
        %v1231 = vld [vmem:[%s6 + $0x58] sm:$0xff]
        %v1232 = vld [vmem:[%s6 + $0x60] sm:$0xff]
        %v1233 = vld [vmem:[%s6 + $0x68] sm:$0xff]
        %v1234 = vld [vmem:[%s6 + $0x70] sm:$0xff]
        %v1235 = vld [vmem:[%s6 + $0x78] sm:$0xff]
        %v1236 = vld [vmem:[%s6 + $0x80] sm:$0xff]
        %v1237 = vld [vmem:[%s6 + $0x88] sm:$0xff]
        %v1238 = vld [vmem:[%s6 + $0x90] sm:$0xff]
        %v1239 = vld [vmem:[%s6 + $0x98] sm:$0xff]
        %v1240 = vld [vmem:[%s6 + $0xa0] sm:$0xff]
        %v1241 = vld [vmem:[%s6 + $0xa8] sm:$0xff]
        %v1242 = vld [vmem:[%s6 + $0xb0] sm:$0xff]
        %v1243 = vld [vmem:[%s6 + $0xb8] sm:$0xff]
        %v1244 = vld [vmem:[%s6 + $0xc0] sm:$0xff]
        %v1245 = vld [vmem:[%s6 + $0xc8] sm:$0xff]
        %v1246 = vld [vmem:[%s6 + $0xd0] sm:$0xff]
        %v1247 = vld [vmem:[%s6 + $0xd8] sm:$0xff]
        %v1248 = vld [vmem:[%s6 + $0xe0] sm:$0xff]
        %v1249 = vld [vmem:[%s6 + $0xe8] sm:$0xff]
        %v1250 = vld [vmem:[%s6 + $0xf0] sm:$0xff]
        %v1251 = vld [vmem:[%s6 + $0xf8] sm:$0xff]
        %v1252 = vld [vmem:[%s6 + $0x100] sm:$0xff]
        %v1253 = vld [vmem:[%s6 + $0x108] sm:$0xff]
        %v1254 = vld [vmem:[%s6 + $0x110] sm:$0xff]
        %v1255 = vld [vmem:[%s6 + $0x118] sm:$0xff]
        %v1256 = vld [vmem:[%s6 + $0x120] sm:$0xff]
        %v1257 = vld [vmem:[%s6 + $0x128] sm:$0xff]
        %v1258 = vld [vmem:[%s6 + $0x130] sm:$0xff]
        %v1259 = vld [vmem:[%s6 + $0x138] sm:$0xff]
        %v1260 = vld [vmem:[%s6 + $0x140] sm:$0xff]
        %v1261 = vld [vmem:[%s6 + $0x148] sm:$0xff]
        %v1262 = vld [vmem:[%s6 + $0x150] sm:$0xff]
        %v1263 = vld [vmem:[%s6 + $0x158] sm:$0xff]
        %v1264 = vld [vmem:[%s6 + $0x160] sm:$0xff]
        %v1265 = vld [vmem:[%s6 + $0x168] sm:$0xff]
        %v1266 = vld [vmem:[%s6 + $0x170] sm:$0xff]
        %v1267 = vld [vmem:[%s6 + $0x178] sm:$0xff]
        %v1268 = vld [vmem:[%s6 + $0x180] sm:$0xff]
        %v1269 = vld [vmem:[%s6 + $0x188] sm:$0xff]
        %v1270 = vld [vmem:[%s6 + $0x190] sm:$0xff]
        %v1271 = vld [vmem:[%s6 + $0x198] sm:$0xff]
        %v1272 = vld [vmem:[%s6 + $0x1a0] sm:$0xff]
        %v1273 = vld [vmem:[%s6 + $0x1a8] sm:$0xff]
        %v1274 = vld [vmem:[%s6 + $0x1b0] sm:$0xff]
        %v1275 = vld [vmem:[%s6 + $0x1b8] sm:$0xff]
        %v1276 = vld [vmem:[%s6 + $0x1c0] sm:$0xff]
        %v1277 = vld [vmem:[%s6 + $0x1c8] sm:$0xff]
        %v1278 = vld [vmem:[%s6 + $0x1d0] sm:$0xff]
        %v1279 = vld [vmem:[%s6 + $0x1d8] sm:$0xff]
        %v1280 = vld [vmem:[%s6 + $0x1e0] sm:$0xff]
        %v1281 = vld [vmem:[%s6 + $0x1e8] sm:$0xff]
        %v1282 = vld [vmem:[%s6 + $0x1f0] sm:$0xff]
        %v1283 = vld [vmem:[%s6 + $0x1f8] sm:$0xff]
        %v1348 = vunpack.c.l.b16 %v1220
        %v1349 = vunpack.c.h.b16 %v1220
        %v1350 = vunpack.c.l.b16 %v1221
        %v1351 = vunpack.c.h.b16 %v1221
        %v1352 = vunpack.c.l.b16 %v1222
        %v1353 = vunpack.c.h.b16 %v1222
        %v1354 = vunpack.c.l.b16 %v1223
        %v1355 = vunpack.c.h.b16 %v1223
        %v1356 = vunpack.c.l.b16 %v1224
        %v1357 = vunpack.c.h.b16 %v1224
        %v1358 = vunpack.c.l.b16 %v1225
        %v1359 = vunpack.c.h.b16 %v1225
        %v1360 = vunpack.c.l.b16 %v1226
        %v1361 = vunpack.c.h.b16 %v1226
        %v1362 = vunpack.c.l.b16 %v1227
        %v1363 = vunpack.c.h.b16 %v1227
        %v1364 = vunpack.c.l.b16 %v1228
        %v1365 = vunpack.c.h.b16 %v1228
        %v1366 = vunpack.c.l.b16 %v1229
        %v1367 = vunpack.c.h.b16 %v1229
        %v1368 = vunpack.c.l.b16 %v1230
        %v1369 = vunpack.c.h.b16 %v1230
        %v1370 = vunpack.c.l.b16 %v1231
        %v1371 = vunpack.c.h.b16 %v1231
        %v1372 = vunpack.c.l.b16 %v1232
        %v1373 = vunpack.c.h.b16 %v1232
        %v1374 = vunpack.c.l.b16 %v1233
        %v1375 = vunpack.c.h.b16 %v1233
        %v1376 = vunpack.c.l.b16 %v1234
        %v1377 = vunpack.c.h.b16 %v1234
        %v1378 = vunpack.c.l.b16 %v1235
        %v1379 = vunpack.c.h.b16 %v1235
        %v1380 = vunpack.c.l.b16 %v1236
        %v1381 = vunpack.c.h.b16 %v1236
        %v1382 = vunpack.c.l.b16 %v1237
        %v1383 = vunpack.c.h.b16 %v1237
        %v1384 = vunpack.c.l.b16 %v1238
        %v1385 = vunpack.c.h.b16 %v1238
        %v1386 = vunpack.c.l.b16 %v1239
        %v1387 = vunpack.c.h.b16 %v1239
        %v1388 = vunpack.c.l.b16 %v1240
        %v1389 = vunpack.c.h.b16 %v1240
        %v1390 = vunpack.c.l.b16 %v1241
        %v1391 = vunpack.c.h.b16 %v1241
        %v1392 = vunpack.c.l.b16 %v1242
        %v1393 = vunpack.c.h.b16 %v1242
        %v1394 = vunpack.c.l.b16 %v1243
        %v1395 = vunpack.c.h.b16 %v1243
        %v1396 = vunpack.c.l.b16 %v1244
        %v1397 = vunpack.c.h.b16 %v1244
        %v1398 = vunpack.c.l.b16 %v1245
        %v1399 = vunpack.c.h.b16 %v1245
        %v1400 = vunpack.c.l.b16 %v1246
        %v1401 = vunpack.c.h.b16 %v1246
        %v1402 = vunpack.c.l.b16 %v1247
        %v1403 = vunpack.c.h.b16 %v1247
        %v1404 = vunpack.c.l.b16 %v1248
        %v1405 = vunpack.c.h.b16 %v1248
        %v1406 = vunpack.c.l.b16 %v1249
        %v1407 = vunpack.c.h.b16 %v1249
        %v1408 = vunpack.c.l.b16 %v1250
        %v1409 = vunpack.c.h.b16 %v1250
        %v1410 = vunpack.c.l.b16 %v1251
        %v1411 = vunpack.c.h.b16 %v1251
        %v1412 = vunpack.c.l.b16 %v1252
        %v1413 = vunpack.c.h.b16 %v1252
        %v1414 = vunpack.c.l.b16 %v1253
        %v1415 = vunpack.c.h.b16 %v1253
        %v1416 = vunpack.c.l.b16 %v1254
        %v1417 = vunpack.c.h.b16 %v1254
        %v1418 = vunpack.c.l.b16 %v1255
        %v1419 = vunpack.c.h.b16 %v1255
        %v1420 = vunpack.c.l.b16 %v1256
        %v1421 = vunpack.c.h.b16 %v1256
        %v1422 = vunpack.c.l.b16 %v1257
        %v1423 = vunpack.c.h.b16 %v1257
        %v1424 = vunpack.c.l.b16 %v1258
        %v1425 = vunpack.c.h.b16 %v1258
        %v1426 = vunpack.c.l.b16 %v1259
        %v1427 = vunpack.c.h.b16 %v1259
        %v1428 = vunpack.c.l.b16 %v1260
        %v1429 = vunpack.c.h.b16 %v1260
        %v1430 = vunpack.c.l.b16 %v1261
        %v1431 = vunpack.c.h.b16 %v1261
        %v1432 = vunpack.c.l.b16 %v1262
        %v1433 = vunpack.c.h.b16 %v1262
        %v1434 = vunpack.c.l.b16 %v1263
        %v1435 = vunpack.c.h.b16 %v1263
        %v1436 = vunpack.c.l.b16 %v1264
        %v1437 = vunpack.c.h.b16 %v1264
        %v1438 = vunpack.c.l.b16 %v1265
        %v1439 = vunpack.c.h.b16 %v1265
        %v1440 = vunpack.c.l.b16 %v1266
        %v1441 = vunpack.c.h.b16 %v1266
        %v1442 = vunpack.c.l.b16 %v1267
        %v1443 = vunpack.c.h.b16 %v1267
        %v1444 = vunpack.c.l.b16 %v1268
        %v1445 = vunpack.c.h.b16 %v1268
        %v1446 = vunpack.c.l.b16 %v1269
        %v1447 = vunpack.c.h.b16 %v1269
        %v1448 = vunpack.c.l.b16 %v1270
        %v1449 = vunpack.c.h.b16 %v1270
        %v1450 = vunpack.c.l.b16 %v1271
        %v1451 = vunpack.c.h.b16 %v1271
        %v1452 = vunpack.c.l.b16 %v1272
        %v1453 = vunpack.c.h.b16 %v1272
        %v1454 = vunpack.c.l.b16 %v1273
        %v1455 = vunpack.c.h.b16 %v1273
        %v1456 = vunpack.c.l.b16 %v1274
        %v1457 = vunpack.c.h.b16 %v1274
        %v1458 = vunpack.c.l.b16 %v1275
        %v1459 = vunpack.c.h.b16 %v1275
        %v1460 = vunpack.c.l.b16 %v1276
        %v1461 = vunpack.c.h.b16 %v1276
        %v1462 = vunpack.c.l.b16 %v1277
        %v1463 = vunpack.c.h.b16 %v1277
        %v1464 = vunpack.c.l.b16 %v1278
        %v1465 = vunpack.c.h.b16 %v1278
        %v1466 = vunpack.c.l.b16 %v1279
        %v1467 = vunpack.c.h.b16 %v1279
        %v1468 = vunpack.c.l.b16 %v1280
        %v1469 = vunpack.c.h.b16 %v1280
        %v1470 = vunpack.c.l.b16 %v1281
        %v1471 = vunpack.c.h.b16 %v1281
        %v1472 = vunpack.c.l.b16 %v1282
        %v1473 = vunpack.c.h.b16 %v1282
        %v1474 = vunpack.c.l.b16 %v1283
        %v1475 = vunpack.c.h.b16 %v1283
        %v1476 = vpack.c.b16 %v1352, %v1348
        %v1477 = vpack.c.b16 %v1353, %v1349
        %v1478 = vpack.c.b16 %v1354, %v1350
        %v1479 = vpack.c.b16 %v1355, %v1351
        %v1480 = vpack.c.b16 %v1360, %v1356
        %v1481 = vpack.c.b16 %v1361, %v1357
        %v1482 = vpack.c.b16 %v1362, %v1358
        %v1483 = vpack.c.b16 %v1363, %v1359
        %v1484 = vpack.c.b16 %v1368, %v1364
        %v1485 = vpack.c.b16 %v1369, %v1365
        %v1486 = vpack.c.b16 %v1370, %v1366
        %v1487 = vpack.c.b16 %v1371, %v1367
        %v1488 = vpack.c.b16 %v1376, %v1372
        %v1489 = vpack.c.b16 %v1377, %v1373
        %v1490 = vpack.c.b16 %v1378, %v1374
        %v1491 = vpack.c.b16 %v1379, %v1375
        %v1492 = vpack.c.b16 %v1384, %v1380
        %v1493 = vpack.c.b16 %v1385, %v1381
        %v1494 = vpack.c.b16 %v1386, %v1382
        %v1495 = vpack.c.b16 %v1387, %v1383
        %v1496 = vpack.c.b16 %v1392, %v1388
        %v1497 = vpack.c.b16 %v1393, %v1389
        %v1498 = vpack.c.b16 %v1394, %v1390
        %v1499 = vpack.c.b16 %v1395, %v1391
        %v1500 = vpack.c.b16 %v1400, %v1396
        %v1501 = vpack.c.b16 %v1401, %v1397
        %v1502 = vpack.c.b16 %v1402, %v1398
        %v1503 = vpack.c.b16 %v1403, %v1399
        %v1504 = vpack.c.b16 %v1408, %v1404
        %v1505 = vpack.c.b16 %v1409, %v1405
        %v1506 = vpack.c.b16 %v1410, %v1406
        %v1507 = vpack.c.b16 %v1411, %v1407
        %v1508 = vpack.c.b16 %v1416, %v1412
        %v1509 = vpack.c.b16 %v1417, %v1413
        %v1510 = vpack.c.b16 %v1418, %v1414
        %v1511 = vpack.c.b16 %v1419, %v1415
        %v1512 = vpack.c.b16 %v1424, %v1420
        %v1513 = vpack.c.b16 %v1425, %v1421
        %v1514 = vpack.c.b16 %v1426, %v1422
        %v1515 = vpack.c.b16 %v1427, %v1423
        %v1516 = vpack.c.b16 %v1432, %v1428
        %v1517 = vpack.c.b16 %v1433, %v1429
        %v1518 = vpack.c.b16 %v1434, %v1430
        %v1519 = vpack.c.b16 %v1435, %v1431
        %v1520 = vpack.c.b16 %v1440, %v1436
        %v1521 = vpack.c.b16 %v1441, %v1437
        %v1522 = vpack.c.b16 %v1442, %v1438
        %v1523 = vpack.c.b16 %v1443, %v1439
        %v1524 = vpack.c.b16 %v1448, %v1444
        %v1525 = vpack.c.b16 %v1449, %v1445
        %v1526 = vpack.c.b16 %v1450, %v1446
        %v1527 = vpack.c.b16 %v1451, %v1447
        %v1528 = vpack.c.b16 %v1456, %v1452
        %v1529 = vpack.c.b16 %v1457, %v1453
        %v1530 = vpack.c.b16 %v1458, %v1454
        %v1531 = vpack.c.b16 %v1459, %v1455
        %v1532 = vpack.c.b16 %v1464, %v1460
        %v1533 = vpack.c.b16 %v1465, %v1461
        %v1534 = vpack.c.b16 %v1466, %v1462
        %v1535 = vpack.c.b16 %v1467, %v1463
        %v1536 = vpack.c.b16 %v1472, %v1468
        %v1537 = vpack.c.b16 %v1473, %v1469
        %v1538 = vpack.c.b16 %v1474, %v1470
        %v1539 = vpack.c.b16 %v1475, %v1471
        %1604 = vmatpush.bf16.msra.mxu0 %v1504
        %1605 = vmatpush.bf16.msra.mxu0 %v1500
        %1606 = vmatpush.bf16.msra.mxu0 %v1496
        %1607 = vmatpush.bf16.msra.mxu0 %v1492
        %1608 = vmatpush.bf16.msra.mxu0 %v1488
        %1609 = vmatpush.bf16.msra.mxu0 %v1484
        %1610 = vmatpush.bf16.msra.mxu0 %v1480
        %1611 = vmatpush.bf16.msra.mxu0 %v1476
        %1612 = vmatmul.bf16.gmra.mxu0 %v1172
        %v1613 = vpop.f32.mrf.mxu0
        %v1614 = vadd.f32 0.0, %v1613
        %v1615 = vpop.f32.mrf.mxu0
        %v1616 = vadd.f32 0.0, %v1615
        %1617 = vmatmul.bf16.gmra.mxu0 %v1174
        %v1618 = vpop.f32.mrf.mxu0
        %v1619 = vadd.f32 0.0, %v1618
        %v1620 = vpop.f32.mrf.mxu0
        %v1621 = vadd.f32 0.0, %v1620
        %1622 = vmatmul.bf16.gmra.mxu0 %v1176
        %v1623 = vpop.f32.mrf.mxu0
        %v1624 = vadd.f32 0.0, %v1623
        %v1625 = vpop.f32.mrf.mxu0
        %v1626 = vadd.f32 0.0, %v1625
        %1627 = vmatmul.bf16.gmra.mxu0 %v1178
        %v1628 = vpop.f32.mrf.mxu0
        %v1629 = vadd.f32 0.0, %v1628
        %v1630 = vpop.f32.mrf.mxu0
        %v1631 = vadd.f32 0.0, %v1630
        %1632 = vmatmul.bf16.gmra.mxu0 %v1180
        %v1633 = vpop.f32.mrf.mxu0
        %v1634 = vadd.f32 0.0, %v1633
        %v1635 = vpop.f32.mrf.mxu0
        %v1636 = vadd.f32 0.0, %v1635
        %1637 = vmatmul.bf16.gmra.mxu0 %v1182
        %v1638 = vpop.f32.mrf.mxu0
        %v1639 = vadd.f32 0.0, %v1638
        %v1640 = vpop.f32.mrf.mxu0
        %v1641 = vadd.f32 0.0, %v1640
        %1642 = vmatmul.bf16.gmra.mxu0 %v1184
        %v1643 = vpop.f32.mrf.mxu0
        %v1644 = vadd.f32 0.0, %v1643
        %v1645 = vpop.f32.mrf.mxu0
        %v1646 = vadd.f32 0.0, %v1645
        %1647 = vmatmul.bf16.gmra.mxu0 %v1186
        %v1648 = vpop.f32.mrf.mxu0
        %v1649 = vadd.f32 0.0, %v1648
        %v1650 = vpop.f32.mrf.mxu0
        %v1651 = vadd.f32 0.0, %v1650
        %1652 = vmatmul.bf16.gmra.mxu0 %v1188
        %v1653 = vpop.f32.mrf.mxu0
        %v1654 = vadd.f32 0.0, %v1653
        %v1655 = vpop.f32.mrf.mxu0
        %v1656 = vadd.f32 0.0, %v1655
        %1657 = vmatmul.bf16.gmra.mxu0 %v1190
        %v1658 = vpop.f32.mrf.mxu0
        %v1659 = vadd.f32 0.0, %v1658
        %v1660 = vpop.f32.mrf.mxu0
        %v1661 = vadd.f32 0.0, %v1660
        %1662 = vmatmul.bf16.gmra.mxu0 %v1192
        %v1663 = vpop.f32.mrf.mxu0
        %v1664 = vadd.f32 0.0, %v1663
        %v1665 = vpop.f32.mrf.mxu0
        %v1666 = vadd.f32 0.0, %v1665
        %1667 = vmatmul.bf16.gmra.mxu0 %v1194
        %v1668 = vpop.f32.mrf.mxu0
        %v1669 = vadd.f32 0.0, %v1668
        %v1670 = vpop.f32.mrf.mxu0
        %v1671 = vadd.f32 0.0, %v1670
        %1672 = vmatmul.bf16.gmra.mxu0 %v1196
        %v1673 = vpop.f32.mrf.mxu0
        %v1674 = vadd.f32 0.0, %v1673
        %v1675 = vpop.f32.mrf.mxu0
        %v1676 = vadd.f32 0.0, %v1675
        %1677 = vmatmul.bf16.gmra.mxu0 %v1198
        %v1678 = vpop.f32.mrf.mxu0
        %v1679 = vadd.f32 0.0, %v1678
        %v1680 = vpop.f32.mrf.mxu0
        %v1681 = vadd.f32 0.0, %v1680
        %1682 = vmatmul.bf16.gmra.mxu0 %v1200
        %v1683 = vpop.f32.mrf.mxu0
        %v1684 = vadd.f32 0.0, %v1683
        %v1685 = vpop.f32.mrf.mxu0
        %v1686 = vadd.f32 0.0, %v1685
        %1687 = vmatmul.bf16.gmra.mxu0 %v1202
        %v1688 = vpop.f32.mrf.mxu0
        %v1689 = vadd.f32 0.0, %v1688
        %v1690 = vpop.f32.mrf.mxu0
        %v1691 = vadd.f32 0.0, %v1690
        %1692 = vdwg.mxu0
        %1693 = vmatpush.bf16.msra.mxu0 %v1536
        %1694 = vmatpush.bf16.msra.mxu0 %v1532
        %1695 = vmatpush.bf16.msra.mxu0 %v1528
        %1696 = vmatpush.bf16.msra.mxu0 %v1524
        %1697 = vmatpush.bf16.msra.mxu0 %v1520
        %1698 = vmatpush.bf16.msra.mxu0 %v1516
        %1699 = vmatpush.bf16.msra.mxu0 %v1512
        %1700 = vmatpush.bf16.msra.mxu0 %v1508
        %1701 = vmatmul.bf16.gmra.mxu0 %v1173
        %v1702 = vpop.f32.mrf.mxu0
        %v1703 = vadd.f32 %v1614, %v1702
        %v1704 = vpop.f32.mrf.mxu0
        %v1705 = vadd.f32 %v1616, %v1704
        %1706 = vmatmul.bf16.gmra.mxu0 %v1175
        %v1707 = vpop.f32.mrf.mxu0
        %v1708 = vadd.f32 %v1619, %v1707
        %v1709 = vpop.f32.mrf.mxu0
        %v1710 = vadd.f32 %v1621, %v1709
        %1711 = vmatmul.bf16.gmra.mxu0 %v1177
        %v1712 = vpop.f32.mrf.mxu0
        %v1713 = vadd.f32 %v1624, %v1712
        %v1714 = vpop.f32.mrf.mxu0
        %v1715 = vadd.f32 %v1626, %v1714
        %1716 = vmatmul.bf16.gmra.mxu0 %v1179
        %v1717 = vpop.f32.mrf.mxu0
        %v1718 = vadd.f32 %v1629, %v1717
        %v1719 = vpop.f32.mrf.mxu0
        %v1720 = vadd.f32 %v1631, %v1719
        %1721 = vmatmul.bf16.gmra.mxu0 %v1181
        %v1722 = vpop.f32.mrf.mxu0
        %v1723 = vadd.f32 %v1634, %v1722
        %v1724 = vpop.f32.mrf.mxu0
        %v1725 = vadd.f32 %v1636, %v1724
        %1726 = vmatmul.bf16.gmra.mxu0 %v1183
        %v1727 = vpop.f32.mrf.mxu0
        %v1728 = vadd.f32 %v1639, %v1727
        %v1729 = vpop.f32.mrf.mxu0
        %v1730 = vadd.f32 %v1641, %v1729
        %1731 = vmatmul.bf16.gmra.mxu0 %v1185
        %v1732 = vpop.f32.mrf.mxu0
        %v1733 = vadd.f32 %v1644, %v1732
        %v1734 = vpop.f32.mrf.mxu0
        %v1735 = vadd.f32 %v1646, %v1734
        %1736 = vmatmul.bf16.gmra.mxu0 %v1187
        %v1737 = vpop.f32.mrf.mxu0
        %v1738 = vadd.f32 %v1649, %v1737
        %v1739 = vpop.f32.mrf.mxu0
        %v1740 = vadd.f32 %v1651, %v1739
        %1741 = vmatmul.bf16.gmra.mxu0 %v1189
        %v1742 = vpop.f32.mrf.mxu0
        %v1743 = vadd.f32 %v1654, %v1742
        %v1744 = vpop.f32.mrf.mxu0
        %v1745 = vadd.f32 %v1656, %v1744
        %1746 = vmatmul.bf16.gmra.mxu0 %v1191
        %v1747 = vpop.f32.mrf.mxu0
        %v1748 = vadd.f32 %v1659, %v1747
        %v1749 = vpop.f32.mrf.mxu0
        %v1750 = vadd.f32 %v1661, %v1749
        %1751 = vmatmul.bf16.gmra.mxu0 %v1193
        %v1752 = vpop.f32.mrf.mxu0
        %v1753 = vadd.f32 %v1664, %v1752
        %v1754 = vpop.f32.mrf.mxu0
        %v1755 = vadd.f32 %v1666, %v1754
        %1756 = vmatmul.bf16.gmra.mxu0 %v1195
        %v1757 = vpop.f32.mrf.mxu0
        %v1758 = vadd.f32 %v1669, %v1757
        %v1759 = vpop.f32.mrf.mxu0
        %v1760 = vadd.f32 %v1671, %v1759
        %1761 = vmatmul.bf16.gmra.mxu0 %v1197
        %v1762 = vpop.f32.mrf.mxu0
        %v1763 = vadd.f32 %v1674, %v1762
        %v1764 = vpop.f32.mrf.mxu0
        %v1765 = vadd.f32 %v1676, %v1764
        %1766 = vmatmul.bf16.gmra.mxu0 %v1199
        %v1767 = vpop.f32.mrf.mxu0
        %v1768 = vadd.f32 %v1679, %v1767
        %v1769 = vpop.f32.mrf.mxu0
        %v1770 = vadd.f32 %v1681, %v1769
        %1771 = vmatmul.bf16.gmra.mxu0 %v1201
        %v1772 = vpop.f32.mrf.mxu0
        %v1773 = vadd.f32 %v1684, %v1772
        %v1774 = vpop.f32.mrf.mxu0
        %v1775 = vadd.f32 %v1686, %v1774
        %1776 = vmatmul.bf16.gmra.mxu0 %v1203
        %v1777 = vpop.f32.mrf.mxu0
        %v1778 = vadd.f32 %v1689, %v1777
        %v1779 = vpop.f32.mrf.mxu0
        %v1780 = vadd.f32 %v1691, %v1779
        %1781 = vdwg.mxu0
        %1782 = vmatpush.bf16.msra.mxu0 %v1505
        %1783 = vmatpush.bf16.msra.mxu0 %v1501
        %1784 = vmatpush.bf16.msra.mxu0 %v1497
        %1785 = vmatpush.bf16.msra.mxu0 %v1493
        %1786 = vmatpush.bf16.msra.mxu0 %v1489
        %1787 = vmatpush.bf16.msra.mxu0 %v1485
        %1788 = vmatpush.bf16.msra.mxu0 %v1481
        %1789 = vmatpush.bf16.msra.mxu0 %v1477
        %1790 = vmatmul.bf16.gmra.mxu0 %v1172
        %v1791 = vpop.f32.mrf.mxu0
        %v1792 = vadd.f32 0.0, %v1791
        %v1793 = vpop.f32.mrf.mxu0
        %v1794 = vadd.f32 0.0, %v1793
        %1795 = vmatmul.bf16.gmra.mxu0 %v1174
        %v1796 = vpop.f32.mrf.mxu0
        %v1797 = vadd.f32 0.0, %v1796
        %v1798 = vpop.f32.mrf.mxu0
        %v1799 = vadd.f32 0.0, %v1798
        %1800 = vmatmul.bf16.gmra.mxu0 %v1176
        %v1801 = vpop.f32.mrf.mxu0
        %v1802 = vadd.f32 0.0, %v1801
        %v1803 = vpop.f32.mrf.mxu0
        %v1804 = vadd.f32 0.0, %v1803
        %1805 = vmatmul.bf16.gmra.mxu0 %v1178
        %v1806 = vpop.f32.mrf.mxu0
        %v1807 = vadd.f32 0.0, %v1806
        %v1808 = vpop.f32.mrf.mxu0
        %v1809 = vadd.f32 0.0, %v1808
        %1810 = vmatmul.bf16.gmra.mxu0 %v1180
        %v1811 = vpop.f32.mrf.mxu0
        %v1812 = vadd.f32 0.0, %v1811
        %v1813 = vpop.f32.mrf.mxu0
        %v1814 = vadd.f32 0.0, %v1813
        %1815 = vmatmul.bf16.gmra.mxu0 %v1182
        %v1816 = vpop.f32.mrf.mxu0
        %v1817 = vadd.f32 0.0, %v1816
        %v1818 = vpop.f32.mrf.mxu0
        %v1819 = vadd.f32 0.0, %v1818
        %1820 = vmatmul.bf16.gmra.mxu0 %v1184
        %v1821 = vpop.f32.mrf.mxu0
        %v1822 = vadd.f32 0.0, %v1821
        %v1823 = vpop.f32.mrf.mxu0
        %v1824 = vadd.f32 0.0, %v1823
        %1825 = vmatmul.bf16.gmra.mxu0 %v1186
        %v1826 = vpop.f32.mrf.mxu0
        %v1827 = vadd.f32 0.0, %v1826
        %v1828 = vpop.f32.mrf.mxu0
        %v1829 = vadd.f32 0.0, %v1828
        %1830 = vmatmul.bf16.gmra.mxu0 %v1188
        %v1831 = vpop.f32.mrf.mxu0
        %v1832 = vadd.f32 0.0, %v1831
        %v1833 = vpop.f32.mrf.mxu0
        %v1834 = vadd.f32 0.0, %v1833
        %1835 = vmatmul.bf16.gmra.mxu0 %v1190
        %v1836 = vpop.f32.mrf.mxu0
        %v1837 = vadd.f32 0.0, %v1836
        %v1838 = vpop.f32.mrf.mxu0
        %v1839 = vadd.f32 0.0, %v1838
        %1840 = vmatmul.bf16.gmra.mxu0 %v1192
        %v1841 = vpop.f32.mrf.mxu0
        %v1842 = vadd.f32 0.0, %v1841
        %v1843 = vpop.f32.mrf.mxu0
        %v1844 = vadd.f32 0.0, %v1843
        %1845 = vmatmul.bf16.gmra.mxu0 %v1194
        %v1846 = vpop.f32.mrf.mxu0
        %v1847 = vadd.f32 0.0, %v1846
        %v1848 = vpop.f32.mrf.mxu0
        %v1849 = vadd.f32 0.0, %v1848
        %1850 = vmatmul.bf16.gmra.mxu0 %v1196
        %v1851 = vpop.f32.mrf.mxu0
        %v1852 = vadd.f32 0.0, %v1851
        %v1853 = vpop.f32.mrf.mxu0
        %v1854 = vadd.f32 0.0, %v1853
        %1855 = vmatmul.bf16.gmra.mxu0 %v1198
        %v1856 = vpop.f32.mrf.mxu0
        %v1857 = vadd.f32 0.0, %v1856
        %v1858 = vpop.f32.mrf.mxu0
        %v1859 = vadd.f32 0.0, %v1858
        %1860 = vmatmul.bf16.gmra.mxu0 %v1200
        %v1861 = vpop.f32.mrf.mxu0
        %v1862 = vadd.f32 0.0, %v1861
        %v1863 = vpop.f32.mrf.mxu0
        %v1864 = vadd.f32 0.0, %v1863
        %1865 = vmatmul.bf16.gmra.mxu0 %v1202
        %v1866 = vpop.f32.mrf.mxu0
        %v1867 = vadd.f32 0.0, %v1866
        %v1868 = vpop.f32.mrf.mxu0
        %v1869 = vadd.f32 0.0, %v1868
        %1870 = vdwg.mxu0
        %1871 = vmatpush.bf16.msra.mxu0 %v1537
        %1872 = vmatpush.bf16.msra.mxu0 %v1533
        %1873 = vmatpush.bf16.msra.mxu0 %v1529
        %1874 = vmatpush.bf16.msra.mxu0 %v1525
        %1875 = vmatpush.bf16.msra.mxu0 %v1521
        %1876 = vmatpush.bf16.msra.mxu0 %v1517
        %1877 = vmatpush.bf16.msra.mxu0 %v1513
        %1878 = vmatpush.bf16.msra.mxu0 %v1509
        %1879 = vmatmul.bf16.gmra.mxu0 %v1173
        %v1880 = vpop.f32.mrf.mxu0
        %v1881 = vadd.f32 %v1792, %v1880
        %v1882 = vpop.f32.mrf.mxu0
        %v1883 = vadd.f32 %v1794, %v1882
        %1884 = vmatmul.bf16.gmra.mxu0 %v1175
        %v1885 = vpop.f32.mrf.mxu0
        %v1886 = vadd.f32 %v1797, %v1885
        %v1887 = vpop.f32.mrf.mxu0
        %v1888 = vadd.f32 %v1799, %v1887
        %1889 = vmatmul.bf16.gmra.mxu0 %v1177
        %v1890 = vpop.f32.mrf.mxu0
        %v1891 = vadd.f32 %v1802, %v1890
        %v1892 = vpop.f32.mrf.mxu0
        %v1893 = vadd.f32 %v1804, %v1892
        %1894 = vmatmul.bf16.gmra.mxu0 %v1179
        %v1895 = vpop.f32.mrf.mxu0
        %v1896 = vadd.f32 %v1807, %v1895
        %v1897 = vpop.f32.mrf.mxu0
        %v1898 = vadd.f32 %v1809, %v1897
        %1899 = vmatmul.bf16.gmra.mxu0 %v1181
        %v1900 = vpop.f32.mrf.mxu0
        %v1901 = vadd.f32 %v1812, %v1900
        %v1902 = vpop.f32.mrf.mxu0
        %v1903 = vadd.f32 %v1814, %v1902
        %1904 = vmatmul.bf16.gmra.mxu0 %v1183
        %v1905 = vpop.f32.mrf.mxu0
        %v1906 = vadd.f32 %v1817, %v1905
        %v1907 = vpop.f32.mrf.mxu0
        %v1908 = vadd.f32 %v1819, %v1907
        %1909 = vmatmul.bf16.gmra.mxu0 %v1185
        %v1910 = vpop.f32.mrf.mxu0
        %v1911 = vadd.f32 %v1822, %v1910
        %v1912 = vpop.f32.mrf.mxu0
        %v1913 = vadd.f32 %v1824, %v1912
        %1914 = vmatmul.bf16.gmra.mxu0 %v1187
        %v1915 = vpop.f32.mrf.mxu0
        %v1916 = vadd.f32 %v1827, %v1915
        %v1917 = vpop.f32.mrf.mxu0
        %v1918 = vadd.f32 %v1829, %v1917
        %1919 = vmatmul.bf16.gmra.mxu0 %v1189
        %v1920 = vpop.f32.mrf.mxu0
        %v1921 = vadd.f32 %v1832, %v1920
        %v1922 = vpop.f32.mrf.mxu0
        %v1923 = vadd.f32 %v1834, %v1922
        %1924 = vmatmul.bf16.gmra.mxu0 %v1191
        %v1925 = vpop.f32.mrf.mxu0
        %v1926 = vadd.f32 %v1837, %v1925
        %v1927 = vpop.f32.mrf.mxu0
        %v1928 = vadd.f32 %v1839, %v1927
        %1929 = vmatmul.bf16.gmra.mxu0 %v1193
        %v1930 = vpop.f32.mrf.mxu0
        %v1931 = vadd.f32 %v1842, %v1930
        %v1932 = vpop.f32.mrf.mxu0
        %v1933 = vadd.f32 %v1844, %v1932
        %1934 = vmatmul.bf16.gmra.mxu0 %v1195
        %v1935 = vpop.f32.mrf.mxu0
        %v1936 = vadd.f32 %v1847, %v1935
        %v1937 = vpop.f32.mrf.mxu0
        %v1938 = vadd.f32 %v1849, %v1937
        %1939 = vmatmul.bf16.gmra.mxu0 %v1197
        %v1940 = vpop.f32.mrf.mxu0
        %v1941 = vadd.f32 %v1852, %v1940
        %v1942 = vpop.f32.mrf.mxu0
        %v1943 = vadd.f32 %v1854, %v1942
        %1944 = vmatmul.bf16.gmra.mxu0 %v1199
        %v1945 = vpop.f32.mrf.mxu0
        %v1946 = vadd.f32 %v1857, %v1945
        %v1947 = vpop.f32.mrf.mxu0
        %v1948 = vadd.f32 %v1859, %v1947
        %1949 = vmatmul.bf16.gmra.mxu0 %v1201
        %v1950 = vpop.f32.mrf.mxu0
        %v1951 = vadd.f32 %v1862, %v1950
        %v1952 = vpop.f32.mrf.mxu0
        %v1953 = vadd.f32 %v1864, %v1952
        %1954 = vmatmul.bf16.gmra.mxu0 %v1203
        %v1955 = vpop.f32.mrf.mxu0
        %v1956 = vadd.f32 %v1867, %v1955
        %v1957 = vpop.f32.mrf.mxu0
        %v1958 = vadd.f32 %v1869, %v1957
        %1959 = vdwg.mxu0
        %1960 = vmatpush.bf16.msra.mxu0 %v1506
        %1961 = vmatpush.bf16.msra.mxu0 %v1502
        %1962 = vmatpush.bf16.msra.mxu0 %v1498
        %1963 = vmatpush.bf16.msra.mxu0 %v1494
        %1964 = vmatpush.bf16.msra.mxu0 %v1490
        %1965 = vmatpush.bf16.msra.mxu0 %v1486
        %1966 = vmatpush.bf16.msra.mxu0 %v1482
        %1967 = vmatpush.bf16.msra.mxu0 %v1478
        %1968 = vmatmul.bf16.gmra.mxu0 %v1172
        %v1969 = vpop.f32.mrf.mxu0
        %v1970 = vadd.f32 0.0, %v1969
        %v1971 = vpop.f32.mrf.mxu0
        %v1972 = vadd.f32 0.0, %v1971
        %1973 = vmatmul.bf16.gmra.mxu0 %v1174
        %v1974 = vpop.f32.mrf.mxu0
        %v1975 = vadd.f32 0.0, %v1974
        %v1976 = vpop.f32.mrf.mxu0
        %v1977 = vadd.f32 0.0, %v1976
        %1978 = vmatmul.bf16.gmra.mxu0 %v1176
        %v1979 = vpop.f32.mrf.mxu0
        %v1980 = vadd.f32 0.0, %v1979
        %v1981 = vpop.f32.mrf.mxu0
        %v1982 = vadd.f32 0.0, %v1981
        %1983 = vmatmul.bf16.gmra.mxu0 %v1178
        %v1984 = vpop.f32.mrf.mxu0
        %v1985 = vadd.f32 0.0, %v1984
        %v1986 = vpop.f32.mrf.mxu0
        %v1987 = vadd.f32 0.0, %v1986
        %1988 = vmatmul.bf16.gmra.mxu0 %v1180
        %v1989 = vpop.f32.mrf.mxu0
        %v1990 = vadd.f32 0.0, %v1989
        %v1991 = vpop.f32.mrf.mxu0
        %v1992 = vadd.f32 0.0, %v1991
        %1993 = vmatmul.bf16.gmra.mxu0 %v1182
        %v1994 = vpop.f32.mrf.mxu0
        %v1995 = vadd.f32 0.0, %v1994
        %v1996 = vpop.f32.mrf.mxu0
        %v1997 = vadd.f32 0.0, %v1996
        %1998 = vmatmul.bf16.gmra.mxu0 %v1184
        %v1999 = vpop.f32.mrf.mxu0
        %v2000 = vadd.f32 0.0, %v1999
        %v2001 = vpop.f32.mrf.mxu0
        %v2002 = vadd.f32 0.0, %v2001
        %2003 = vmatmul.bf16.gmra.mxu0 %v1186
        %v2004 = vpop.f32.mrf.mxu0
        %v2005 = vadd.f32 0.0, %v2004
        %v2006 = vpop.f32.mrf.mxu0
        %v2007 = vadd.f32 0.0, %v2006
        %2008 = vmatmul.bf16.gmra.mxu0 %v1188
        %v2009 = vpop.f32.mrf.mxu0
        %v2010 = vadd.f32 0.0, %v2009
        %v2011 = vpop.f32.mrf.mxu0
        %v2012 = vadd.f32 0.0, %v2011
        %2013 = vmatmul.bf16.gmra.mxu0 %v1190
        %v2014 = vpop.f32.mrf.mxu0
        %v2015 = vadd.f32 0.0, %v2014
        %v2016 = vpop.f32.mrf.mxu0
        %v2017 = vadd.f32 0.0, %v2016
        %2018 = vmatmul.bf16.gmra.mxu0 %v1192
        %v2019 = vpop.f32.mrf.mxu0
        %v2020 = vadd.f32 0.0, %v2019
        %v2021 = vpop.f32.mrf.mxu0
        %v2022 = vadd.f32 0.0, %v2021
        %2023 = vmatmul.bf16.gmra.mxu0 %v1194
        %v2024 = vpop.f32.mrf.mxu0
        %v2025 = vadd.f32 0.0, %v2024
        %v2026 = vpop.f32.mrf.mxu0
        %v2027 = vadd.f32 0.0, %v2026
        %2028 = vmatmul.bf16.gmra.mxu0 %v1196
        %v2029 = vpop.f32.mrf.mxu0
        %v2030 = vadd.f32 0.0, %v2029
        %v2031 = vpop.f32.mrf.mxu0
        %v2032 = vadd.f32 0.0, %v2031
        %2033 = vmatmul.bf16.gmra.mxu0 %v1198
        %v2034 = vpop.f32.mrf.mxu0
        %v2035 = vadd.f32 0.0, %v2034
        %v2036 = vpop.f32.mrf.mxu0
        %v2037 = vadd.f32 0.0, %v2036
        %2038 = vmatmul.bf16.gmra.mxu0 %v1200
        %v2039 = vpop.f32.mrf.mxu0
        %v2040 = vadd.f32 0.0, %v2039
        %v2041 = vpop.f32.mrf.mxu0
        %v2042 = vadd.f32 0.0, %v2041
        %2043 = vmatmul.bf16.gmra.mxu0 %v1202
        %v2044 = vpop.f32.mrf.mxu0
        %v2045 = vadd.f32 0.0, %v2044
        %v2046 = vpop.f32.mrf.mxu0
        %v2047 = vadd.f32 0.0, %v2046
        %2048 = vdwg.mxu0
        %2049 = vmatpush.bf16.msra.mxu0 %v1538
        %2050 = vmatpush.bf16.msra.mxu0 %v1534
        %2051 = vmatpush.bf16.msra.mxu0 %v1530
        %2052 = vmatpush.bf16.msra.mxu0 %v1526
        %2053 = vmatpush.bf16.msra.mxu0 %v1522
        %2054 = vmatpush.bf16.msra.mxu0 %v1518
        %2055 = vmatpush.bf16.msra.mxu0 %v1514
        %2056 = vmatpush.bf16.msra.mxu0 %v1510
        %2057 = vmatmul.bf16.gmra.mxu0 %v1173
        %v2058 = vpop.f32.mrf.mxu0
        %v2059 = vadd.f32 %v1970, %v2058
        %v2060 = vpop.f32.mrf.mxu0
        %v2061 = vadd.f32 %v1972, %v2060
        %2062 = vmatmul.bf16.gmra.mxu0 %v1175
        %v2063 = vpop.f32.mrf.mxu0
        %v2064 = vadd.f32 %v1975, %v2063
        %v2065 = vpop.f32.mrf.mxu0
        %v2066 = vadd.f32 %v1977, %v2065
        %2067 = vmatmul.bf16.gmra.mxu0 %v1177
        %v2068 = vpop.f32.mrf.mxu0
        %v2069 = vadd.f32 %v1980, %v2068
        %v2070 = vpop.f32.mrf.mxu0
        %v2071 = vadd.f32 %v1982, %v2070
        %2072 = vmatmul.bf16.gmra.mxu0 %v1179
        %v2073 = vpop.f32.mrf.mxu0
        %v2074 = vadd.f32 %v1985, %v2073
        %v2075 = vpop.f32.mrf.mxu0
        %v2076 = vadd.f32 %v1987, %v2075
        %2077 = vmatmul.bf16.gmra.mxu0 %v1181
        %v2078 = vpop.f32.mrf.mxu0
        %v2079 = vadd.f32 %v1990, %v2078
        %v2080 = vpop.f32.mrf.mxu0
        %v2081 = vadd.f32 %v1992, %v2080
        %2082 = vmatmul.bf16.gmra.mxu0 %v1183
        %v2083 = vpop.f32.mrf.mxu0
        %v2084 = vadd.f32 %v1995, %v2083
        %v2085 = vpop.f32.mrf.mxu0
        %v2086 = vadd.f32 %v1997, %v2085
        %2087 = vmatmul.bf16.gmra.mxu0 %v1185
        %v2088 = vpop.f32.mrf.mxu0
        %v2089 = vadd.f32 %v2000, %v2088
        %v2090 = vpop.f32.mrf.mxu0
        %v2091 = vadd.f32 %v2002, %v2090
        %2092 = vmatmul.bf16.gmra.mxu0 %v1187
        %v2093 = vpop.f32.mrf.mxu0
        %v2094 = vadd.f32 %v2005, %v2093
        %v2095 = vpop.f32.mrf.mxu0
        %v2096 = vadd.f32 %v2007, %v2095
        %2097 = vmatmul.bf16.gmra.mxu0 %v1189
        %v2098 = vpop.f32.mrf.mxu0
        %v2099 = vadd.f32 %v2010, %v2098
        %v2100 = vpop.f32.mrf.mxu0
        %v2101 = vadd.f32 %v2012, %v2100
        %2102 = vmatmul.bf16.gmra.mxu0 %v1191
        %v2103 = vpop.f32.mrf.mxu0
        %v2104 = vadd.f32 %v2015, %v2103
        %v2105 = vpop.f32.mrf.mxu0
        %v2106 = vadd.f32 %v2017, %v2105
        %2107 = vmatmul.bf16.gmra.mxu0 %v1193
        %v2108 = vpop.f32.mrf.mxu0
        %v2109 = vadd.f32 %v2020, %v2108
        %v2110 = vpop.f32.mrf.mxu0
        %v2111 = vadd.f32 %v2022, %v2110
        %2112 = vmatmul.bf16.gmra.mxu0 %v1195
        %v2113 = vpop.f32.mrf.mxu0
        %v2114 = vadd.f32 %v2025, %v2113
        %v2115 = vpop.f32.mrf.mxu0
        %v2116 = vadd.f32 %v2027, %v2115
        %2117 = vmatmul.bf16.gmra.mxu0 %v1197
        %v2118 = vpop.f32.mrf.mxu0
        %v2119 = vadd.f32 %v2030, %v2118
        %v2120 = vpop.f32.mrf.mxu0
        %v2121 = vadd.f32 %v2032, %v2120
        %2122 = vmatmul.bf16.gmra.mxu0 %v1199
        %v2123 = vpop.f32.mrf.mxu0
        %v2124 = vadd.f32 %v2035, %v2123
        %v2125 = vpop.f32.mrf.mxu0
        %v2126 = vadd.f32 %v2037, %v2125
        %2127 = vmatmul.bf16.gmra.mxu0 %v1201
        %v2128 = vpop.f32.mrf.mxu0
        %v2129 = vadd.f32 %v2040, %v2128
        %v2130 = vpop.f32.mrf.mxu0
        %v2131 = vadd.f32 %v2042, %v2130
        %2132 = vmatmul.bf16.gmra.mxu0 %v1203
        %v2133 = vpop.f32.mrf.mxu0
        %v2134 = vadd.f32 %v2045, %v2133
        %v2135 = vpop.f32.mrf.mxu0
        %v2136 = vadd.f32 %v2047, %v2135
        %2137 = vdwg.mxu0
        %2138 = vmatpush.bf16.msra.mxu0 %v1507
        %2139 = vmatpush.bf16.msra.mxu0 %v1503
        %2140 = vmatpush.bf16.msra.mxu0 %v1499
        %2141 = vmatpush.bf16.msra.mxu0 %v1495
        %2142 = vmatpush.bf16.msra.mxu0 %v1491
        %2143 = vmatpush.bf16.msra.mxu0 %v1487
        %2144 = vmatpush.bf16.msra.mxu0 %v1483
        %2145 = vmatpush.bf16.msra.mxu0 %v1479
        %2146 = vmatmul.bf16.gmra.mxu0 %v1172
        %v2147 = vpop.f32.mrf.mxu0
        %v2148 = vadd.f32 0.0, %v2147
        %v2149 = vpop.f32.mrf.mxu0
        %v2150 = vadd.f32 0.0, %v2149
        %2151 = vmatmul.bf16.gmra.mxu0 %v1174
        %v2152 = vpop.f32.mrf.mxu0
        %v2153 = vadd.f32 0.0, %v2152
        %v2154 = vpop.f32.mrf.mxu0
        %v2155 = vadd.f32 0.0, %v2154
        %2156 = vmatmul.bf16.gmra.mxu0 %v1176
        %v2157 = vpop.f32.mrf.mxu0
        %v2158 = vadd.f32 0.0, %v2157
        %v2159 = vpop.f32.mrf.mxu0
        %v2160 = vadd.f32 0.0, %v2159
        %2161 = vmatmul.bf16.gmra.mxu0 %v1178
        %v2162 = vpop.f32.mrf.mxu0
        %v2163 = vadd.f32 0.0, %v2162
        %v2164 = vpop.f32.mrf.mxu0
        %v2165 = vadd.f32 0.0, %v2164
        %2166 = vmatmul.bf16.gmra.mxu0 %v1180
        %v2167 = vpop.f32.mrf.mxu0
        %v2168 = vadd.f32 0.0, %v2167
        %v2169 = vpop.f32.mrf.mxu0
        %v2170 = vadd.f32 0.0, %v2169
        %2171 = vmatmul.bf16.gmra.mxu0 %v1182
        %v2172 = vpop.f32.mrf.mxu0
        %v2173 = vadd.f32 0.0, %v2172
        %v2174 = vpop.f32.mrf.mxu0
        %v2175 = vadd.f32 0.0, %v2174
        %2176 = vmatmul.bf16.gmra.mxu0 %v1184
        %v2177 = vpop.f32.mrf.mxu0
        %v2178 = vadd.f32 0.0, %v2177
        %v2179 = vpop.f32.mrf.mxu0
        %v2180 = vadd.f32 0.0, %v2179
        %2181 = vmatmul.bf16.gmra.mxu0 %v1186
        %v2182 = vpop.f32.mrf.mxu0
        %v2183 = vadd.f32 0.0, %v2182
        %v2184 = vpop.f32.mrf.mxu0
        %v2185 = vadd.f32 0.0, %v2184
        %2186 = vmatmul.bf16.gmra.mxu0 %v1188
        %v2187 = vpop.f32.mrf.mxu0
        %v2188 = vadd.f32 0.0, %v2187
        %v2189 = vpop.f32.mrf.mxu0
        %v2190 = vadd.f32 0.0, %v2189
        %2191 = vmatmul.bf16.gmra.mxu0 %v1190
        %v2192 = vpop.f32.mrf.mxu0
        %v2193 = vadd.f32 0.0, %v2192
        %v2194 = vpop.f32.mrf.mxu0
        %v2195 = vadd.f32 0.0, %v2194
        %2196 = vmatmul.bf16.gmra.mxu0 %v1192
        %v2197 = vpop.f32.mrf.mxu0
        %v2198 = vadd.f32 0.0, %v2197
        %v2199 = vpop.f32.mrf.mxu0
        %v2200 = vadd.f32 0.0, %v2199
        %2201 = vmatmul.bf16.gmra.mxu0 %v1194
        %v2202 = vpop.f32.mrf.mxu0
        %v2203 = vadd.f32 0.0, %v2202
        %v2204 = vpop.f32.mrf.mxu0
        %v2205 = vadd.f32 0.0, %v2204
        %2206 = vmatmul.bf16.gmra.mxu0 %v1196
        %v2207 = vpop.f32.mrf.mxu0
        %v2208 = vadd.f32 0.0, %v2207
        %v2209 = vpop.f32.mrf.mxu0
        %v2210 = vadd.f32 0.0, %v2209
        %2211 = vmatmul.bf16.gmra.mxu0 %v1198
        %v2212 = vpop.f32.mrf.mxu0
        %v2213 = vadd.f32 0.0, %v2212
        %v2214 = vpop.f32.mrf.mxu0
        %v2215 = vadd.f32 0.0, %v2214
        %2216 = vmatmul.bf16.gmra.mxu0 %v1200
        %v2217 = vpop.f32.mrf.mxu0
        %v2218 = vadd.f32 0.0, %v2217
        %v2219 = vpop.f32.mrf.mxu0
        %v2220 = vadd.f32 0.0, %v2219
        %2221 = vmatmul.bf16.gmra.mxu0 %v1202
        %v2222 = vpop.f32.mrf.mxu0
        %v2223 = vadd.f32 0.0, %v2222
        %v2224 = vpop.f32.mrf.mxu0
        %v2225 = vadd.f32 0.0, %v2224
        %2226 = vdwg.mxu0
        %2227 = vmatpush.bf16.msra.mxu0 %v1539
        %2228 = vmatpush.bf16.msra.mxu0 %v1535
        %2229 = vmatpush.bf16.msra.mxu0 %v1531
        %2230 = vmatpush.bf16.msra.mxu0 %v1527
        %2231 = vmatpush.bf16.msra.mxu0 %v1523
        %2232 = vmatpush.bf16.msra.mxu0 %v1519
        %2233 = vmatpush.bf16.msra.mxu0 %v1515
        %2234 = vmatpush.bf16.msra.mxu0 %v1511
        %2235 = vmatmul.bf16.gmra.mxu0 %v1173
        %v2236 = vpop.f32.mrf.mxu0
        %v2237 = vadd.f32 %v2148, %v2236
        %v2238 = vpop.f32.mrf.mxu0
        %v2239 = vadd.f32 %v2150, %v2238
        %2240 = vmatmul.bf16.gmra.mxu0 %v1175
        %v2241 = vpop.f32.mrf.mxu0
        %v2242 = vadd.f32 %v2153, %v2241
        %v2243 = vpop.f32.mrf.mxu0
        %v2244 = vadd.f32 %v2155, %v2243
        %2245 = vmatmul.bf16.gmra.mxu0 %v1177
        %v2246 = vpop.f32.mrf.mxu0
        %v2247 = vadd.f32 %v2158, %v2246
        %v2248 = vpop.f32.mrf.mxu0
        %v2249 = vadd.f32 %v2160, %v2248
        %2250 = vmatmul.bf16.gmra.mxu0 %v1179
        %v2251 = vpop.f32.mrf.mxu0
        %v2252 = vadd.f32 %v2163, %v2251
        %v2253 = vpop.f32.mrf.mxu0
        %v2254 = vadd.f32 %v2165, %v2253
        %2255 = vmatmul.bf16.gmra.mxu0 %v1181
        %v2256 = vpop.f32.mrf.mxu0
        %v2257 = vadd.f32 %v2168, %v2256
        %v2258 = vpop.f32.mrf.mxu0
        %v2259 = vadd.f32 %v2170, %v2258
        %2260 = vmatmul.bf16.gmra.mxu0 %v1183
        %v2261 = vpop.f32.mrf.mxu0
        %v2262 = vadd.f32 %v2173, %v2261
        %v2263 = vpop.f32.mrf.mxu0
        %v2264 = vadd.f32 %v2175, %v2263
        %2265 = vmatmul.bf16.gmra.mxu0 %v1185
        %v2266 = vpop.f32.mrf.mxu0
        %v2267 = vadd.f32 %v2178, %v2266
        %v2268 = vpop.f32.mrf.mxu0
        %v2269 = vadd.f32 %v2180, %v2268
        %2270 = vmatmul.bf16.gmra.mxu0 %v1187
        %v2271 = vpop.f32.mrf.mxu0
        %v2272 = vadd.f32 %v2183, %v2271
        %v2273 = vpop.f32.mrf.mxu0
        %v2274 = vadd.f32 %v2185, %v2273
        %2275 = vmatmul.bf16.gmra.mxu0 %v1189
        %v2276 = vpop.f32.mrf.mxu0
        %v2277 = vadd.f32 %v2188, %v2276
        %v2278 = vpop.f32.mrf.mxu0
        %v2279 = vadd.f32 %v2190, %v2278
        %2280 = vmatmul.bf16.gmra.mxu0 %v1191
        %v2281 = vpop.f32.mrf.mxu0
        %v2282 = vadd.f32 %v2193, %v2281
        %v2283 = vpop.f32.mrf.mxu0
        %v2284 = vadd.f32 %v2195, %v2283
        %2285 = vmatmul.bf16.gmra.mxu0 %v1193
        %v2286 = vpop.f32.mrf.mxu0
        %v2287 = vadd.f32 %v2198, %v2286
        %v2288 = vpop.f32.mrf.mxu0
        %v2289 = vadd.f32 %v2200, %v2288
        %2290 = vmatmul.bf16.gmra.mxu0 %v1195
        %v2291 = vpop.f32.mrf.mxu0
        %v2292 = vadd.f32 %v2203, %v2291
        %v2293 = vpop.f32.mrf.mxu0
        %v2294 = vadd.f32 %v2205, %v2293
        %2295 = vmatmul.bf16.gmra.mxu0 %v1197
        %v2296 = vpop.f32.mrf.mxu0
        %v2297 = vadd.f32 %v2208, %v2296
        %v2298 = vpop.f32.mrf.mxu0
        %v2299 = vadd.f32 %v2210, %v2298
        %2300 = vmatmul.bf16.gmra.mxu0 %v1199
        %v2301 = vpop.f32.mrf.mxu0
        %v2302 = vadd.f32 %v2213, %v2301
        %v2303 = vpop.f32.mrf.mxu0
        %v2304 = vadd.f32 %v2215, %v2303
        %2305 = vmatmul.bf16.gmra.mxu0 %v1201
        %v2306 = vpop.f32.mrf.mxu0
        %v2307 = vadd.f32 %v2218, %v2306
        %v2308 = vpop.f32.mrf.mxu0
        %v2309 = vadd.f32 %v2220, %v2308
        %2310 = vmatmul.bf16.gmra.mxu0 %v1203
        %v2311 = vpop.f32.mrf.mxu0
        %v2312 = vadd.f32 %v2223, %v2311
        %v2313 = vpop.f32.mrf.mxu0
        %v2314 = vadd.f32 %v2225, %v2313
        %2315 = vdwg.mxu0
        %v2316 = vld [vmem:[%s5] sm:$0xff]
        %v2317 = vld [vmem:[%s5 + $0x8] sm:$0xff]
        %v2318 = vld [vmem:[%s5 + $0x10] sm:$0xff]
        %v2319 = vld [vmem:[%s5 + $0x18] sm:$0xff]
        %v2320 = vld [vmem:[%s5 + $0x20] sm:$0xff]
        %v2321 = vld [vmem:[%s5 + $0x28] sm:$0xff]
        %v2322 = vld [vmem:[%s5 + $0x30] sm:$0xff]
        %v2323 = vld [vmem:[%s5 + $0x38] sm:$0xff]
        %v2324 = vld [vmem:[%s5 + $0x40] sm:$0xff]
        %v2325 = vld [vmem:[%s5 + $0x48] sm:$0xff]
        %v2326 = vld [vmem:[%s5 + $0x50] sm:$0xff]
        %v2327 = vld [vmem:[%s5 + $0x58] sm:$0xff]
        %v2328 = vld [vmem:[%s5 + $0x60] sm:$0xff]
        %v2329 = vld [vmem:[%s5 + $0x68] sm:$0xff]
        %v2330 = vld [vmem:[%s5 + $0x70] sm:$0xff]
        %v2331 = vld [vmem:[%s5 + $0x78] sm:$0xff]
        %v2332 = vld [vmem:[%s5 + $0x80] sm:$0xff]
        %v2333 = vld [vmem:[%s5 + $0x88] sm:$0xff]
        %v2334 = vld [vmem:[%s5 + $0x90] sm:$0xff]
        %v2335 = vld [vmem:[%s5 + $0x98] sm:$0xff]
        %v2336 = vld [vmem:[%s5 + $0xa0] sm:$0xff]
        %v2337 = vld [vmem:[%s5 + $0xa8] sm:$0xff]
        %v2338 = vld [vmem:[%s5 + $0xb0] sm:$0xff]
        %v2339 = vld [vmem:[%s5 + $0xb8] sm:$0xff]
        %v2340 = vld [vmem:[%s5 + $0xc0] sm:$0xff]
        %v2341 = vld [vmem:[%s5 + $0xc8] sm:$0xff]
        %v2342 = vld [vmem:[%s5 + $0xd0] sm:$0xff]
        %v2343 = vld [vmem:[%s5 + $0xd8] sm:$0xff]
        %v2344 = vld [vmem:[%s5 + $0xe0] sm:$0xff]
        %v2345 = vld [vmem:[%s5 + $0xe8] sm:$0xff]
        %v2346 = vld [vmem:[%s5 + $0xf0] sm:$0xff]
        %v2347 = vld [vmem:[%s5 + $0xf8] sm:$0xff]
        %v2348 = vld [vmem:[%s5 + $0x100] sm:$0xff]
        %v2349 = vld [vmem:[%s5 + $0x108] sm:$0xff]
        %v2350 = vld [vmem:[%s5 + $0x110] sm:$0xff]
        %v2351 = vld [vmem:[%s5 + $0x118] sm:$0xff]
        %v2352 = vld [vmem:[%s5 + $0x120] sm:$0xff]
        %v2353 = vld [vmem:[%s5 + $0x128] sm:$0xff]
        %v2354 = vld [vmem:[%s5 + $0x130] sm:$0xff]
        %v2355 = vld [vmem:[%s5 + $0x138] sm:$0xff]
        %v2356 = vld [vmem:[%s5 + $0x140] sm:$0xff]
        %v2357 = vld [vmem:[%s5 + $0x148] sm:$0xff]
        %v2358 = vld [vmem:[%s5 + $0x150] sm:$0xff]
        %v2359 = vld [vmem:[%s5 + $0x158] sm:$0xff]
        %v2360 = vld [vmem:[%s5 + $0x160] sm:$0xff]
        %v2361 = vld [vmem:[%s5 + $0x168] sm:$0xff]
        %v2362 = vld [vmem:[%s5 + $0x170] sm:$0xff]
        %v2363 = vld [vmem:[%s5 + $0x178] sm:$0xff]
        %v2364 = vld [vmem:[%s5 + $0x180] sm:$0xff]
        %v2365 = vld [vmem:[%s5 + $0x188] sm:$0xff]
        %v2366 = vld [vmem:[%s5 + $0x190] sm:$0xff]
        %v2367 = vld [vmem:[%s5 + $0x198] sm:$0xff]
        %v2368 = vld [vmem:[%s5 + $0x1a0] sm:$0xff]
        %v2369 = vld [vmem:[%s5 + $0x1a8] sm:$0xff]
        %v2370 = vld [vmem:[%s5 + $0x1b0] sm:$0xff]
        %v2371 = vld [vmem:[%s5 + $0x1b8] sm:$0xff]
        %v2372 = vld [vmem:[%s5 + $0x1c0] sm:$0xff]
        %v2373 = vld [vmem:[%s5 + $0x1c8] sm:$0xff]
        %v2374 = vld [vmem:[%s5 + $0x1d0] sm:$0xff]
        %v2375 = vld [vmem:[%s5 + $0x1d8] sm:$0xff]
        %v2376 = vld [vmem:[%s5 + $0x1e0] sm:$0xff]
        %v2377 = vld [vmem:[%s5 + $0x1e8] sm:$0xff]
        %v2378 = vld [vmem:[%s5 + $0x1f0] sm:$0xff]
        %v2379 = vld [vmem:[%s5 + $0x1f8] sm:$0xff]
        %v2396 = vunpack.c.l.b16 %v1204
        %v2397 = vunpack.c.l.b16 %v1205
        %v2398 = vunpack.c.l.b16 %v1206
        %v2399 = vunpack.c.l.b16 %v1207
        %v2400 = vunpack.c.l.b16 %v1208
        %v2401 = vunpack.c.l.b16 %v1209
        %v2402 = vunpack.c.l.b16 %v1210
        %v2403 = vunpack.c.l.b16 %v1211
        %v2404 = vunpack.c.l.b16 %v1212
        %v2405 = vunpack.c.l.b16 %v1213
        %v2406 = vunpack.c.l.b16 %v1214
        %v2407 = vunpack.c.l.b16 %v1215
        %v2408 = vunpack.c.l.b16 %v1216
        %v2409 = vunpack.c.l.b16 %v1217
        %v2410 = vunpack.c.l.b16 %v1218
        %v2411 = vunpack.c.l.b16 %v1219
        %vm2412 = vcmask 1041409
        %v2413 = vsel %vm2412, %v2398, %v2396
        %vm2414 = vcmask 1042434
        %v2415 = vsel %vm2414, %v2400, %v2413
        %vm2416 = vcmask 1043459
        %v2417 = vsel %vm2416, %v2402, %v2415
        %vm2418 = vcmask 1044484
        %v2419 = vsel %vm2418, %v2404, %v2417
        %vm2420 = vcmask 1045509
        %v2421 = vsel %vm2420, %v2406, %v2419
        %vm2422 = vcmask 1046534
        %v2423 = vsel %vm2422, %v2408, %v2421
        %vm2424 = vcmask 1047559
        %v2425 = vsel %vm2424, %v2410, %v2423
        %v2426 = vsel %vm2412, %v2399, %v2397
        %v2427 = vsel %vm2414, %v2401, %v2426
        %v2428 = vsel %vm2416, %v2403, %v2427
        %v2429 = vsel %vm2418, %v2405, %v2428
        %v2430 = vsel %vm2420, %v2407, %v2429
        %v2431 = vsel %vm2422, %v2409, %v2430
        %v2432 = vsel %vm2424, %v2411, %v2431
        %v2433 = vpack.c.b16 %v2425, %v2425
        %v2434 = vpack.c.b16 %v2432, %v2432
        %v2501 = vunpack.c.l.b16 %v2316
        %v2502 = vunpack.c.h.b16 %v2316
        %v2503 = vunpack.c.l.b16 %v2317
        %v2504 = vunpack.c.h.b16 %v2317
        %v2505 = vunpack.c.l.b16 %v2318
        %v2506 = vunpack.c.h.b16 %v2318
        %v2507 = vunpack.c.l.b16 %v2319
        %v2508 = vunpack.c.h.b16 %v2319
        %v2509 = vunpack.c.l.b16 %v2320
        %v2510 = vunpack.c.h.b16 %v2320
        %v2511 = vunpack.c.l.b16 %v2321
        %v2512 = vunpack.c.h.b16 %v2321
        %v2513 = vunpack.c.l.b16 %v2322
        %v2514 = vunpack.c.h.b16 %v2322
        %v2515 = vunpack.c.l.b16 %v2323
        %v2516 = vunpack.c.h.b16 %v2323
        %v2517 = vunpack.c.l.b16 %v2324
        %v2518 = vunpack.c.h.b16 %v2324
        %v2519 = vunpack.c.l.b16 %v2325
        %v2520 = vunpack.c.h.b16 %v2325
        %v2521 = vunpack.c.l.b16 %v2326
        %v2522 = vunpack.c.h.b16 %v2326
        %v2523 = vunpack.c.l.b16 %v2327
        %v2524 = vunpack.c.h.b16 %v2327
        %v2525 = vunpack.c.l.b16 %v2328
        %v2526 = vunpack.c.h.b16 %v2328
        %v2527 = vunpack.c.l.b16 %v2329
        %v2528 = vunpack.c.h.b16 %v2329
        %v2529 = vunpack.c.l.b16 %v2330
        %v2530 = vunpack.c.h.b16 %v2330
        %v2531 = vunpack.c.l.b16 %v2331
        %v2532 = vunpack.c.h.b16 %v2331
        %v2533 = vunpack.c.l.b16 %v2332
        %v2534 = vunpack.c.h.b16 %v2332
        %v2535 = vunpack.c.l.b16 %v2333
        %v2536 = vunpack.c.h.b16 %v2333
        %v2537 = vunpack.c.l.b16 %v2334
        %v2538 = vunpack.c.h.b16 %v2334
        %v2539 = vunpack.c.l.b16 %v2335
        %v2540 = vunpack.c.h.b16 %v2335
        %v2541 = vunpack.c.l.b16 %v2336
        %v2542 = vunpack.c.h.b16 %v2336
        %v2543 = vunpack.c.l.b16 %v2337
        %v2544 = vunpack.c.h.b16 %v2337
        %v2545 = vunpack.c.l.b16 %v2338
        %v2546 = vunpack.c.h.b16 %v2338
        %v2547 = vunpack.c.l.b16 %v2339
        %v2548 = vunpack.c.h.b16 %v2339
        %v2549 = vunpack.c.l.b16 %v2340
        %v2550 = vunpack.c.h.b16 %v2340
        %v2551 = vunpack.c.l.b16 %v2341
        %v2552 = vunpack.c.h.b16 %v2341
        %v2553 = vunpack.c.l.b16 %v2342
        %v2554 = vunpack.c.h.b16 %v2342
        %v2555 = vunpack.c.l.b16 %v2343
        %v2556 = vunpack.c.h.b16 %v2343
        %v2557 = vunpack.c.l.b16 %v2344
        %v2558 = vunpack.c.h.b16 %v2344
        %v2559 = vunpack.c.l.b16 %v2345
        %v2560 = vunpack.c.h.b16 %v2345
        %v2561 = vunpack.c.l.b16 %v2346
        %v2562 = vunpack.c.h.b16 %v2346
        %v2563 = vunpack.c.l.b16 %v2347
        %v2564 = vunpack.c.h.b16 %v2347
        %v2565 = vunpack.c.l.b16 %v2348
        %v2566 = vunpack.c.h.b16 %v2348
        %v2567 = vunpack.c.l.b16 %v2349
        %v2568 = vunpack.c.h.b16 %v2349
        %v2569 = vunpack.c.l.b16 %v2350
        %v2570 = vunpack.c.h.b16 %v2350
        %v2571 = vunpack.c.l.b16 %v2351
        %v2572 = vunpack.c.h.b16 %v2351
        %v2573 = vunpack.c.l.b16 %v2352
        %v2574 = vunpack.c.h.b16 %v2352
        %v2575 = vunpack.c.l.b16 %v2353
        %v2576 = vunpack.c.h.b16 %v2353
        %v2577 = vunpack.c.l.b16 %v2354
        %v2578 = vunpack.c.h.b16 %v2354
        %v2579 = vunpack.c.l.b16 %v2355
        %v2580 = vunpack.c.h.b16 %v2355
        %v2581 = vunpack.c.l.b16 %v2356
        %v2582 = vunpack.c.h.b16 %v2356
        %v2583 = vunpack.c.l.b16 %v2357
        %v2584 = vunpack.c.h.b16 %v2357
        %v2585 = vunpack.c.l.b16 %v2358
        %v2586 = vunpack.c.h.b16 %v2358
        %v2587 = vunpack.c.l.b16 %v2359
        %v2588 = vunpack.c.h.b16 %v2359
        %v2589 = vunpack.c.l.b16 %v2360
        %v2590 = vunpack.c.h.b16 %v2360
        %v2591 = vunpack.c.l.b16 %v2361
        %v2592 = vunpack.c.h.b16 %v2361
        %v2593 = vunpack.c.l.b16 %v2362
        %v2594 = vunpack.c.h.b16 %v2362
        %v2595 = vunpack.c.l.b16 %v2363
        %v2596 = vunpack.c.h.b16 %v2363
        %v2597 = vunpack.c.l.b16 %v2364
        %v2598 = vunpack.c.h.b16 %v2364
        %v2599 = vunpack.c.l.b16 %v2365
        %v2600 = vunpack.c.h.b16 %v2365
        %v2601 = vunpack.c.l.b16 %v2366
        %v2602 = vunpack.c.h.b16 %v2366
        %v2603 = vunpack.c.l.b16 %v2367
        %v2604 = vunpack.c.h.b16 %v2367
        %v2605 = vunpack.c.l.b16 %v2368
        %v2606 = vunpack.c.h.b16 %v2368
        %v2607 = vunpack.c.l.b16 %v2369
        %v2608 = vunpack.c.h.b16 %v2369
        %v2609 = vunpack.c.l.b16 %v2370
        %v2610 = vunpack.c.h.b16 %v2370
        %v2611 = vunpack.c.l.b16 %v2371
        %v2612 = vunpack.c.h.b16 %v2371
        %v2613 = vunpack.c.l.b16 %v2372
        %v2614 = vunpack.c.h.b16 %v2372
        %v2615 = vunpack.c.l.b16 %v2373
        %v2616 = vunpack.c.h.b16 %v2373
        %v2617 = vunpack.c.l.b16 %v2374
        %v2618 = vunpack.c.h.b16 %v2374
        %v2619 = vunpack.c.l.b16 %v2375
        %v2620 = vunpack.c.h.b16 %v2375
        %v2621 = vunpack.c.l.b16 %v2376
        %v2622 = vunpack.c.h.b16 %v2376
        %v2623 = vunpack.c.l.b16 %v2377
        %v2624 = vunpack.c.h.b16 %v2377
        %v2625 = vunpack.c.l.b16 %v2378
        %v2626 = vunpack.c.h.b16 %v2378
        %v2627 = vunpack.c.l.b16 %v2379
        %v2628 = vunpack.c.h.b16 %v2379
        %v2629 = vpack.c.b16 %v2505, %v2501
        %v2630 = vpack.c.b16 %v2506, %v2502
        %v2631 = vpack.c.b16 %v2507, %v2503
        %v2632 = vpack.c.b16 %v2508, %v2504
        %v2633 = vpack.c.b16 %v2513, %v2509
        %v2634 = vpack.c.b16 %v2514, %v2510
        %v2635 = vpack.c.b16 %v2515, %v2511
        %v2636 = vpack.c.b16 %v2516, %v2512
        %v2637 = vpack.c.b16 %v2521, %v2517
        %v2638 = vpack.c.b16 %v2522, %v2518
        %v2639 = vpack.c.b16 %v2523, %v2519
        %v2640 = vpack.c.b16 %v2524, %v2520
        %v2641 = vpack.c.b16 %v2529, %v2525
        %v2642 = vpack.c.b16 %v2530, %v2526
        %v2643 = vpack.c.b16 %v2531, %v2527
        %v2644 = vpack.c.b16 %v2532, %v2528
        %v2645 = vpack.c.b16 %v2537, %v2533
        %v2646 = vpack.c.b16 %v2538, %v2534
        %v2647 = vpack.c.b16 %v2539, %v2535
        %v2648 = vpack.c.b16 %v2540, %v2536
        %v2649 = vpack.c.b16 %v2545, %v2541
        %v2650 = vpack.c.b16 %v2546, %v2542
        %v2651 = vpack.c.b16 %v2547, %v2543
        %v2652 = vpack.c.b16 %v2548, %v2544
        %v2653 = vpack.c.b16 %v2553, %v2549
        %v2654 = vpack.c.b16 %v2554, %v2550
        %v2655 = vpack.c.b16 %v2555, %v2551
        %v2656 = vpack.c.b16 %v2556, %v2552
        %v2657 = vpack.c.b16 %v2561, %v2557
        %v2658 = vpack.c.b16 %v2562, %v2558
        %v2659 = vpack.c.b16 %v2563, %v2559
        %v2660 = vpack.c.b16 %v2564, %v2560
        %v2661 = vpack.c.b16 %v2569, %v2565
        %v2662 = vpack.c.b16 %v2570, %v2566
        %v2663 = vpack.c.b16 %v2571, %v2567
        %v2664 = vpack.c.b16 %v2572, %v2568
        %v2665 = vpack.c.b16 %v2577, %v2573
        %v2666 = vpack.c.b16 %v2578, %v2574
        %v2667 = vpack.c.b16 %v2579, %v2575
        %v2668 = vpack.c.b16 %v2580, %v2576
        %v2669 = vpack.c.b16 %v2585, %v2581
        %v2670 = vpack.c.b16 %v2586, %v2582
        %v2671 = vpack.c.b16 %v2587, %v2583
        %v2672 = vpack.c.b16 %v2588, %v2584
        %v2673 = vpack.c.b16 %v2593, %v2589
        %v2674 = vpack.c.b16 %v2594, %v2590
        %v2675 = vpack.c.b16 %v2595, %v2591
        %v2676 = vpack.c.b16 %v2596, %v2592
        %v2677 = vpack.c.b16 %v2601, %v2597
        %v2678 = vpack.c.b16 %v2602, %v2598
        %v2679 = vpack.c.b16 %v2603, %v2599
        %v2680 = vpack.c.b16 %v2604, %v2600
        %v2681 = vpack.c.b16 %v2609, %v2605
        %v2682 = vpack.c.b16 %v2610, %v2606
        %v2683 = vpack.c.b16 %v2611, %v2607
        %v2684 = vpack.c.b16 %v2612, %v2608
        %v2685 = vpack.c.b16 %v2617, %v2613
        %v2686 = vpack.c.b16 %v2618, %v2614
        %v2687 = vpack.c.b16 %v2619, %v2615
        %v2688 = vpack.c.b16 %v2620, %v2616
        %v2689 = vpack.c.b16 %v2625, %v2621
        %v2690 = vpack.c.b16 %v2626, %v2622
        %v2691 = vpack.c.b16 %v2627, %v2623
        %v2692 = vpack.c.b16 %v2628, %v2624
        %2757 = vmatpush.bf16.msra.mxu0 %v2657
        %2758 = vmatpush.bf16.msra.mxu0 %v2653
        %2759 = vmatpush.bf16.msra.mxu0 %v2649
        %2760 = vmatpush.bf16.msra.mxu0 %v2645
        %2761 = vmatpush.bf16.msra.mxu0 %v2641
        %2762 = vmatpush.bf16.msra.mxu0 %v2637
        %2763 = vmatpush.bf16.msra.mxu0 %v2633
        %2764 = vmatpush.bf16.msra.mxu0 %v2629
        %2765 = vmatmul.bf16.gmra.mxu0 %v2433
        %v2766 = vpop.f32.mrf.mxu0
        %v2767 = vadd.f32 0.0, %v2766
        %v2768 = vpop.f32.mrf.mxu0
        %2769 = vdwg.mxu0
        %2770 = vmatpush.bf16.msra.mxu0 %v2689
        %2771 = vmatpush.bf16.msra.mxu0 %v2685
        %2772 = vmatpush.bf16.msra.mxu0 %v2681
        %2773 = vmatpush.bf16.msra.mxu0 %v2677
        %2774 = vmatpush.bf16.msra.mxu0 %v2673
        %2775 = vmatpush.bf16.msra.mxu0 %v2669
        %2776 = vmatpush.bf16.msra.mxu0 %v2665
        %2777 = vmatpush.bf16.msra.mxu0 %v2661
        %2778 = vmatmul.bf16.gmra.mxu0 %v2434
        %v2779 = vpop.f32.mrf.mxu0
        %v2780 = vadd.f32 %v2767, %v2779
        %v2781 = vpop.f32.mrf.mxu0
        %2782 = vdwg.mxu0
        %2783 = vmatpush.bf16.msra.mxu0 %v2658
        %2784 = vmatpush.bf16.msra.mxu0 %v2654
        %2785 = vmatpush.bf16.msra.mxu0 %v2650
        %2786 = vmatpush.bf16.msra.mxu0 %v2646
        %2787 = vmatpush.bf16.msra.mxu0 %v2642
        %2788 = vmatpush.bf16.msra.mxu0 %v2638
        %2789 = vmatpush.bf16.msra.mxu0 %v2634
        %2790 = vmatpush.bf16.msra.mxu0 %v2630
        %2791 = vmatmul.bf16.gmra.mxu0 %v2433
        %v2792 = vpop.f32.mrf.mxu0
        %v2793 = vadd.f32 0.0, %v2792
        %v2794 = vpop.f32.mrf.mxu0
        %2795 = vdwg.mxu0
        %2796 = vmatpush.bf16.msra.mxu0 %v2690
        %2797 = vmatpush.bf16.msra.mxu0 %v2686
        %2798 = vmatpush.bf16.msra.mxu0 %v2682
        %2799 = vmatpush.bf16.msra.mxu0 %v2678
        %2800 = vmatpush.bf16.msra.mxu0 %v2674
        %2801 = vmatpush.bf16.msra.mxu0 %v2670
        %2802 = vmatpush.bf16.msra.mxu0 %v2666
        %2803 = vmatpush.bf16.msra.mxu0 %v2662
        %2804 = vmatmul.bf16.gmra.mxu0 %v2434
        %v2805 = vpop.f32.mrf.mxu0
        %v2806 = vadd.f32 %v2793, %v2805
        %v2807 = vpop.f32.mrf.mxu0
        %2808 = vdwg.mxu0
        %2809 = vmatpush.bf16.msra.mxu0 %v2659
        %2810 = vmatpush.bf16.msra.mxu0 %v2655
        %2811 = vmatpush.bf16.msra.mxu0 %v2651
        %2812 = vmatpush.bf16.msra.mxu0 %v2647
        %2813 = vmatpush.bf16.msra.mxu0 %v2643
        %2814 = vmatpush.bf16.msra.mxu0 %v2639
        %2815 = vmatpush.bf16.msra.mxu0 %v2635
        %2816 = vmatpush.bf16.msra.mxu0 %v2631
        %2817 = vmatmul.bf16.gmra.mxu0 %v2433
        %v2818 = vpop.f32.mrf.mxu0
        %v2819 = vadd.f32 0.0, %v2818
        %v2820 = vpop.f32.mrf.mxu0
        %2821 = vdwg.mxu0
        %2822 = vmatpush.bf16.msra.mxu0 %v2691
        %2823 = vmatpush.bf16.msra.mxu0 %v2687
        %2824 = vmatpush.bf16.msra.mxu0 %v2683
        %2825 = vmatpush.bf16.msra.mxu0 %v2679
        %2826 = vmatpush.bf16.msra.mxu0 %v2675
        %2827 = vmatpush.bf16.msra.mxu0 %v2671
        %2828 = vmatpush.bf16.msra.mxu0 %v2667
        %2829 = vmatpush.bf16.msra.mxu0 %v2663
        %2830 = vmatmul.bf16.gmra.mxu0 %v2434
        %v2831 = vpop.f32.mrf.mxu0
        %v2832 = vadd.f32 %v2819, %v2831
        %v2833 = vpop.f32.mrf.mxu0
        %2834 = vdwg.mxu0
        %2835 = vmatpush.bf16.msra.mxu0 %v2660
        %2836 = vmatpush.bf16.msra.mxu0 %v2656
        %2837 = vmatpush.bf16.msra.mxu0 %v2652
        %2838 = vmatpush.bf16.msra.mxu0 %v2648
        %2839 = vmatpush.bf16.msra.mxu0 %v2644
        %2840 = vmatpush.bf16.msra.mxu0 %v2640
        %2841 = vmatpush.bf16.msra.mxu0 %v2636
        %2842 = vmatpush.bf16.msra.mxu0 %v2632
        %2843 = vmatmul.bf16.gmra.mxu0 %v2433
        %v2844 = vpop.f32.mrf.mxu0
        %v2845 = vadd.f32 0.0, %v2844
        %v2846 = vpop.f32.mrf.mxu0
        %2847 = vdwg.mxu0
        %2848 = vmatpush.bf16.msra.mxu0 %v2692
        %2849 = vmatpush.bf16.msra.mxu0 %v2688
        %2850 = vmatpush.bf16.msra.mxu0 %v2684
        %2851 = vmatpush.bf16.msra.mxu0 %v2680
        %2852 = vmatpush.bf16.msra.mxu0 %v2676
        %2853 = vmatpush.bf16.msra.mxu0 %v2672
        %2854 = vmatpush.bf16.msra.mxu0 %v2668
        %2855 = vmatpush.bf16.msra.mxu0 %v2664
        %2856 = vmatmul.bf16.gmra.mxu0 %v2434
        %v2857 = vpop.f32.mrf.mxu0
        %v2858 = vadd.f32 %v2845, %v2857
        %v2859 = vpop.f32.mrf.mxu0
        %2860 = vdwg.mxu0
        %v2865 = vrot.slane %v2806, 7
        %v2866 = vrot.slane %v2832, 6
        %v2867 = vrot.slane %v2858, 5
        %vm2868 = vcmask 1040384
        %v2869 = vsel %vm2868, %v2780, %v2865
        %v2870 = vsel %vm2414, %v2866, %v2867
        %vm2871 = vcmask 1041408
        %v2872 = vsel %vm2871, %v2869, %v2870
        %v2873 = vsel %vm2412, %v2780, %v2865
        %v2874 = vsel %vm2416, %v2866, %v2867
        %vm2875 = vcmask 1042433
        %v2876 = vsel %vm2875, %v2873, %v2874
        %v2877 = vrot.slane %v2876, 1
        %v2878 = vsel %vm2414, %v2780, %v2865
        %v2879 = vsel %vm2418, %v2866, %v2867
        %vm2880 = vcmask 1043458
        %v2881 = vsel %vm2880, %v2878, %v2879
        %v2882 = vrot.slane %v2881, 2
        %v2883 = vsel %vm2416, %v2780, %v2865
        %v2884 = vsel %vm2420, %v2866, %v2867
        %vm2885 = vcmask 1044483
        %v2886 = vsel %vm2885, %v2883, %v2884
        %v2887 = vrot.slane %v2886, 3
        %v2888 = vsel %vm2418, %v2780, %v2865
        %v2889 = vsel %vm2422, %v2866, %v2867
        %vm2890 = vcmask 1045508
        %v2891 = vsel %vm2890, %v2888, %v2889
        %v2892 = vrot.slane %v2891, 4
        %v2893 = vsel %vm2420, %v2780, %v2865
        %vm2894 = vcmask 1046528
        %v2895 = vsel %vm2894, %v2867, %v2866
        %vm2896 = vcmask 1046533
        %v2897 = vsel %vm2896, %v2893, %v2895
        %v2898 = vrot.slane %v2897, 5
        %v2899 = vsel %vm2422, %v2780, %v2865
        %v2900 = vsel %vm2868, %v2866, %v2867
        %vm2901 = vcmask 1045504
        %v2902 = vsel %vm2901, %v2900, %v2899
        %v2903 = vrot.slane %v2902, 6
        %v2904 = vsel %vm2894, %v2865, %v2780
        %v2905 = vsel %vm2412, %v2866, %v2867
        %vm2906 = vcmask 1046529
        %v2907 = vsel %vm2906, %v2905, %v2904
        %v2908 = vrot.slane %v2907, 7
        %v2909 = vperm.slane %v2872, 0
        %v2910 = vperm.slane %v2872, 1
        %v2911 = vperm.slane %v2872, 2
        %v2912 = vperm.slane %v2872, 3
        %v2913 = vperm.slane %v2877, 0
        %v2914 = vperm.slane %v2877, 1
        %v2915 = vperm.slane %v2877, 2
        %v2916 = vperm.slane %v2877, 3
        %v2917 = vperm.slane %v2882, 0
        %v2918 = vperm.slane %v2882, 1
        %v2919 = vperm.slane %v2882, 2
        %v2920 = vperm.slane %v2882, 3
        %v2921 = vperm.slane %v2887, 0
        %v2922 = vperm.slane %v2887, 1
        %v2923 = vperm.slane %v2887, 2
        %v2924 = vperm.slane %v2887, 3
        %v2925 = vperm.slane %v2892, 0
        %v2926 = vperm.slane %v2892, 1
        %v2927 = vperm.slane %v2892, 2
        %v2928 = vperm.slane %v2892, 3
        %v2929 = vperm.slane %v2898, 0
        %v2930 = vperm.slane %v2898, 1
        %v2931 = vperm.slane %v2898, 2
        %v2932 = vperm.slane %v2898, 3
        %v2933 = vperm.slane %v2903, 0
        %v2934 = vperm.slane %v2903, 1
        %v2935 = vperm.slane %v2903, 2
        %v2936 = vperm.slane %v2903, 3
        %v2937 = vperm.slane %v2908, 0
        %v2938 = vperm.slane %v2908, 1
        %v2939 = vperm.slane %v2908, 2
        %v2940 = vperm.slane %v2908, 3
        %v2973 = vadd.f32 %v1703, %v2909
        %v2974 = vadd.f32 %v1881, %v2910
        %v2975 = vadd.f32 %v2059, %v2911
        %v2976 = vadd.f32 %v2237, %v2912
        %v2977 = vadd.f32 %v1705, %v2909
        %v2978 = vadd.f32 %v1883, %v2910
        %v2979 = vadd.f32 %v2061, %v2911
        %v2980 = vadd.f32 %v2239, %v2912
        %v2981 = vadd.f32 %v1708, %v2909
        %v2982 = vadd.f32 %v1886, %v2910
        %v2983 = vadd.f32 %v2064, %v2911
        %v2984 = vadd.f32 %v2242, %v2912
        %v2985 = vadd.f32 %v1710, %v2909
        %v2986 = vadd.f32 %v1888, %v2910
        %v2987 = vadd.f32 %v2066, %v2911
        %v2988 = vadd.f32 %v2244, %v2912
        %v2989 = vadd.f32 %v1713, %v2913
        %v2990 = vadd.f32 %v1891, %v2914
        %v2991 = vadd.f32 %v2069, %v2915
        %v2992 = vadd.f32 %v2247, %v2916
        %v2993 = vadd.f32 %v1715, %v2913
        %v2994 = vadd.f32 %v1893, %v2914
        %v2995 = vadd.f32 %v2071, %v2915
        %v2996 = vadd.f32 %v2249, %v2916
        %v2997 = vadd.f32 %v1718, %v2913
        %v2998 = vadd.f32 %v1896, %v2914
        %v2999 = vadd.f32 %v2074, %v2915
        %v3000 = vadd.f32 %v2252, %v2916
        %v3001 = vadd.f32 %v1720, %v2913
        %v3002 = vadd.f32 %v1898, %v2914
        %v3003 = vadd.f32 %v2076, %v2915
        %v3004 = vadd.f32 %v2254, %v2916
        %v3005 = vadd.f32 %v1723, %v2917
        %v3006 = vadd.f32 %v1901, %v2918
        %v3007 = vadd.f32 %v2079, %v2919
        %v3008 = vadd.f32 %v2257, %v2920
        %v3009 = vadd.f32 %v1725, %v2917
        %v3010 = vadd.f32 %v1903, %v2918
        %v3011 = vadd.f32 %v2081, %v2919
        %v3012 = vadd.f32 %v2259, %v2920
        %v3013 = vadd.f32 %v1728, %v2917
        %v3014 = vadd.f32 %v1906, %v2918
        %v3015 = vadd.f32 %v2084, %v2919
        %v3016 = vadd.f32 %v2262, %v2920
        %v3017 = vadd.f32 %v1730, %v2917
        %v3018 = vadd.f32 %v1908, %v2918
        %v3019 = vadd.f32 %v2086, %v2919
        %v3020 = vadd.f32 %v2264, %v2920
        %v3021 = vadd.f32 %v1733, %v2921
        %v3022 = vadd.f32 %v1911, %v2922
        %v3023 = vadd.f32 %v2089, %v2923
        %v3024 = vadd.f32 %v2267, %v2924
        %v3025 = vadd.f32 %v1735, %v2921
        %v3026 = vadd.f32 %v1913, %v2922
        %v3027 = vadd.f32 %v2091, %v2923
        %v3028 = vadd.f32 %v2269, %v2924
        %v3029 = vadd.f32 %v1738, %v2921
        %v3030 = vadd.f32 %v1916, %v2922
        %v3031 = vadd.f32 %v2094, %v2923
        %v3032 = vadd.f32 %v2272, %v2924
        %v3033 = vadd.f32 %v1740, %v2921
        %v3034 = vadd.f32 %v1918, %v2922
        %v3035 = vadd.f32 %v2096, %v2923
        %v3036 = vadd.f32 %v2274, %v2924
        %v3037 = vadd.f32 %v1743, %v2925
        %v3038 = vadd.f32 %v1921, %v2926
        %v3039 = vadd.f32 %v2099, %v2927
        %v3040 = vadd.f32 %v2277, %v2928
        %v3041 = vadd.f32 %v1745, %v2925
        %v3042 = vadd.f32 %v1923, %v2926
        %v3043 = vadd.f32 %v2101, %v2927
        %v3044 = vadd.f32 %v2279, %v2928
        %v3045 = vadd.f32 %v1748, %v2925
        %v3046 = vadd.f32 %v1926, %v2926
        %v3047 = vadd.f32 %v2104, %v2927
        %v3048 = vadd.f32 %v2282, %v2928
        %v3049 = vadd.f32 %v1750, %v2925
        %v3050 = vadd.f32 %v1928, %v2926
        %v3051 = vadd.f32 %v2106, %v2927
        %v3052 = vadd.f32 %v2284, %v2928
        %v3053 = vadd.f32 %v1753, %v2929
        %v3054 = vadd.f32 %v1931, %v2930
        %v3055 = vadd.f32 %v2109, %v2931
        %v3056 = vadd.f32 %v2287, %v2932
        %v3057 = vadd.f32 %v1755, %v2929
        %v3058 = vadd.f32 %v1933, %v2930
        %v3059 = vadd.f32 %v2111, %v2931
        %v3060 = vadd.f32 %v2289, %v2932
        %v3061 = vadd.f32 %v1758, %v2929
        %v3062 = vadd.f32 %v1936, %v2930
        %v3063 = vadd.f32 %v2114, %v2931
        %v3064 = vadd.f32 %v2292, %v2932
        %v3065 = vadd.f32 %v1760, %v2929
        %v3066 = vadd.f32 %v1938, %v2930
        %v3067 = vadd.f32 %v2116, %v2931
        %v3068 = vadd.f32 %v2294, %v2932
        %v3069 = vadd.f32 %v1763, %v2933
        %v3070 = vadd.f32 %v1941, %v2934
        %v3071 = vadd.f32 %v2119, %v2935
        %v3072 = vadd.f32 %v2297, %v2936
        %v3073 = vadd.f32 %v1765, %v2933
        %v3074 = vadd.f32 %v1943, %v2934
        %v3075 = vadd.f32 %v2121, %v2935
        %v3076 = vadd.f32 %v2299, %v2936
        %v3077 = vadd.f32 %v1768, %v2933
        %v3078 = vadd.f32 %v1946, %v2934
        %v3079 = vadd.f32 %v2124, %v2935
        %v3080 = vadd.f32 %v2302, %v2936
        %v3081 = vadd.f32 %v1770, %v2933
        %v3082 = vadd.f32 %v1948, %v2934
        %v3083 = vadd.f32 %v2126, %v2935
        %v3084 = vadd.f32 %v2304, %v2936
        %v3085 = vadd.f32 %v1773, %v2937
        %v3086 = vadd.f32 %v1951, %v2938
        %v3087 = vadd.f32 %v2129, %v2939
        %v3088 = vadd.f32 %v2307, %v2940
        %v3089 = vadd.f32 %v1775, %v2937
        %v3090 = vadd.f32 %v1953, %v2938
        %v3091 = vadd.f32 %v2131, %v2939
        %v3092 = vadd.f32 %v2309, %v2940
        %v3093 = vadd.f32 %v1778, %v2937
        %v3094 = vadd.f32 %v1956, %v2938
        %v3095 = vadd.f32 %v2134, %v2939
        %v3096 = vadd.f32 %v2312, %v2940
        %v3097 = vadd.f32 %v1780, %v2937
        %v3098 = vadd.f32 %v1958, %v2938
        %v3099 = vadd.f32 %v2136, %v2939
        %v3100 = vadd.f32 %v2314, %v2940
        %v3101 = vld [vmem:[#allocation8] sm:$0xf]
        %v3103 = vperm.slane %v3101, 0
        %v3104 = vperm.slane %v3101, 1
        %v3105 = vperm.slane %v3101, 2
        %v3106 = vperm.slane %v3101, 3
        %v3111 = vadd.f32 %v2973, %v3103
        %v3112 = vadd.f32 %v2974, %v3104
        %v3113 = vadd.f32 %v2975, %v3105
        %v3114 = vadd.f32 %v2976, %v3106
        %v3115 = vadd.f32 %v2977, %v3103
        %v3116 = vadd.f32 %v2978, %v3104
        %v3117 = vadd.f32 %v2979, %v3105
        %v3118 = vadd.f32 %v2980, %v3106
        %v3119 = vadd.f32 %v2981, %v3103
        %v3120 = vadd.f32 %v2982, %v3104
        %v3121 = vadd.f32 %v2983, %v3105
        %v3122 = vadd.f32 %v2984, %v3106
        %v3123 = vadd.f32 %v2985, %v3103
        %v3124 = vadd.f32 %v2986, %v3104
        %v3125 = vadd.f32 %v2987, %v3105
        %v3126 = vadd.f32 %v2988, %v3106
        %v3127 = vadd.f32 %v2989, %v3103
        %v3128 = vadd.f32 %v2990, %v3104
        %v3129 = vadd.f32 %v2991, %v3105
        %v3130 = vadd.f32 %v2992, %v3106
        %v3131 = vadd.f32 %v2993, %v3103
        %v3132 = vadd.f32 %v2994, %v3104
        %v3133 = vadd.f32 %v2995, %v3105
        %v3134 = vadd.f32 %v2996, %v3106
        %v3135 = vadd.f32 %v2997, %v3103
        %v3136 = vadd.f32 %v2998, %v3104
        %v3137 = vadd.f32 %v2999, %v3105
        %v3138 = vadd.f32 %v3000, %v3106
        %v3139 = vadd.f32 %v3001, %v3103
        %v3140 = vadd.f32 %v3002, %v3104
        %v3141 = vadd.f32 %v3003, %v3105
        %v3142 = vadd.f32 %v3004, %v3106
        %v3143 = vadd.f32 %v3005, %v3103
        %v3144 = vadd.f32 %v3006, %v3104
        %v3145 = vadd.f32 %v3007, %v3105
        %v3146 = vadd.f32 %v3008, %v3106
        %v3147 = vadd.f32 %v3009, %v3103
        %v3148 = vadd.f32 %v3010, %v3104
        %v3149 = vadd.f32 %v3011, %v3105
        %v3150 = vadd.f32 %v3012, %v3106
        %v3151 = vadd.f32 %v3013, %v3103
        %v3152 = vadd.f32 %v3014, %v3104
        %v3153 = vadd.f32 %v3015, %v3105
        %v3154 = vadd.f32 %v3016, %v3106
        %v3155 = vadd.f32 %v3017, %v3103
        %v3156 = vadd.f32 %v3018, %v3104
        %v3157 = vadd.f32 %v3019, %v3105
        %v3158 = vadd.f32 %v3020, %v3106
        %v3159 = vadd.f32 %v3021, %v3103
        %v3160 = vadd.f32 %v3022, %v3104
        %v3161 = vadd.f32 %v3023, %v3105
        %v3162 = vadd.f32 %v3024, %v3106
        %v3163 = vadd.f32 %v3025, %v3103
        %v3164 = vadd.f32 %v3026, %v3104
        %v3165 = vadd.f32 %v3027, %v3105
        %v3166 = vadd.f32 %v3028, %v3106
        %v3167 = vadd.f32 %v3029, %v3103
        %v3168 = vadd.f32 %v3030, %v3104
        %v3169 = vadd.f32 %v3031, %v3105
        %v3170 = vadd.f32 %v3032, %v3106
        %v3171 = vadd.f32 %v3033, %v3103
        %v3172 = vadd.f32 %v3034, %v3104
        %v3173 = vadd.f32 %v3035, %v3105
        %v3174 = vadd.f32 %v3036, %v3106
        %v3175 = vadd.f32 %v3037, %v3103
        %v3176 = vadd.f32 %v3038, %v3104
        %v3177 = vadd.f32 %v3039, %v3105
        %v3178 = vadd.f32 %v3040, %v3106
        %v3179 = vadd.f32 %v3041, %v3103
        %v3180 = vadd.f32 %v3042, %v3104
        %v3181 = vadd.f32 %v3043, %v3105
        %v3182 = vadd.f32 %v3044, %v3106
        %v3183 = vadd.f32 %v3045, %v3103
        %v3184 = vadd.f32 %v3046, %v3104
        %v3185 = vadd.f32 %v3047, %v3105
        %v3186 = vadd.f32 %v3048, %v3106
        %v3187 = vadd.f32 %v3049, %v3103
        %v3188 = vadd.f32 %v3050, %v3104
        %v3189 = vadd.f32 %v3051, %v3105
        %v3190 = vadd.f32 %v3052, %v3106
        %v3191 = vadd.f32 %v3053, %v3103
        %v3192 = vadd.f32 %v3054, %v3104
        %v3193 = vadd.f32 %v3055, %v3105
        %v3194 = vadd.f32 %v3056, %v3106
        %v3195 = vadd.f32 %v3057, %v3103
        %v3196 = vadd.f32 %v3058, %v3104
        %v3197 = vadd.f32 %v3059, %v3105
        %v3198 = vadd.f32 %v3060, %v3106
        %v3199 = vadd.f32 %v3061, %v3103
        %v3200 = vadd.f32 %v3062, %v3104
        %v3201 = vadd.f32 %v3063, %v3105
        %v3202 = vadd.f32 %v3064, %v3106
        %v3203 = vadd.f32 %v3065, %v3103
        %v3204 = vadd.f32 %v3066, %v3104
        %v3205 = vadd.f32 %v3067, %v3105
        %v3206 = vadd.f32 %v3068, %v3106
        %v3207 = vadd.f32 %v3069, %v3103
        %v3208 = vadd.f32 %v3070, %v3104
        %v3209 = vadd.f32 %v3071, %v3105
        %v3210 = vadd.f32 %v3072, %v3106
        %v3211 = vadd.f32 %v3073, %v3103
        %v3212 = vadd.f32 %v3074, %v3104
        %v3213 = vadd.f32 %v3075, %v3105
        %v3214 = vadd.f32 %v3076, %v3106
        %v3215 = vadd.f32 %v3077, %v3103
        %v3216 = vadd.f32 %v3078, %v3104
        %v3217 = vadd.f32 %v3079, %v3105
        %v3218 = vadd.f32 %v3080, %v3106
        %v3219 = vadd.f32 %v3081, %v3103
        %v3220 = vadd.f32 %v3082, %v3104
        %v3221 = vadd.f32 %v3083, %v3105
        %v3222 = vadd.f32 %v3084, %v3106
        %v3223 = vadd.f32 %v3085, %v3103
        %v3224 = vadd.f32 %v3086, %v3104
        %v3225 = vadd.f32 %v3087, %v3105
        %v3226 = vadd.f32 %v3088, %v3106
        %v3227 = vadd.f32 %v3089, %v3103
        %v3228 = vadd.f32 %v3090, %v3104
        %v3229 = vadd.f32 %v3091, %v3105
        %v3230 = vadd.f32 %v3092, %v3106
        %v3231 = vadd.f32 %v3093, %v3103
        %v3232 = vadd.f32 %v3094, %v3104
        %v3233 = vadd.f32 %v3095, %v3105
        %v3234 = vadd.f32 %v3096, %v3106
        %v3235 = vadd.f32 %v3097, %v3103
        %v3236 = vadd.f32 %v3098, %v3104
        %v3237 = vadd.f32 %v3099, %v3105
        %v3238 = vadd.f32 %v3100, %v3106
        %v3239 = vmax.f32 %v3111, 0.0
        %v3240 = vmax.f32 %v3112, 0.0
        %v3241 = vmax.f32 %v3113, 0.0
        %v3242 = vmax.f32 %v3114, 0.0
        %v3243 = vmax.f32 %v3115, 0.0
        %v3244 = vmax.f32 %v3116, 0.0
        %v3245 = vmax.f32 %v3117, 0.0
        %v3246 = vmax.f32 %v3118, 0.0
        %v3247 = vmax.f32 %v3119, 0.0
        %v3248 = vmax.f32 %v3120, 0.0
        %v3249 = vmax.f32 %v3121, 0.0
        %v3250 = vmax.f32 %v3122, 0.0
        %v3251 = vmax.f32 %v3123, 0.0
        %v3252 = vmax.f32 %v3124, 0.0
        %v3253 = vmax.f32 %v3125, 0.0
        %v3254 = vmax.f32 %v3126, 0.0
        %v3255 = vmax.f32 %v3127, 0.0
        %v3256 = vmax.f32 %v3128, 0.0
        %v3257 = vmax.f32 %v3129, 0.0
        %v3258 = vmax.f32 %v3130, 0.0
        %v3259 = vmax.f32 %v3131, 0.0
        %v3260 = vmax.f32 %v3132, 0.0
        %v3261 = vmax.f32 %v3133, 0.0
        %v3262 = vmax.f32 %v3134, 0.0
        %v3263 = vmax.f32 %v3135, 0.0
        %v3264 = vmax.f32 %v3136, 0.0
        %v3265 = vmax.f32 %v3137, 0.0
        %v3266 = vmax.f32 %v3138, 0.0
        %v3267 = vmax.f32 %v3139, 0.0
        %v3268 = vmax.f32 %v3140, 0.0
        %v3269 = vmax.f32 %v3141, 0.0
        %v3270 = vmax.f32 %v3142, 0.0
        %v3271 = vmax.f32 %v3143, 0.0
        %v3272 = vmax.f32 %v3144, 0.0
        %v3273 = vmax.f32 %v3145, 0.0
        %v3274 = vmax.f32 %v3146, 0.0
        %v3275 = vmax.f32 %v3147, 0.0
        %v3276 = vmax.f32 %v3148, 0.0
        %v3277 = vmax.f32 %v3149, 0.0
        %v3278 = vmax.f32 %v3150, 0.0
        %v3279 = vmax.f32 %v3151, 0.0
        %v3280 = vmax.f32 %v3152, 0.0
        %v3281 = vmax.f32 %v3153, 0.0
        %v3282 = vmax.f32 %v3154, 0.0
        %v3283 = vmax.f32 %v3155, 0.0
        %v3284 = vmax.f32 %v3156, 0.0
        %v3285 = vmax.f32 %v3157, 0.0
        %v3286 = vmax.f32 %v3158, 0.0
        %v3287 = vmax.f32 %v3159, 0.0
        %v3288 = vmax.f32 %v3160, 0.0
        %v3289 = vmax.f32 %v3161, 0.0
        %v3290 = vmax.f32 %v3162, 0.0
        %v3291 = vmax.f32 %v3163, 0.0
        %v3292 = vmax.f32 %v3164, 0.0
        %v3293 = vmax.f32 %v3165, 0.0
        %v3294 = vmax.f32 %v3166, 0.0
        %v3295 = vmax.f32 %v3167, 0.0
        %v3296 = vmax.f32 %v3168, 0.0
        %v3297 = vmax.f32 %v3169, 0.0
        %v3298 = vmax.f32 %v3170, 0.0
        %v3299 = vmax.f32 %v3171, 0.0
        %v3300 = vmax.f32 %v3172, 0.0
        %v3301 = vmax.f32 %v3173, 0.0
        %v3302 = vmax.f32 %v3174, 0.0
        %v3303 = vmax.f32 %v3175, 0.0
        %v3304 = vmax.f32 %v3176, 0.0
        %v3305 = vmax.f32 %v3177, 0.0
        %v3306 = vmax.f32 %v3178, 0.0
        %v3307 = vmax.f32 %v3179, 0.0
        %v3308 = vmax.f32 %v3180, 0.0
        %v3309 = vmax.f32 %v3181, 0.0
        %v3310 = vmax.f32 %v3182, 0.0
        %v3311 = vmax.f32 %v3183, 0.0
        %v3312 = vmax.f32 %v3184, 0.0
        %v3313 = vmax.f32 %v3185, 0.0
        %v3314 = vmax.f32 %v3186, 0.0
        %v3315 = vmax.f32 %v3187, 0.0
        %v3316 = vmax.f32 %v3188, 0.0
        %v3317 = vmax.f32 %v3189, 0.0
        %v3318 = vmax.f32 %v3190, 0.0
        %v3319 = vmax.f32 %v3191, 0.0
        %v3320 = vmax.f32 %v3192, 0.0
        %v3321 = vmax.f32 %v3193, 0.0
        %v3322 = vmax.f32 %v3194, 0.0
        %v3323 = vmax.f32 %v3195, 0.0
        %v3324 = vmax.f32 %v3196, 0.0
        %v3325 = vmax.f32 %v3197, 0.0
        %v3326 = vmax.f32 %v3198, 0.0
        %v3327 = vmax.f32 %v3199, 0.0
        %v3328 = vmax.f32 %v3200, 0.0
        %v3329 = vmax.f32 %v3201, 0.0
        %v3330 = vmax.f32 %v3202, 0.0
        %v3331 = vmax.f32 %v3203, 0.0
        %v3332 = vmax.f32 %v3204, 0.0
        %v3333 = vmax.f32 %v3205, 0.0
        %v3334 = vmax.f32 %v3206, 0.0
        %v3335 = vmax.f32 %v3207, 0.0
        %v3336 = vmax.f32 %v3208, 0.0
        %v3337 = vmax.f32 %v3209, 0.0
        %v3338 = vmax.f32 %v3210, 0.0
        %v3339 = vmax.f32 %v3211, 0.0
        %v3340 = vmax.f32 %v3212, 0.0
        %v3341 = vmax.f32 %v3213, 0.0
        %v3342 = vmax.f32 %v3214, 0.0
        %v3343 = vmax.f32 %v3215, 0.0
        %v3344 = vmax.f32 %v3216, 0.0
        %v3345 = vmax.f32 %v3217, 0.0
        %v3346 = vmax.f32 %v3218, 0.0
        %v3347 = vmax.f32 %v3219, 0.0
        %v3348 = vmax.f32 %v3220, 0.0
        %v3349 = vmax.f32 %v3221, 0.0
        %v3350 = vmax.f32 %v3222, 0.0
        %v3351 = vmax.f32 %v3223, 0.0
        %v3352 = vmax.f32 %v3224, 0.0
        %v3353 = vmax.f32 %v3225, 0.0
        %v3354 = vmax.f32 %v3226, 0.0
        %v3355 = vmax.f32 %v3227, 0.0
        %v3356 = vmax.f32 %v3228, 0.0
        %v3357 = vmax.f32 %v3229, 0.0
        %v3358 = vmax.f32 %v3230, 0.0
        %v3359 = vmax.f32 %v3231, 0.0
        %v3360 = vmax.f32 %v3232, 0.0
        %v3361 = vmax.f32 %v3233, 0.0
        %v3362 = vmax.f32 %v3234, 0.0
        %v3363 = vmax.f32 %v3235, 0.0
        %v3364 = vmax.f32 %v3236, 0.0
        %v3365 = vmax.f32 %v3237, 0.0
        %v3366 = vmax.f32 %v3238, 0.0
        %v3367 = vpack.c.bf16 %v3243, %v3239
        %v3368 = vpack.c.bf16 %v3244, %v3240
        %v3369 = vpack.c.bf16 %v3245, %v3241
        %v3370 = vpack.c.bf16 %v3246, %v3242
        %v3371 = vpack.c.bf16 %v3251, %v3247
        %v3372 = vpack.c.bf16 %v3252, %v3248
        %v3373 = vpack.c.bf16 %v3253, %v3249
        %v3374 = vpack.c.bf16 %v3254, %v3250
        %v3375 = vpack.c.bf16 %v3259, %v3255
        %v3376 = vpack.c.bf16 %v3260, %v3256
        %v3377 = vpack.c.bf16 %v3261, %v3257
        %v3378 = vpack.c.bf16 %v3262, %v3258
        %v3379 = vpack.c.bf16 %v3267, %v3263
        %v3380 = vpack.c.bf16 %v3268, %v3264
        %v3381 = vpack.c.bf16 %v3269, %v3265
        %v3382 = vpack.c.bf16 %v3270, %v3266
        %v3383 = vpack.c.bf16 %v3275, %v3271
        %v3384 = vpack.c.bf16 %v3276, %v3272
        %v3385 = vpack.c.bf16 %v3277, %v3273
        %v3386 = vpack.c.bf16 %v3278, %v3274
        %v3387 = vpack.c.bf16 %v3283, %v3279
        %v3388 = vpack.c.bf16 %v3284, %v3280
        %v3389 = vpack.c.bf16 %v3285, %v3281
        %v3390 = vpack.c.bf16 %v3286, %v3282
        %v3391 = vpack.c.bf16 %v3291, %v3287
        %v3392 = vpack.c.bf16 %v3292, %v3288
        %v3393 = vpack.c.bf16 %v3293, %v3289
        %v3394 = vpack.c.bf16 %v3294, %v3290
        %v3395 = vpack.c.bf16 %v3299, %v3295
        %v3396 = vpack.c.bf16 %v3300, %v3296
        %v3397 = vpack.c.bf16 %v3301, %v3297
        %v3398 = vpack.c.bf16 %v3302, %v3298
        %v3399 = vpack.c.bf16 %v3307, %v3303
        %v3400 = vpack.c.bf16 %v3308, %v3304
        %v3401 = vpack.c.bf16 %v3309, %v3305
        %v3402 = vpack.c.bf16 %v3310, %v3306
        %v3403 = vpack.c.bf16 %v3315, %v3311
        %v3404 = vpack.c.bf16 %v3316, %v3312
        %v3405 = vpack.c.bf16 %v3317, %v3313
        %v3406 = vpack.c.bf16 %v3318, %v3314
        %v3407 = vpack.c.bf16 %v3323, %v3319
        %v3408 = vpack.c.bf16 %v3324, %v3320
        %v3409 = vpack.c.bf16 %v3325, %v3321
        %v3410 = vpack.c.bf16 %v3326, %v3322
        %v3411 = vpack.c.bf16 %v3331, %v3327
        %v3412 = vpack.c.bf16 %v3332, %v3328
        %v3413 = vpack.c.bf16 %v3333, %v3329
        %v3414 = vpack.c.bf16 %v3334, %v3330
        %v3415 = vpack.c.bf16 %v3339, %v3335
        %v3416 = vpack.c.bf16 %v3340, %v3336
        %v3417 = vpack.c.bf16 %v3341, %v3337
        %v3418 = vpack.c.bf16 %v3342, %v3338
        %v3419 = vpack.c.bf16 %v3347, %v3343
        %v3420 = vpack.c.bf16 %v3348, %v3344
        %v3421 = vpack.c.bf16 %v3349, %v3345
        %v3422 = vpack.c.bf16 %v3350, %v3346
        %v3423 = vpack.c.bf16 %v3355, %v3351
        %v3424 = vpack.c.bf16 %v3356, %v3352
        %v3425 = vpack.c.bf16 %v3357, %v3353
        %v3426 = vpack.c.bf16 %v3358, %v3354
        %v3427 = vpack.c.bf16 %v3363, %v3359
        %v3428 = vpack.c.bf16 %v3364, %v3360
        %v3429 = vpack.c.bf16 %v3365, %v3361
        %v3430 = vpack.c.bf16 %v3366, %v3362
        %v3431 = vld [vmem:[#allocation10] sm:$0xff]
        %v3432 = vld [vmem:[#allocation10 + $0x8] sm:$0xff]
        %v3433 = vld [vmem:[#allocation10 + $0x10] sm:$0xff]
        %v3434 = vld [vmem:[#allocation10 + $0x18] sm:$0xff]
        %v3435 = vld [vmem:[#allocation10 + $0x20] sm:$0xff]
        %v3436 = vld [vmem:[#allocation10 + $0x28] sm:$0xff]
        %v3437 = vld [vmem:[#allocation10 + $0x30] sm:$0xff]
        %v3438 = vld [vmem:[#allocation10 + $0x38] sm:$0xff]
        %v3439 = vld [vmem:[#allocation10 + $0x40] sm:$0xff]
        %v3440 = vld [vmem:[#allocation10 + $0x48] sm:$0xff]
        %v3441 = vld [vmem:[#allocation10 + $0x50] sm:$0xff]
        %v3442 = vld [vmem:[#allocation10 + $0x58] sm:$0xff]
        %v3443 = vld [vmem:[#allocation10 + $0x60] sm:$0xff]
        %v3444 = vld [vmem:[#allocation10 + $0x68] sm:$0xff]
        %v3445 = vld [vmem:[#allocation10 + $0x70] sm:$0xff]
        %v3446 = vld [vmem:[#allocation10 + $0x78] sm:$0xff]
        %v3447 = vld [vmem:[#allocation10 + $0x80] sm:$0xff]
        %v3448 = vld [vmem:[#allocation10 + $0x88] sm:$0xff]
        %v3449 = vld [vmem:[#allocation10 + $0x90] sm:$0xff]
        %v3450 = vld [vmem:[#allocation10 + $0x98] sm:$0xff]
        %v3451 = vld [vmem:[#allocation10 + $0xa0] sm:$0xff]
        %v3452 = vld [vmem:[#allocation10 + $0xa8] sm:$0xff]
        %v3453 = vld [vmem:[#allocation10 + $0xb0] sm:$0xff]
        %v3454 = vld [vmem:[#allocation10 + $0xb8] sm:$0xff]
        %v3455 = vld [vmem:[#allocation10 + $0xc0] sm:$0xff]
        %v3456 = vld [vmem:[#allocation10 + $0xc8] sm:$0xff]
        %v3457 = vld [vmem:[#allocation10 + $0xd0] sm:$0xff]
        %v3458 = vld [vmem:[#allocation10 + $0xd8] sm:$0xff]
        %v3459 = vld [vmem:[#allocation10 + $0xe0] sm:$0xff]
        %v3460 = vld [vmem:[#allocation10 + $0xe8] sm:$0xff]
        %v3461 = vld [vmem:[#allocation10 + $0xf0] sm:$0xff]
        %v3462 = vld [vmem:[#allocation10 + $0xf8] sm:$0xff]
        %v3463 = vld [vmem:[#allocation10 + $0x100] sm:$0xff]
        %v3464 = vld [vmem:[#allocation10 + $0x108] sm:$0xff]
        %v3465 = vld [vmem:[#allocation10 + $0x110] sm:$0xff]
        %v3466 = vld [vmem:[#allocation10 + $0x118] sm:$0xff]
        %v3467 = vld [vmem:[#allocation10 + $0x120] sm:$0xff]
        %v3468 = vld [vmem:[#allocation10 + $0x128] sm:$0xff]
        %v3469 = vld [vmem:[#allocation10 + $0x130] sm:$0xff]
        %v3470 = vld [vmem:[#allocation10 + $0x138] sm:$0xff]
        %v3471 = vld [vmem:[#allocation10 + $0x140] sm:$0xff]
        %v3472 = vld [vmem:[#allocation10 + $0x148] sm:$0xff]
        %v3473 = vld [vmem:[#allocation10 + $0x150] sm:$0xff]
        %v3474 = vld [vmem:[#allocation10 + $0x158] sm:$0xff]
        %v3475 = vld [vmem:[#allocation10 + $0x160] sm:$0xff]
        %v3476 = vld [vmem:[#allocation10 + $0x168] sm:$0xff]
        %v3477 = vld [vmem:[#allocation10 + $0x170] sm:$0xff]
        %v3478 = vld [vmem:[#allocation10 + $0x178] sm:$0xff]
        %v3479 = vld [vmem:[#allocation10 + $0x180] sm:$0xff]
        %v3480 = vld [vmem:[#allocation10 + $0x188] sm:$0xff]
        %v3481 = vld [vmem:[#allocation10 + $0x190] sm:$0xff]
        %v3482 = vld [vmem:[#allocation10 + $0x198] sm:$0xff]
        %v3483 = vld [vmem:[#allocation10 + $0x1a0] sm:$0xff]
        %v3484 = vld [vmem:[#allocation10 + $0x1a8] sm:$0xff]
        %v3485 = vld [vmem:[#allocation10 + $0x1b0] sm:$0xff]
        %v3486 = vld [vmem:[#allocation10 + $0x1b8] sm:$0xff]
        %v3487 = vld [vmem:[#allocation10 + $0x1c0] sm:$0xff]
        %v3488 = vld [vmem:[#allocation10 + $0x1c8] sm:$0xff]
        %v3489 = vld [vmem:[#allocation10 + $0x1d0] sm:$0xff]
        %v3490 = vld [vmem:[#allocation10 + $0x1d8] sm:$0xff]
        %v3491 = vld [vmem:[#allocation10 + $0x1e0] sm:$0xff]
        %v3492 = vld [vmem:[#allocation10 + $0x1e8] sm:$0xff]
        %v3493 = vld [vmem:[#allocation10 + $0x1f0] sm:$0xff]
        %v3494 = vld [vmem:[#allocation10 + $0x1f8] sm:$0xff]
        %v3495 = vld [vmem:[#allocation11] sm:$0x3]
        %v3497 = vperm.slane %v3495, 0
        %v3498 = vperm.slane %v3495, 1
        %v3565 = vunpack.c.l.b16 %v3431
        %v3566 = vunpack.c.h.b16 %v3431
        %v3567 = vunpack.c.l.b16 %v3432
        %v3568 = vunpack.c.h.b16 %v3432
        %v3569 = vunpack.c.l.b16 %v3433
        %v3570 = vunpack.c.h.b16 %v3433
        %v3571 = vunpack.c.l.b16 %v3434
        %v3572 = vunpack.c.h.b16 %v3434
        %v3573 = vunpack.c.l.b16 %v3435
        %v3574 = vunpack.c.h.b16 %v3435
        %v3575 = vunpack.c.l.b16 %v3436
        %v3576 = vunpack.c.h.b16 %v3436
        %v3577 = vunpack.c.l.b16 %v3437
        %v3578 = vunpack.c.h.b16 %v3437
        %v3579 = vunpack.c.l.b16 %v3438
        %v3580 = vunpack.c.h.b16 %v3438
        %v3581 = vunpack.c.l.b16 %v3439
        %v3582 = vunpack.c.h.b16 %v3439
        %v3583 = vunpack.c.l.b16 %v3440
        %v3584 = vunpack.c.h.b16 %v3440
        %v3585 = vunpack.c.l.b16 %v3441
        %v3586 = vunpack.c.h.b16 %v3441
        %v3587 = vunpack.c.l.b16 %v3442
        %v3588 = vunpack.c.h.b16 %v3442
        %v3589 = vunpack.c.l.b16 %v3443
        %v3590 = vunpack.c.h.b16 %v3443
        %v3591 = vunpack.c.l.b16 %v3444
        %v3592 = vunpack.c.h.b16 %v3444
        %v3593 = vunpack.c.l.b16 %v3445
        %v3594 = vunpack.c.h.b16 %v3445
        %v3595 = vunpack.c.l.b16 %v3446
        %v3596 = vunpack.c.h.b16 %v3446
        %v3597 = vunpack.c.l.b16 %v3447
        %v3598 = vunpack.c.h.b16 %v3447
        %v3599 = vunpack.c.l.b16 %v3448
        %v3600 = vunpack.c.h.b16 %v3448
        %v3601 = vunpack.c.l.b16 %v3449
        %v3602 = vunpack.c.h.b16 %v3449
        %v3603 = vunpack.c.l.b16 %v3450
        %v3604 = vunpack.c.h.b16 %v3450
        %v3605 = vunpack.c.l.b16 %v3451
        %v3606 = vunpack.c.h.b16 %v3451
        %v3607 = vunpack.c.l.b16 %v3452
        %v3608 = vunpack.c.h.b16 %v3452
        %v3609 = vunpack.c.l.b16 %v3453
        %v3610 = vunpack.c.h.b16 %v3453
        %v3611 = vunpack.c.l.b16 %v3454
        %v3612 = vunpack.c.h.b16 %v3454
        %v3613 = vunpack.c.l.b16 %v3455
        %v3614 = vunpack.c.h.b16 %v3455
        %v3615 = vunpack.c.l.b16 %v3456
        %v3616 = vunpack.c.h.b16 %v3456
        %v3617 = vunpack.c.l.b16 %v3457
        %v3618 = vunpack.c.h.b16 %v3457
        %v3619 = vunpack.c.l.b16 %v3458
        %v3620 = vunpack.c.h.b16 %v3458
        %v3621 = vunpack.c.l.b16 %v3459
        %v3622 = vunpack.c.h.b16 %v3459
        %v3623 = vunpack.c.l.b16 %v3460
        %v3624 = vunpack.c.h.b16 %v3460
        %v3625 = vunpack.c.l.b16 %v3461
        %v3626 = vunpack.c.h.b16 %v3461
        %v3627 = vunpack.c.l.b16 %v3462
        %v3628 = vunpack.c.h.b16 %v3462
        %v3629 = vunpack.c.l.b16 %v3463
        %v3630 = vunpack.c.h.b16 %v3463
        %v3631 = vunpack.c.l.b16 %v3464
        %v3632 = vunpack.c.h.b16 %v3464
        %v3633 = vunpack.c.l.b16 %v3465
        %v3634 = vunpack.c.h.b16 %v3465
        %v3635 = vunpack.c.l.b16 %v3466
        %v3636 = vunpack.c.h.b16 %v3466
        %v3637 = vunpack.c.l.b16 %v3467
        %v3638 = vunpack.c.h.b16 %v3467
        %v3639 = vunpack.c.l.b16 %v3468
        %v3640 = vunpack.c.h.b16 %v3468
        %v3641 = vunpack.c.l.b16 %v3469
        %v3642 = vunpack.c.h.b16 %v3469
        %v3643 = vunpack.c.l.b16 %v3470
        %v3644 = vunpack.c.h.b16 %v3470
        %v3645 = vunpack.c.l.b16 %v3471
        %v3646 = vunpack.c.h.b16 %v3471
        %v3647 = vunpack.c.l.b16 %v3472
        %v3648 = vunpack.c.h.b16 %v3472
        %v3649 = vunpack.c.l.b16 %v3473
        %v3650 = vunpack.c.h.b16 %v3473
        %v3651 = vunpack.c.l.b16 %v3474
        %v3652 = vunpack.c.h.b16 %v3474
        %v3653 = vunpack.c.l.b16 %v3475
        %v3654 = vunpack.c.h.b16 %v3475
        %v3655 = vunpack.c.l.b16 %v3476
        %v3656 = vunpack.c.h.b16 %v3476
        %v3657 = vunpack.c.l.b16 %v3477
        %v3658 = vunpack.c.h.b16 %v3477
        %v3659 = vunpack.c.l.b16 %v3478
        %v3660 = vunpack.c.h.b16 %v3478
        %v3661 = vunpack.c.l.b16 %v3479
        %v3662 = vunpack.c.h.b16 %v3479
        %v3663 = vunpack.c.l.b16 %v3480
        %v3664 = vunpack.c.h.b16 %v3480
        %v3665 = vunpack.c.l.b16 %v3481
        %v3666 = vunpack.c.h.b16 %v3481
        %v3667 = vunpack.c.l.b16 %v3482
        %v3668 = vunpack.c.h.b16 %v3482
        %v3669 = vunpack.c.l.b16 %v3483
        %v3670 = vunpack.c.h.b16 %v3483
        %v3671 = vunpack.c.l.b16 %v3484
        %v3672 = vunpack.c.h.b16 %v3484
        %v3673 = vunpack.c.l.b16 %v3485
        %v3674 = vunpack.c.h.b16 %v3485
        %v3675 = vunpack.c.l.b16 %v3486
        %v3676 = vunpack.c.h.b16 %v3486
        %v3677 = vunpack.c.l.b16 %v3487
        %v3678 = vunpack.c.h.b16 %v3487
        %v3679 = vunpack.c.l.b16 %v3488
        %v3680 = vunpack.c.h.b16 %v3488
        %v3681 = vunpack.c.l.b16 %v3489
        %v3682 = vunpack.c.h.b16 %v3489
        %v3683 = vunpack.c.l.b16 %v3490
        %v3684 = vunpack.c.h.b16 %v3490
        %v3685 = vunpack.c.l.b16 %v3491
        %v3686 = vunpack.c.h.b16 %v3491
        %v3687 = vunpack.c.l.b16 %v3492
        %v3688 = vunpack.c.h.b16 %v3492
        %v3689 = vunpack.c.l.b16 %v3493
        %v3690 = vunpack.c.h.b16 %v3493
        %v3691 = vunpack.c.l.b16 %v3494
        %v3692 = vunpack.c.h.b16 %v3494
        %v3693 = vpack.c.b16 %v3567, %v3565
        %v3694 = vpack.c.b16 %v3568, %v3566
        %v3695 = vpack.c.b16 %v3571, %v3569
        %v3696 = vpack.c.b16 %v3572, %v3570
        %v3697 = vpack.c.b16 %v3575, %v3573
        %v3698 = vpack.c.b16 %v3576, %v3574
        %v3699 = vpack.c.b16 %v3579, %v3577
        %v3700 = vpack.c.b16 %v3580, %v3578
        %v3701 = vpack.c.b16 %v3583, %v3581
        %v3702 = vpack.c.b16 %v3584, %v3582
        %v3703 = vpack.c.b16 %v3587, %v3585
        %v3704 = vpack.c.b16 %v3588, %v3586
        %v3705 = vpack.c.b16 %v3591, %v3589
        %v3706 = vpack.c.b16 %v3592, %v3590
        %v3707 = vpack.c.b16 %v3595, %v3593
        %v3708 = vpack.c.b16 %v3596, %v3594
        %v3709 = vpack.c.b16 %v3599, %v3597
        %v3710 = vpack.c.b16 %v3600, %v3598
        %v3711 = vpack.c.b16 %v3603, %v3601
        %v3712 = vpack.c.b16 %v3604, %v3602
        %v3713 = vpack.c.b16 %v3607, %v3605
        %v3714 = vpack.c.b16 %v3608, %v3606
        %v3715 = vpack.c.b16 %v3611, %v3609
        %v3716 = vpack.c.b16 %v3612, %v3610
        %v3717 = vpack.c.b16 %v3615, %v3613
        %v3718 = vpack.c.b16 %v3616, %v3614
        %v3719 = vpack.c.b16 %v3619, %v3617
        %v3720 = vpack.c.b16 %v3620, %v3618
        %v3721 = vpack.c.b16 %v3623, %v3621
        %v3722 = vpack.c.b16 %v3624, %v3622
        %v3723 = vpack.c.b16 %v3627, %v3625
        %v3724 = vpack.c.b16 %v3628, %v3626
        %v3725 = vpack.c.b16 %v3631, %v3629
        %v3726 = vpack.c.b16 %v3632, %v3630
        %v3727 = vpack.c.b16 %v3635, %v3633
        %v3728 = vpack.c.b16 %v3636, %v3634
        %v3729 = vpack.c.b16 %v3639, %v3637
        %v3730 = vpack.c.b16 %v3640, %v3638
        %v3731 = vpack.c.b16 %v3643, %v3641
        %v3732 = vpack.c.b16 %v3644, %v3642
        %v3733 = vpack.c.b16 %v3647, %v3645
        %v3734 = vpack.c.b16 %v3648, %v3646
        %v3735 = vpack.c.b16 %v3651, %v3649
        %v3736 = vpack.c.b16 %v3652, %v3650
        %v3737 = vpack.c.b16 %v3655, %v3653
        %v3738 = vpack.c.b16 %v3656, %v3654
        %v3739 = vpack.c.b16 %v3659, %v3657
        %v3740 = vpack.c.b16 %v3660, %v3658
        %v3741 = vpack.c.b16 %v3663, %v3661
        %v3742 = vpack.c.b16 %v3664, %v3662
        %v3743 = vpack.c.b16 %v3667, %v3665
        %v3744 = vpack.c.b16 %v3668, %v3666
        %v3745 = vpack.c.b16 %v3671, %v3669
        %v3746 = vpack.c.b16 %v3672, %v3670
        %v3747 = vpack.c.b16 %v3675, %v3673
        %v3748 = vpack.c.b16 %v3676, %v3674
        %v3749 = vpack.c.b16 %v3679, %v3677
        %v3750 = vpack.c.b16 %v3680, %v3678
        %v3751 = vpack.c.b16 %v3683, %v3681
        %v3752 = vpack.c.b16 %v3684, %v3682
        %v3753 = vpack.c.b16 %v3687, %v3685
        %v3754 = vpack.c.b16 %v3688, %v3686
        %v3755 = vpack.c.b16 %v3691, %v3689
        %v3756 = vpack.c.b16 %v3692, %v3690
        %3821 = vmatpush.bf16.msra.mxu0 %v3707
        %3822 = vmatpush.bf16.msra.mxu0 %v3705
        %3823 = vmatpush.bf16.msra.mxu0 %v3703
        %3824 = vmatpush.bf16.msra.mxu0 %v3701
        %3825 = vmatpush.bf16.msra.mxu0 %v3699
        %3826 = vmatpush.bf16.msra.mxu0 %v3697
        %3827 = vmatpush.bf16.msra.mxu0 %v3695
        %3828 = vmatpush.bf16.msra.mxu0 %v3693
        %3829 = vmatmul.bf16.gmra.mxu0 %v3367
        %v3830 = vpop.f32.mrf.mxu0
        %v3831 = vadd.f32 %v3497, %v3830
        %v3832 = vpop.f32.mrf.mxu0
        %v3833 = vadd.f32 %v3497, %v3832
        %3834 = vmatmul.bf16.gmra.mxu0 %v3371
        %v3835 = vpop.f32.mrf.mxu0
        %v3836 = vadd.f32 %v3497, %v3835
        %v3837 = vpop.f32.mrf.mxu0
        %v3838 = vadd.f32 %v3497, %v3837
        %3839 = vmatmul.bf16.gmra.mxu0 %v3375
        %v3840 = vpop.f32.mrf.mxu0
        %v3841 = vadd.f32 %v3497, %v3840
        %v3842 = vpop.f32.mrf.mxu0
        %v3843 = vadd.f32 %v3497, %v3842
        %3844 = vmatmul.bf16.gmra.mxu0 %v3379
        %v3845 = vpop.f32.mrf.mxu0
        %v3846 = vadd.f32 %v3497, %v3845
        %v3847 = vpop.f32.mrf.mxu0
        %v3848 = vadd.f32 %v3497, %v3847
        %3849 = vmatmul.bf16.gmra.mxu0 %v3383
        %v3850 = vpop.f32.mrf.mxu0
        %v3851 = vadd.f32 %v3497, %v3850
        %v3852 = vpop.f32.mrf.mxu0
        %v3853 = vadd.f32 %v3497, %v3852
        %3854 = vmatmul.bf16.gmra.mxu0 %v3387
        %v3855 = vpop.f32.mrf.mxu0
        %v3856 = vadd.f32 %v3497, %v3855
        %v3857 = vpop.f32.mrf.mxu0
        %v3858 = vadd.f32 %v3497, %v3857
        %3859 = vmatmul.bf16.gmra.mxu0 %v3391
        %v3860 = vpop.f32.mrf.mxu0
        %v3861 = vadd.f32 %v3497, %v3860
        %v3862 = vpop.f32.mrf.mxu0
        %v3863 = vadd.f32 %v3497, %v3862
        %3864 = vmatmul.bf16.gmra.mxu0 %v3395
        %v3865 = vpop.f32.mrf.mxu0
        %v3866 = vadd.f32 %v3497, %v3865
        %v3867 = vpop.f32.mrf.mxu0
        %v3868 = vadd.f32 %v3497, %v3867
        %3869 = vmatmul.bf16.gmra.mxu0 %v3399
        %v3870 = vpop.f32.mrf.mxu0
        %v3871 = vadd.f32 %v3497, %v3870
        %v3872 = vpop.f32.mrf.mxu0
        %v3873 = vadd.f32 %v3497, %v3872
        %3874 = vmatmul.bf16.gmra.mxu0 %v3403
        %v3875 = vpop.f32.mrf.mxu0
        %v3876 = vadd.f32 %v3497, %v3875
        %v3877 = vpop.f32.mrf.mxu0
        %v3878 = vadd.f32 %v3497, %v3877
        %3879 = vmatmul.bf16.gmra.mxu0 %v3407
        %v3880 = vpop.f32.mrf.mxu0
        %v3881 = vadd.f32 %v3497, %v3880
        %v3882 = vpop.f32.mrf.mxu0
        %v3883 = vadd.f32 %v3497, %v3882
        %3884 = vmatmul.bf16.gmra.mxu0 %v3411
        %v3885 = vpop.f32.mrf.mxu0
        %v3886 = vadd.f32 %v3497, %v3885
        %v3887 = vpop.f32.mrf.mxu0
        %v3888 = vadd.f32 %v3497, %v3887
        %3889 = vmatmul.bf16.gmra.mxu0 %v3415
        %v3890 = vpop.f32.mrf.mxu0
        %v3891 = vadd.f32 %v3497, %v3890
        %v3892 = vpop.f32.mrf.mxu0
        %v3893 = vadd.f32 %v3497, %v3892
        %3894 = vmatmul.bf16.gmra.mxu0 %v3419
        %v3895 = vpop.f32.mrf.mxu0
        %v3896 = vadd.f32 %v3497, %v3895
        %v3897 = vpop.f32.mrf.mxu0
        %v3898 = vadd.f32 %v3497, %v3897
        %3899 = vmatmul.bf16.gmra.mxu0 %v3423
        %v3900 = vpop.f32.mrf.mxu0
        %v3901 = vadd.f32 %v3497, %v3900
        %v3902 = vpop.f32.mrf.mxu0
        %v3903 = vadd.f32 %v3497, %v3902
        %3904 = vmatmul.bf16.gmra.mxu0 %v3427
        %v3905 = vpop.f32.mrf.mxu0
        %v3906 = vadd.f32 %v3497, %v3905
        %v3907 = vpop.f32.mrf.mxu0
        %v3908 = vadd.f32 %v3497, %v3907
        %3909 = vdwg.mxu0
        %3910 = vmatpush.bf16.msra.mxu0 %v3723
        %3911 = vmatpush.bf16.msra.mxu0 %v3721
        %3912 = vmatpush.bf16.msra.mxu0 %v3719
        %3913 = vmatpush.bf16.msra.mxu0 %v3717
        %3914 = vmatpush.bf16.msra.mxu0 %v3715
        %3915 = vmatpush.bf16.msra.mxu0 %v3713
        %3916 = vmatpush.bf16.msra.mxu0 %v3711
        %3917 = vmatpush.bf16.msra.mxu0 %v3709
        %3918 = vmatmul.bf16.gmra.mxu0 %v3368
        %v3919 = vpop.f32.mrf.mxu0
        %v3920 = vadd.f32 %v3831, %v3919
        %v3921 = vpop.f32.mrf.mxu0
        %v3922 = vadd.f32 %v3833, %v3921
        %3923 = vmatmul.bf16.gmra.mxu0 %v3372
        %v3924 = vpop.f32.mrf.mxu0
        %v3925 = vadd.f32 %v3836, %v3924
        %v3926 = vpop.f32.mrf.mxu0
        %v3927 = vadd.f32 %v3838, %v3926
        %3928 = vmatmul.bf16.gmra.mxu0 %v3376
        %v3929 = vpop.f32.mrf.mxu0
        %v3930 = vadd.f32 %v3841, %v3929
        %v3931 = vpop.f32.mrf.mxu0
        %v3932 = vadd.f32 %v3843, %v3931
        %3933 = vmatmul.bf16.gmra.mxu0 %v3380
        %v3934 = vpop.f32.mrf.mxu0
        %v3935 = vadd.f32 %v3846, %v3934
        %v3936 = vpop.f32.mrf.mxu0
        %v3937 = vadd.f32 %v3848, %v3936
        %3938 = vmatmul.bf16.gmra.mxu0 %v3384
        %v3939 = vpop.f32.mrf.mxu0
        %v3940 = vadd.f32 %v3851, %v3939
        %v3941 = vpop.f32.mrf.mxu0
        %v3942 = vadd.f32 %v3853, %v3941
        %3943 = vmatmul.bf16.gmra.mxu0 %v3388
        %v3944 = vpop.f32.mrf.mxu0
        %v3945 = vadd.f32 %v3856, %v3944
        %v3946 = vpop.f32.mrf.mxu0
        %v3947 = vadd.f32 %v3858, %v3946
        %3948 = vmatmul.bf16.gmra.mxu0 %v3392
        %v3949 = vpop.f32.mrf.mxu0
        %v3950 = vadd.f32 %v3861, %v3949
        %v3951 = vpop.f32.mrf.mxu0
        %v3952 = vadd.f32 %v3863, %v3951
        %3953 = vmatmul.bf16.gmra.mxu0 %v3396
        %v3954 = vpop.f32.mrf.mxu0
        %v3955 = vadd.f32 %v3866, %v3954
        %v3956 = vpop.f32.mrf.mxu0
        %v3957 = vadd.f32 %v3868, %v3956
        %3958 = vmatmul.bf16.gmra.mxu0 %v3400
        %v3959 = vpop.f32.mrf.mxu0
        %v3960 = vadd.f32 %v3871, %v3959
        %v3961 = vpop.f32.mrf.mxu0
        %v3962 = vadd.f32 %v3873, %v3961
        %3963 = vmatmul.bf16.gmra.mxu0 %v3404
        %v3964 = vpop.f32.mrf.mxu0
        %v3965 = vadd.f32 %v3876, %v3964
        %v3966 = vpop.f32.mrf.mxu0
        %v3967 = vadd.f32 %v3878, %v3966
        %3968 = vmatmul.bf16.gmra.mxu0 %v3408
        %v3969 = vpop.f32.mrf.mxu0
        %v3970 = vadd.f32 %v3881, %v3969
        %v3971 = vpop.f32.mrf.mxu0
        %v3972 = vadd.f32 %v3883, %v3971
        %3973 = vmatmul.bf16.gmra.mxu0 %v3412
        %v3974 = vpop.f32.mrf.mxu0
        %v3975 = vadd.f32 %v3886, %v3974
        %v3976 = vpop.f32.mrf.mxu0
        %v3977 = vadd.f32 %v3888, %v3976
        %3978 = vmatmul.bf16.gmra.mxu0 %v3416
        %v3979 = vpop.f32.mrf.mxu0
        %v3980 = vadd.f32 %v3891, %v3979
        %v3981 = vpop.f32.mrf.mxu0
        %v3982 = vadd.f32 %v3893, %v3981
        %3983 = vmatmul.bf16.gmra.mxu0 %v3420
        %v3984 = vpop.f32.mrf.mxu0
        %v3985 = vadd.f32 %v3896, %v3984
        %v3986 = vpop.f32.mrf.mxu0
        %v3987 = vadd.f32 %v3898, %v3986
        %3988 = vmatmul.bf16.gmra.mxu0 %v3424
        %v3989 = vpop.f32.mrf.mxu0
        %v3990 = vadd.f32 %v3901, %v3989
        %v3991 = vpop.f32.mrf.mxu0
        %v3992 = vadd.f32 %v3903, %v3991
        %3993 = vmatmul.bf16.gmra.mxu0 %v3428
        %v3994 = vpop.f32.mrf.mxu0
        %v3995 = vadd.f32 %v3906, %v3994
        %v3996 = vpop.f32.mrf.mxu0
        %v3997 = vadd.f32 %v3908, %v3996
        %3998 = vdwg.mxu0
        %3999 = vmatpush.bf16.msra.mxu0 %v3739
        %4000 = vmatpush.bf16.msra.mxu0 %v3737
        %4001 = vmatpush.bf16.msra.mxu0 %v3735
        %4002 = vmatpush.bf16.msra.mxu0 %v3733
        %4003 = vmatpush.bf16.msra.mxu0 %v3731
        %4004 = vmatpush.bf16.msra.mxu0 %v3729
        %4005 = vmatpush.bf16.msra.mxu0 %v3727
        %4006 = vmatpush.bf16.msra.mxu0 %v3725
        %4007 = vmatmul.bf16.gmra.mxu0 %v3369
        %v4008 = vpop.f32.mrf.mxu0
        %v4009 = vadd.f32 %v3920, %v4008
        %v4010 = vpop.f32.mrf.mxu0
        %v4011 = vadd.f32 %v3922, %v4010
        %4012 = vmatmul.bf16.gmra.mxu0 %v3373
        %v4013 = vpop.f32.mrf.mxu0
        %v4014 = vadd.f32 %v3925, %v4013
        %v4015 = vpop.f32.mrf.mxu0
        %v4016 = vadd.f32 %v3927, %v4015
        %4017 = vmatmul.bf16.gmra.mxu0 %v3377
        %v4018 = vpop.f32.mrf.mxu0
        %v4019 = vadd.f32 %v3930, %v4018
        %v4020 = vpop.f32.mrf.mxu0
        %v4021 = vadd.f32 %v3932, %v4020
        %4022 = vmatmul.bf16.gmra.mxu0 %v3381
        %v4023 = vpop.f32.mrf.mxu0
        %v4024 = vadd.f32 %v3935, %v4023
        %v4025 = vpop.f32.mrf.mxu0
        %v4026 = vadd.f32 %v3937, %v4025
        %4027 = vmatmul.bf16.gmra.mxu0 %v3385
        %v4028 = vpop.f32.mrf.mxu0
        %v4029 = vadd.f32 %v3940, %v4028
        %v4030 = vpop.f32.mrf.mxu0
        %v4031 = vadd.f32 %v3942, %v4030
        %4032 = vmatmul.bf16.gmra.mxu0 %v3389
        %v4033 = vpop.f32.mrf.mxu0
        %v4034 = vadd.f32 %v3945, %v4033
        %v4035 = vpop.f32.mrf.mxu0
        %v4036 = vadd.f32 %v3947, %v4035
        %4037 = vmatmul.bf16.gmra.mxu0 %v3393
        %v4038 = vpop.f32.mrf.mxu0
        %v4039 = vadd.f32 %v3950, %v4038
        %v4040 = vpop.f32.mrf.mxu0
        %v4041 = vadd.f32 %v3952, %v4040
        %4042 = vmatmul.bf16.gmra.mxu0 %v3397
        %v4043 = vpop.f32.mrf.mxu0
        %v4044 = vadd.f32 %v3955, %v4043
        %v4045 = vpop.f32.mrf.mxu0
        %v4046 = vadd.f32 %v3957, %v4045
        %4047 = vmatmul.bf16.gmra.mxu0 %v3401
        %v4048 = vpop.f32.mrf.mxu0
        %v4049 = vadd.f32 %v3960, %v4048
        %v4050 = vpop.f32.mrf.mxu0
        %v4051 = vadd.f32 %v3962, %v4050
        %4052 = vmatmul.bf16.gmra.mxu0 %v3405
        %v4053 = vpop.f32.mrf.mxu0
        %v4054 = vadd.f32 %v3965, %v4053
        %v4055 = vpop.f32.mrf.mxu0
        %v4056 = vadd.f32 %v3967, %v4055
        %4057 = vmatmul.bf16.gmra.mxu0 %v3409
        %v4058 = vpop.f32.mrf.mxu0
        %v4059 = vadd.f32 %v3970, %v4058
        %v4060 = vpop.f32.mrf.mxu0
        %v4061 = vadd.f32 %v3972, %v4060
        %4062 = vmatmul.bf16.gmra.mxu0 %v3413
        %v4063 = vpop.f32.mrf.mxu0
        %v4064 = vadd.f32 %v3975, %v4063
        %v4065 = vpop.f32.mrf.mxu0
        %v4066 = vadd.f32 %v3977, %v4065
        %4067 = vmatmul.bf16.gmra.mxu0 %v3417
        %v4068 = vpop.f32.mrf.mxu0
        %v4069 = vadd.f32 %v3980, %v4068
        %v4070 = vpop.f32.mrf.mxu0
        %v4071 = vadd.f32 %v3982, %v4070
        %4072 = vmatmul.bf16.gmra.mxu0 %v3421
        %v4073 = vpop.f32.mrf.mxu0
        %v4074 = vadd.f32 %v3985, %v4073
        %v4075 = vpop.f32.mrf.mxu0
        %v4076 = vadd.f32 %v3987, %v4075
        %4077 = vmatmul.bf16.gmra.mxu0 %v3425
        %v4078 = vpop.f32.mrf.mxu0
        %v4079 = vadd.f32 %v3990, %v4078
        %v4080 = vpop.f32.mrf.mxu0
        %v4081 = vadd.f32 %v3992, %v4080
        %4082 = vmatmul.bf16.gmra.mxu0 %v3429
        %v4083 = vpop.f32.mrf.mxu0
        %v4084 = vadd.f32 %v3995, %v4083
        %v4085 = vpop.f32.mrf.mxu0
        %v4086 = vadd.f32 %v3997, %v4085
        %4087 = vdwg.mxu0
        %4088 = vmatpush.bf16.msra.mxu0 %v3755
        %4089 = vmatpush.bf16.msra.mxu0 %v3753
        %4090 = vmatpush.bf16.msra.mxu0 %v3751
        %4091 = vmatpush.bf16.msra.mxu0 %v3749
        %4092 = vmatpush.bf16.msra.mxu0 %v3747
        %4093 = vmatpush.bf16.msra.mxu0 %v3745
        %4094 = vmatpush.bf16.msra.mxu0 %v3743
        %4095 = vmatpush.bf16.msra.mxu0 %v3741
        %4096 = vmatmul.bf16.gmra.mxu0 %v3370
        %v4097 = vpop.f32.mrf.mxu0
        %v4098 = vadd.f32 %v4009, %v4097
        %v4099 = vpop.f32.mrf.mxu0
        %v4100 = vadd.f32 %v4011, %v4099
        %4101 = vmatmul.bf16.gmra.mxu0 %v3374
        %v4102 = vpop.f32.mrf.mxu0
        %v4103 = vadd.f32 %v4014, %v4102
        %v4104 = vpop.f32.mrf.mxu0
        %v4105 = vadd.f32 %v4016, %v4104
        %4106 = vmatmul.bf16.gmra.mxu0 %v3378
        %v4107 = vpop.f32.mrf.mxu0
        %v4108 = vadd.f32 %v4019, %v4107
        %v4109 = vpop.f32.mrf.mxu0
        %v4110 = vadd.f32 %v4021, %v4109
        %4111 = vmatmul.bf16.gmra.mxu0 %v3382
        %v4112 = vpop.f32.mrf.mxu0
        %v4113 = vadd.f32 %v4024, %v4112
        %v4114 = vpop.f32.mrf.mxu0
        %v4115 = vadd.f32 %v4026, %v4114
        %4116 = vmatmul.bf16.gmra.mxu0 %v3386
        %v4117 = vpop.f32.mrf.mxu0
        %v4118 = vadd.f32 %v4029, %v4117
        %v4119 = vpop.f32.mrf.mxu0
        %v4120 = vadd.f32 %v4031, %v4119
        %4121 = vmatmul.bf16.gmra.mxu0 %v3390
        %v4122 = vpop.f32.mrf.mxu0
        %v4123 = vadd.f32 %v4034, %v4122
        %v4124 = vpop.f32.mrf.mxu0
        %v4125 = vadd.f32 %v4036, %v4124
        %4126 = vmatmul.bf16.gmra.mxu0 %v3394
        %v4127 = vpop.f32.mrf.mxu0
        %v4128 = vadd.f32 %v4039, %v4127
        %v4129 = vpop.f32.mrf.mxu0
        %v4130 = vadd.f32 %v4041, %v4129
        %4131 = vmatmul.bf16.gmra.mxu0 %v3398
        %v4132 = vpop.f32.mrf.mxu0
        %v4133 = vadd.f32 %v4044, %v4132
        %v4134 = vpop.f32.mrf.mxu0
        %v4135 = vadd.f32 %v4046, %v4134
        %4136 = vmatmul.bf16.gmra.mxu0 %v3402
        %v4137 = vpop.f32.mrf.mxu0
        %v4138 = vadd.f32 %v4049, %v4137
        %v4139 = vpop.f32.mrf.mxu0
        %v4140 = vadd.f32 %v4051, %v4139
        %4141 = vmatmul.bf16.gmra.mxu0 %v3406
        %v4142 = vpop.f32.mrf.mxu0
        %v4143 = vadd.f32 %v4054, %v4142
        %v4144 = vpop.f32.mrf.mxu0
        %v4145 = vadd.f32 %v4056, %v4144
        %4146 = vmatmul.bf16.gmra.mxu0 %v3410
        %v4147 = vpop.f32.mrf.mxu0
        %v4148 = vadd.f32 %v4059, %v4147
        %v4149 = vpop.f32.mrf.mxu0
        %v4150 = vadd.f32 %v4061, %v4149
        %4151 = vmatmul.bf16.gmra.mxu0 %v3414
        %v4152 = vpop.f32.mrf.mxu0
        %v4153 = vadd.f32 %v4064, %v4152
        %v4154 = vpop.f32.mrf.mxu0
        %v4155 = vadd.f32 %v4066, %v4154
        %4156 = vmatmul.bf16.gmra.mxu0 %v3418
        %v4157 = vpop.f32.mrf.mxu0
        %v4158 = vadd.f32 %v4069, %v4157
        %v4159 = vpop.f32.mrf.mxu0
        %v4160 = vadd.f32 %v4071, %v4159
        %4161 = vmatmul.bf16.gmra.mxu0 %v3422
        %v4162 = vpop.f32.mrf.mxu0
        %v4163 = vadd.f32 %v4074, %v4162
        %v4164 = vpop.f32.mrf.mxu0
        %v4165 = vadd.f32 %v4076, %v4164
        %4166 = vmatmul.bf16.gmra.mxu0 %v3426
        %v4167 = vpop.f32.mrf.mxu0
        %v4168 = vadd.f32 %v4079, %v4167
        %v4169 = vpop.f32.mrf.mxu0
        %v4170 = vadd.f32 %v4081, %v4169
        %4171 = vmatmul.bf16.gmra.mxu0 %v3430
        %v4172 = vpop.f32.mrf.mxu0
        %v4173 = vadd.f32 %v4084, %v4172
        %v4174 = vpop.f32.mrf.mxu0
        %v4175 = vadd.f32 %v4086, %v4174
        %4176 = vdwg.mxu0
        %4177 = vmatpush.bf16.msra.mxu0 %v3708
        %4178 = vmatpush.bf16.msra.mxu0 %v3706
        %4179 = vmatpush.bf16.msra.mxu0 %v3704
        %4180 = vmatpush.bf16.msra.mxu0 %v3702
        %4181 = vmatpush.bf16.msra.mxu0 %v3700
        %4182 = vmatpush.bf16.msra.mxu0 %v3698
        %4183 = vmatpush.bf16.msra.mxu0 %v3696
        %4184 = vmatpush.bf16.msra.mxu0 %v3694
        %4185 = vmatmul.bf16.gmra.mxu0 %v3367
        %v4186 = vpop.f32.mrf.mxu0
        %v4187 = vadd.f32 %v3498, %v4186
        %v4188 = vpop.f32.mrf.mxu0
        %v4189 = vadd.f32 %v3498, %v4188
        %4190 = vmatmul.bf16.gmra.mxu0 %v3371
        %v4191 = vpop.f32.mrf.mxu0
        %v4192 = vadd.f32 %v3498, %v4191
        %v4193 = vpop.f32.mrf.mxu0
        %v4194 = vadd.f32 %v3498, %v4193
        %4195 = vmatmul.bf16.gmra.mxu0 %v3375
        %v4196 = vpop.f32.mrf.mxu0
        %v4197 = vadd.f32 %v3498, %v4196
        %v4198 = vpop.f32.mrf.mxu0
        %v4199 = vadd.f32 %v3498, %v4198
        %4200 = vmatmul.bf16.gmra.mxu0 %v3379
        %v4201 = vpop.f32.mrf.mxu0
        %v4202 = vadd.f32 %v3498, %v4201
        %v4203 = vpop.f32.mrf.mxu0
        %v4204 = vadd.f32 %v3498, %v4203
        %4205 = vmatmul.bf16.gmra.mxu0 %v3383
        %v4206 = vpop.f32.mrf.mxu0
        %v4207 = vadd.f32 %v3498, %v4206
        %v4208 = vpop.f32.mrf.mxu0
        %v4209 = vadd.f32 %v3498, %v4208
        %4210 = vmatmul.bf16.gmra.mxu0 %v3387
        %v4211 = vpop.f32.mrf.mxu0
        %v4212 = vadd.f32 %v3498, %v4211
        %v4213 = vpop.f32.mrf.mxu0
        %v4214 = vadd.f32 %v3498, %v4213
        %4215 = vmatmul.bf16.gmra.mxu0 %v3391
        %v4216 = vpop.f32.mrf.mxu0
        %v4217 = vadd.f32 %v3498, %v4216
        %v4218 = vpop.f32.mrf.mxu0
        %v4219 = vadd.f32 %v3498, %v4218
        %4220 = vmatmul.bf16.gmra.mxu0 %v3395
        %v4221 = vpop.f32.mrf.mxu0
        %v4222 = vadd.f32 %v3498, %v4221
        %v4223 = vpop.f32.mrf.mxu0
        %v4224 = vadd.f32 %v3498, %v4223
        %4225 = vmatmul.bf16.gmra.mxu0 %v3399
        %v4226 = vpop.f32.mrf.mxu0
        %v4227 = vadd.f32 %v3498, %v4226
        %v4228 = vpop.f32.mrf.mxu0
        %v4229 = vadd.f32 %v3498, %v4228
        %4230 = vmatmul.bf16.gmra.mxu0 %v3403
        %v4231 = vpop.f32.mrf.mxu0
        %v4232 = vadd.f32 %v3498, %v4231
        %v4233 = vpop.f32.mrf.mxu0
        %v4234 = vadd.f32 %v3498, %v4233
        %4235 = vmatmul.bf16.gmra.mxu0 %v3407
        %v4236 = vpop.f32.mrf.mxu0
        %v4237 = vadd.f32 %v3498, %v4236
        %v4238 = vpop.f32.mrf.mxu0
        %v4239 = vadd.f32 %v3498, %v4238
        %4240 = vmatmul.bf16.gmra.mxu0 %v3411
        %v4241 = vpop.f32.mrf.mxu0
        %v4242 = vadd.f32 %v3498, %v4241
        %v4243 = vpop.f32.mrf.mxu0
        %v4244 = vadd.f32 %v3498, %v4243
        %4245 = vmatmul.bf16.gmra.mxu0 %v3415
        %v4246 = vpop.f32.mrf.mxu0
        %v4247 = vadd.f32 %v3498, %v4246
        %v4248 = vpop.f32.mrf.mxu0
        %v4249 = vadd.f32 %v3498, %v4248
        %4250 = vmatmul.bf16.gmra.mxu0 %v3419
        %v4251 = vpop.f32.mrf.mxu0
        %v4252 = vadd.f32 %v3498, %v4251
        %v4253 = vpop.f32.mrf.mxu0
        %v4254 = vadd.f32 %v3498, %v4253
        %4255 = vmatmul.bf16.gmra.mxu0 %v3423
        %v4256 = vpop.f32.mrf.mxu0
        %v4257 = vadd.f32 %v3498, %v4256
        %v4258 = vpop.f32.mrf.mxu0
        %v4259 = vadd.f32 %v3498, %v4258
        %4260 = vmatmul.bf16.gmra.mxu0 %v3427
        %v4261 = vpop.f32.mrf.mxu0
        %v4262 = vadd.f32 %v3498, %v4261
        %v4263 = vpop.f32.mrf.mxu0
        %v4264 = vadd.f32 %v3498, %v4263
        %4265 = vdwg.mxu0
        %4266 = vmatpush.bf16.msra.mxu0 %v3724
        %4267 = vmatpush.bf16.msra.mxu0 %v3722
        %4268 = vmatpush.bf16.msra.mxu0 %v3720
        %4269 = vmatpush.bf16.msra.mxu0 %v3718
        %4270 = vmatpush.bf16.msra.mxu0 %v3716
        %4271 = vmatpush.bf16.msra.mxu0 %v3714
        %4272 = vmatpush.bf16.msra.mxu0 %v3712
        %4273 = vmatpush.bf16.msra.mxu0 %v3710
        %4274 = vmatmul.bf16.gmra.mxu0 %v3368
        %v4275 = vpop.f32.mrf.mxu0
        %v4276 = vadd.f32 %v4187, %v4275
        %v4277 = vpop.f32.mrf.mxu0
        %v4278 = vadd.f32 %v4189, %v4277
        %4279 = vmatmul.bf16.gmra.mxu0 %v3372
        %v4280 = vpop.f32.mrf.mxu0
        %v4281 = vadd.f32 %v4192, %v4280
        %v4282 = vpop.f32.mrf.mxu0
        %v4283 = vadd.f32 %v4194, %v4282
        %4284 = vmatmul.bf16.gmra.mxu0 %v3376
        %v4285 = vpop.f32.mrf.mxu0
        %v4286 = vadd.f32 %v4197, %v4285
        %v4287 = vpop.f32.mrf.mxu0
        %v4288 = vadd.f32 %v4199, %v4287
        %4289 = vmatmul.bf16.gmra.mxu0 %v3380
        %v4290 = vpop.f32.mrf.mxu0
        %v4291 = vadd.f32 %v4202, %v4290
        %v4292 = vpop.f32.mrf.mxu0
        %v4293 = vadd.f32 %v4204, %v4292
        %4294 = vmatmul.bf16.gmra.mxu0 %v3384
        %v4295 = vpop.f32.mrf.mxu0
        %v4296 = vadd.f32 %v4207, %v4295
        %v4297 = vpop.f32.mrf.mxu0
        %v4298 = vadd.f32 %v4209, %v4297
        %4299 = vmatmul.bf16.gmra.mxu0 %v3388
        %v4300 = vpop.f32.mrf.mxu0
        %v4301 = vadd.f32 %v4212, %v4300
        %v4302 = vpop.f32.mrf.mxu0
        %v4303 = vadd.f32 %v4214, %v4302
        %4304 = vmatmul.bf16.gmra.mxu0 %v3392
        %v4305 = vpop.f32.mrf.mxu0
        %v4306 = vadd.f32 %v4217, %v4305
        %v4307 = vpop.f32.mrf.mxu0
        %v4308 = vadd.f32 %v4219, %v4307
        %4309 = vmatmul.bf16.gmra.mxu0 %v3396
        %v4310 = vpop.f32.mrf.mxu0
        %v4311 = vadd.f32 %v4222, %v4310
        %v4312 = vpop.f32.mrf.mxu0
        %v4313 = vadd.f32 %v4224, %v4312
        %4314 = vmatmul.bf16.gmra.mxu0 %v3400
        %v4315 = vpop.f32.mrf.mxu0
        %v4316 = vadd.f32 %v4227, %v4315
        %v4317 = vpop.f32.mrf.mxu0
        %v4318 = vadd.f32 %v4229, %v4317
        %4319 = vmatmul.bf16.gmra.mxu0 %v3404
        %v4320 = vpop.f32.mrf.mxu0
        %v4321 = vadd.f32 %v4232, %v4320
        %v4322 = vpop.f32.mrf.mxu0
        %v4323 = vadd.f32 %v4234, %v4322
        %4324 = vmatmul.bf16.gmra.mxu0 %v3408
        %v4325 = vpop.f32.mrf.mxu0
        %v4326 = vadd.f32 %v4237, %v4325
        %v4327 = vpop.f32.mrf.mxu0
        %v4328 = vadd.f32 %v4239, %v4327
        %4329 = vmatmul.bf16.gmra.mxu0 %v3412
        %v4330 = vpop.f32.mrf.mxu0
        %v4331 = vadd.f32 %v4242, %v4330
        %v4332 = vpop.f32.mrf.mxu0
        %v4333 = vadd.f32 %v4244, %v4332
        %4334 = vmatmul.bf16.gmra.mxu0 %v3416
        %v4335 = vpop.f32.mrf.mxu0
        %v4336 = vadd.f32 %v4247, %v4335
        %v4337 = vpop.f32.mrf.mxu0
        %v4338 = vadd.f32 %v4249, %v4337
        %4339 = vmatmul.bf16.gmra.mxu0 %v3420
        %v4340 = vpop.f32.mrf.mxu0
        %v4341 = vadd.f32 %v4252, %v4340
        %v4342 = vpop.f32.mrf.mxu0
        %v4343 = vadd.f32 %v4254, %v4342
        %4344 = vmatmul.bf16.gmra.mxu0 %v3424
        %v4345 = vpop.f32.mrf.mxu0
        %v4346 = vadd.f32 %v4257, %v4345
        %v4347 = vpop.f32.mrf.mxu0
        %v4348 = vadd.f32 %v4259, %v4347
        %4349 = vmatmul.bf16.gmra.mxu0 %v3428
        %v4350 = vpop.f32.mrf.mxu0
        %v4351 = vadd.f32 %v4262, %v4350
        %v4352 = vpop.f32.mrf.mxu0
        %v4353 = vadd.f32 %v4264, %v4352
        %4354 = vdwg.mxu0
        %4355 = vmatpush.bf16.msra.mxu0 %v3740
        %4356 = vmatpush.bf16.msra.mxu0 %v3738
        %4357 = vmatpush.bf16.msra.mxu0 %v3736
        %4358 = vmatpush.bf16.msra.mxu0 %v3734
        %4359 = vmatpush.bf16.msra.mxu0 %v3732
        %4360 = vmatpush.bf16.msra.mxu0 %v3730
        %4361 = vmatpush.bf16.msra.mxu0 %v3728
        %4362 = vmatpush.bf16.msra.mxu0 %v3726
        %4363 = vmatmul.bf16.gmra.mxu0 %v3369
        %v4364 = vpop.f32.mrf.mxu0
        %v4365 = vadd.f32 %v4276, %v4364
        %v4366 = vpop.f32.mrf.mxu0
        %v4367 = vadd.f32 %v4278, %v4366
        %4368 = vmatmul.bf16.gmra.mxu0 %v3373
        %v4369 = vpop.f32.mrf.mxu0
        %v4370 = vadd.f32 %v4281, %v4369
        %v4371 = vpop.f32.mrf.mxu0
        %v4372 = vadd.f32 %v4283, %v4371
        %4373 = vmatmul.bf16.gmra.mxu0 %v3377
        %v4374 = vpop.f32.mrf.mxu0
        %v4375 = vadd.f32 %v4286, %v4374
        %v4376 = vpop.f32.mrf.mxu0
        %v4377 = vadd.f32 %v4288, %v4376
        %4378 = vmatmul.bf16.gmra.mxu0 %v3381
        %v4379 = vpop.f32.mrf.mxu0
        %v4380 = vadd.f32 %v4291, %v4379
        %v4381 = vpop.f32.mrf.mxu0
        %v4382 = vadd.f32 %v4293, %v4381
        %4383 = vmatmul.bf16.gmra.mxu0 %v3385
        %v4384 = vpop.f32.mrf.mxu0
        %v4385 = vadd.f32 %v4296, %v4384
        %v4386 = vpop.f32.mrf.mxu0
        %v4387 = vadd.f32 %v4298, %v4386
        %4388 = vmatmul.bf16.gmra.mxu0 %v3389
        %v4389 = vpop.f32.mrf.mxu0
        %v4390 = vadd.f32 %v4301, %v4389
        %v4391 = vpop.f32.mrf.mxu0
        %v4392 = vadd.f32 %v4303, %v4391
        %4393 = vmatmul.bf16.gmra.mxu0 %v3393
        %v4394 = vpop.f32.mrf.mxu0
        %v4395 = vadd.f32 %v4306, %v4394
        %v4396 = vpop.f32.mrf.mxu0
        %v4397 = vadd.f32 %v4308, %v4396
        %4398 = vmatmul.bf16.gmra.mxu0 %v3397
        %v4399 = vpop.f32.mrf.mxu0
        %v4400 = vadd.f32 %v4311, %v4399
        %v4401 = vpop.f32.mrf.mxu0
        %v4402 = vadd.f32 %v4313, %v4401
        %4403 = vmatmul.bf16.gmra.mxu0 %v3401
        %v4404 = vpop.f32.mrf.mxu0
        %v4405 = vadd.f32 %v4316, %v4404
        %v4406 = vpop.f32.mrf.mxu0
        %v4407 = vadd.f32 %v4318, %v4406
        %4408 = vmatmul.bf16.gmra.mxu0 %v3405
        %v4409 = vpop.f32.mrf.mxu0
        %v4410 = vadd.f32 %v4321, %v4409
        %v4411 = vpop.f32.mrf.mxu0
        %v4412 = vadd.f32 %v4323, %v4411
        %4413 = vmatmul.bf16.gmra.mxu0 %v3409
        %v4414 = vpop.f32.mrf.mxu0
        %v4415 = vadd.f32 %v4326, %v4414
        %v4416 = vpop.f32.mrf.mxu0
        %v4417 = vadd.f32 %v4328, %v4416
        %4418 = vmatmul.bf16.gmra.mxu0 %v3413
        %v4419 = vpop.f32.mrf.mxu0
        %v4420 = vadd.f32 %v4331, %v4419
        %v4421 = vpop.f32.mrf.mxu0
        %v4422 = vadd.f32 %v4333, %v4421
        %4423 = vmatmul.bf16.gmra.mxu0 %v3417
        %v4424 = vpop.f32.mrf.mxu0
        %v4425 = vadd.f32 %v4336, %v4424
        %v4426 = vpop.f32.mrf.mxu0
        %v4427 = vadd.f32 %v4338, %v4426
        %4428 = vmatmul.bf16.gmra.mxu0 %v3421
        %v4429 = vpop.f32.mrf.mxu0
        %v4430 = vadd.f32 %v4341, %v4429
        %v4431 = vpop.f32.mrf.mxu0
        %v4432 = vadd.f32 %v4343, %v4431
        %4433 = vmatmul.bf16.gmra.mxu0 %v3425
        %v4434 = vpop.f32.mrf.mxu0
        %v4435 = vadd.f32 %v4346, %v4434
        %v4436 = vpop.f32.mrf.mxu0
        %v4437 = vadd.f32 %v4348, %v4436
        %4438 = vmatmul.bf16.gmra.mxu0 %v3429
        %v4439 = vpop.f32.mrf.mxu0
        %v4440 = vadd.f32 %v4351, %v4439
        %v4441 = vpop.f32.mrf.mxu0
        %v4442 = vadd.f32 %v4353, %v4441
        %4443 = vdwg.mxu0
        %4444 = vmatpush.bf16.msra.mxu0 %v3756
        %4445 = vmatpush.bf16.msra.mxu0 %v3754
        %4446 = vmatpush.bf16.msra.mxu0 %v3752
        %4447 = vmatpush.bf16.msra.mxu0 %v3750
        %4448 = vmatpush.bf16.msra.mxu0 %v3748
        %4449 = vmatpush.bf16.msra.mxu0 %v3746
        %4450 = vmatpush.bf16.msra.mxu0 %v3744
        %4451 = vmatpush.bf16.msra.mxu0 %v3742
        %4452 = vmatmul.bf16.gmra.mxu0 %v3370
        %v4453 = vpop.f32.mrf.mxu0
        %v4454 = vadd.f32 %v4365, %v4453
        %v4455 = vpop.f32.mrf.mxu0
        %v4456 = vadd.f32 %v4367, %v4455
        %4457 = vmatmul.bf16.gmra.mxu0 %v3374
        %v4458 = vpop.f32.mrf.mxu0
        %v4459 = vadd.f32 %v4370, %v4458
        %v4460 = vpop.f32.mrf.mxu0
        %v4461 = vadd.f32 %v4372, %v4460
        %4462 = vmatmul.bf16.gmra.mxu0 %v3378
        %v4463 = vpop.f32.mrf.mxu0
        %v4464 = vadd.f32 %v4375, %v4463
        %v4465 = vpop.f32.mrf.mxu0
        %v4466 = vadd.f32 %v4377, %v4465
        %4467 = vmatmul.bf16.gmra.mxu0 %v3382
        %v4468 = vpop.f32.mrf.mxu0
        %v4469 = vadd.f32 %v4380, %v4468
        %v4470 = vpop.f32.mrf.mxu0
        %v4471 = vadd.f32 %v4382, %v4470
        %4472 = vmatmul.bf16.gmra.mxu0 %v3386
        %v4473 = vpop.f32.mrf.mxu0
        %v4474 = vadd.f32 %v4385, %v4473
        %v4475 = vpop.f32.mrf.mxu0
        %v4476 = vadd.f32 %v4387, %v4475
        %4477 = vmatmul.bf16.gmra.mxu0 %v3390
        %v4478 = vpop.f32.mrf.mxu0
        %v4479 = vadd.f32 %v4390, %v4478
        %v4480 = vpop.f32.mrf.mxu0
        %v4481 = vadd.f32 %v4392, %v4480
        %4482 = vmatmul.bf16.gmra.mxu0 %v3394
        %v4483 = vpop.f32.mrf.mxu0
        %v4484 = vadd.f32 %v4395, %v4483
        %v4485 = vpop.f32.mrf.mxu0
        %v4486 = vadd.f32 %v4397, %v4485
        %4487 = vmatmul.bf16.gmra.mxu0 %v3398
        %v4488 = vpop.f32.mrf.mxu0
        %v4489 = vadd.f32 %v4400, %v4488
        %v4490 = vpop.f32.mrf.mxu0
        %v4491 = vadd.f32 %v4402, %v4490
        %4492 = vmatmul.bf16.gmra.mxu0 %v3402
        %v4493 = vpop.f32.mrf.mxu0
        %v4494 = vadd.f32 %v4405, %v4493
        %v4495 = vpop.f32.mrf.mxu0
        %v4496 = vadd.f32 %v4407, %v4495
        %4497 = vmatmul.bf16.gmra.mxu0 %v3406
        %v4498 = vpop.f32.mrf.mxu0
        %v4499 = vadd.f32 %v4410, %v4498
        %v4500 = vpop.f32.mrf.mxu0
        %v4501 = vadd.f32 %v4412, %v4500
        %4502 = vmatmul.bf16.gmra.mxu0 %v3410
        %v4503 = vpop.f32.mrf.mxu0
        %v4504 = vadd.f32 %v4415, %v4503
        %v4505 = vpop.f32.mrf.mxu0
        %v4506 = vadd.f32 %v4417, %v4505
        %4507 = vmatmul.bf16.gmra.mxu0 %v3414
        %v4508 = vpop.f32.mrf.mxu0
        %v4509 = vadd.f32 %v4420, %v4508
        %v4510 = vpop.f32.mrf.mxu0
        %v4511 = vadd.f32 %v4422, %v4510
        %4512 = vmatmul.bf16.gmra.mxu0 %v3418
        %v4513 = vpop.f32.mrf.mxu0
        %v4514 = vadd.f32 %v4425, %v4513
        %v4515 = vpop.f32.mrf.mxu0
        %v4516 = vadd.f32 %v4427, %v4515
        %4517 = vmatmul.bf16.gmra.mxu0 %v3422
        %v4518 = vpop.f32.mrf.mxu0
        %v4519 = vadd.f32 %v4430, %v4518
        %v4520 = vpop.f32.mrf.mxu0
        %v4521 = vadd.f32 %v4432, %v4520
        %4522 = vmatmul.bf16.gmra.mxu0 %v3426
        %v4523 = vpop.f32.mrf.mxu0
        %v4524 = vadd.f32 %v4435, %v4523
        %v4525 = vpop.f32.mrf.mxu0
        %v4526 = vadd.f32 %v4437, %v4525
        %4527 = vmatmul.bf16.gmra.mxu0 %v3430
        %v4528 = vpop.f32.mrf.mxu0
        %v4529 = vadd.f32 %v4440, %v4528
        %v4530 = vpop.f32.mrf.mxu0
        %v4531 = vadd.f32 %v4442, %v4530
        %4532 = vdwg.mxu0
        %v4533 = vmax.f32 %v4098, %v4100
        %v4534 = vmax.f32 %v4533, %v4103
        %v4535 = vmax.f32 %v4534, %v4105
        %v4536 = vrot.slane %v4535, 4
        %v4537 = vmax.f32 %v4535, %v4536
        %v4538 = vrot.slane %v4537, 2
        %v4539 = vmax.f32 %v4537, %v4538
        %v4540 = vrot.slane %v4539, 1
        %v4541 = vmax.f32 %v4539, %v4540
        %v4542 = vmax.f32 %v4454, %v4456
        %v4543 = vmax.f32 %v4542, %v4459
        %v4544 = vmax.f32 %v4543, %v4461
        %v4545 = vrot.slane %v4544, 4
        %v4546 = vmax.f32 %v4544, %v4545
        %v4547 = vrot.slane %v4546, 2
        %v4548 = vmax.f32 %v4546, %v4547
        %v4549 = vrot.slane %v4548, 1
        %v4550 = vmax.f32 %v4548, %v4549
        %v4551 = vmax.f32 %v4108, %v4110
        %v4552 = vmax.f32 %v4551, %v4113
        %v4553 = vmax.f32 %v4552, %v4115
        %v4554 = vrot.slane %v4553, 4
        %v4555 = vmax.f32 %v4553, %v4554
        %v4556 = vrot.slane %v4555, 2
        %v4557 = vmax.f32 %v4555, %v4556
        %v4558 = vrot.slane %v4557, 1
        %v4559 = vmax.f32 %v4557, %v4558
        %v4560 = vmax.f32 %v4464, %v4466
        %v4561 = vmax.f32 %v4560, %v4469
        %v4562 = vmax.f32 %v4561, %v4471
        %v4563 = vrot.slane %v4562, 4
        %v4564 = vmax.f32 %v4562, %v4563
        %v4565 = vrot.slane %v4564, 2
        %v4566 = vmax.f32 %v4564, %v4565
        %v4567 = vrot.slane %v4566, 1
        %v4568 = vmax.f32 %v4566, %v4567
        %v4569 = vmax.f32 %v4118, %v4120
        %v4570 = vmax.f32 %v4569, %v4123
        %v4571 = vmax.f32 %v4570, %v4125
        %v4572 = vrot.slane %v4571, 4
        %v4573 = vmax.f32 %v4571, %v4572
        %v4574 = vrot.slane %v4573, 2
        %v4575 = vmax.f32 %v4573, %v4574
        %v4576 = vrot.slane %v4575, 1
        %v4577 = vmax.f32 %v4575, %v4576
        %v4578 = vmax.f32 %v4474, %v4476
        %v4579 = vmax.f32 %v4578, %v4479
        %v4580 = vmax.f32 %v4579, %v4481
        %v4581 = vrot.slane %v4580, 4
        %v4582 = vmax.f32 %v4580, %v4581
        %v4583 = vrot.slane %v4582, 2
        %v4584 = vmax.f32 %v4582, %v4583
        %v4585 = vrot.slane %v4584, 1
        %v4586 = vmax.f32 %v4584, %v4585
        %v4587 = vmax.f32 %v4128, %v4130
        %v4588 = vmax.f32 %v4587, %v4133
        %v4589 = vmax.f32 %v4588, %v4135
        %v4590 = vrot.slane %v4589, 4
        %v4591 = vmax.f32 %v4589, %v4590
        %v4592 = vrot.slane %v4591, 2
        %v4593 = vmax.f32 %v4591, %v4592
        %v4594 = vrot.slane %v4593, 1
        %v4595 = vmax.f32 %v4593, %v4594
        %v4596 = vmax.f32 %v4484, %v4486
        %v4597 = vmax.f32 %v4596, %v4489
        %v4598 = vmax.f32 %v4597, %v4491
        %v4599 = vrot.slane %v4598, 4
        %v4600 = vmax.f32 %v4598, %v4599
        %v4601 = vrot.slane %v4600, 2
        %v4602 = vmax.f32 %v4600, %v4601
        %v4603 = vrot.slane %v4602, 1
        %v4604 = vmax.f32 %v4602, %v4603
        %v4605 = vmax.f32 %v4138, %v4140
        %v4606 = vmax.f32 %v4605, %v4143
        %v4607 = vmax.f32 %v4606, %v4145
        %v4608 = vrot.slane %v4607, 4
        %v4609 = vmax.f32 %v4607, %v4608
        %v4610 = vrot.slane %v4609, 2
        %v4611 = vmax.f32 %v4609, %v4610
        %v4612 = vrot.slane %v4611, 1
        %v4613 = vmax.f32 %v4611, %v4612
        %v4614 = vmax.f32 %v4494, %v4496
        %v4615 = vmax.f32 %v4614, %v4499
        %v4616 = vmax.f32 %v4615, %v4501
        %v4617 = vrot.slane %v4616, 4
        %v4618 = vmax.f32 %v4616, %v4617
        %v4619 = vrot.slane %v4618, 2
        %v4620 = vmax.f32 %v4618, %v4619
        %v4621 = vrot.slane %v4620, 1
        %v4622 = vmax.f32 %v4620, %v4621
        %v4623 = vmax.f32 %v4148, %v4150
        %v4624 = vmax.f32 %v4623, %v4153
        %v4625 = vmax.f32 %v4624, %v4155
        %v4626 = vrot.slane %v4625, 4
        %v4627 = vmax.f32 %v4625, %v4626
        %v4628 = vrot.slane %v4627, 2
        %v4629 = vmax.f32 %v4627, %v4628
        %v4630 = vrot.slane %v4629, 1
        %v4631 = vmax.f32 %v4629, %v4630
        %v4632 = vmax.f32 %v4504, %v4506
        %v4633 = vmax.f32 %v4632, %v4509
        %v4634 = vmax.f32 %v4633, %v4511
        %v4635 = vrot.slane %v4634, 4
        %v4636 = vmax.f32 %v4634, %v4635
        %v4637 = vrot.slane %v4636, 2
        %v4638 = vmax.f32 %v4636, %v4637
        %v4639 = vrot.slane %v4638, 1
        %v4640 = vmax.f32 %v4638, %v4639
        %v4641 = vmax.f32 %v4158, %v4160
        %v4642 = vmax.f32 %v4641, %v4163
        %v4643 = vmax.f32 %v4642, %v4165
        %v4644 = vrot.slane %v4643, 4
        %v4645 = vmax.f32 %v4643, %v4644
        %v4646 = vrot.slane %v4645, 2
        %v4647 = vmax.f32 %v4645, %v4646
        %v4648 = vrot.slane %v4647, 1
        %v4649 = vmax.f32 %v4647, %v4648
        %v4650 = vmax.f32 %v4514, %v4516
        %v4651 = vmax.f32 %v4650, %v4519
        %v4652 = vmax.f32 %v4651, %v4521
        %v4653 = vrot.slane %v4652, 4
        %v4654 = vmax.f32 %v4652, %v4653
        %v4655 = vrot.slane %v4654, 2
        %v4656 = vmax.f32 %v4654, %v4655
        %v4657 = vrot.slane %v4656, 1
        %v4658 = vmax.f32 %v4656, %v4657
        %v4659 = vmax.f32 %v4168, %v4170
        %v4660 = vmax.f32 %v4659, %v4173
        %v4661 = vmax.f32 %v4660, %v4175
        %v4662 = vrot.slane %v4661, 4
        %v4663 = vmax.f32 %v4661, %v4662
        %v4664 = vrot.slane %v4663, 2
        %v4665 = vmax.f32 %v4663, %v4664
        %v4666 = vrot.slane %v4665, 1
        %v4667 = vmax.f32 %v4665, %v4666
        %v4668 = vmax.f32 %v4524, %v4526
        %v4669 = vmax.f32 %v4668, %v4529
        %v4670 = vmax.f32 %v4669, %v4531
        %v4671 = vrot.slane %v4670, 4
        %v4672 = vmax.f32 %v4670, %v4671
        %v4673 = vrot.slane %v4672, 2
        %v4674 = vmax.f32 %v4672, %v4673
        %v4675 = vrot.slane %v4674, 1
        %v4676 = vmax.f32 %v4674, %v4675
        %v4693 = vsel %vm2412, %v4559, %v4541
        %v4694 = vsel %vm2414, %v4577, %v4693
        %v4695 = vsel %vm2416, %v4595, %v4694
        %v4696 = vsel %vm2418, %v4613, %v4695
        %v4697 = vsel %vm2420, %v4631, %v4696
        %v4698 = vsel %vm2422, %v4649, %v4697
        %v4699 = vsel %vm2424, %v4667, %v4698
        %v4700 = vsel %vm2412, %v4568, %v4550
        %v4701 = vsel %vm2414, %v4586, %v4700
        %v4702 = vsel %vm2416, %v4604, %v4701
        %v4703 = vsel %vm2418, %v4622, %v4702
        %v4704 = vsel %vm2420, %v4640, %v4703
        %v4705 = vsel %vm2422, %v4658, %v4704
        %v4706 = vsel %vm2424, %v4676, %v4705
        %4709 = vst [vmem:[%s445] sm:$0xff] %v4699
        %4710 = vst [vmem:[%s445 + $0x8] sm:$0xff] %v4706
        %s4711 = sand.u32 %s251, 1
        %s4712 = scalar_lea.sflag [#allocation4], %s4711
        %s4713 = sand.u32 %s251, 1
        %s4714 = smul.addr %s4713, 16
        %s4715 = scalar_lea.vmem [#allocation13], %s4714
        // Predicated region
        $region85: #{tpu_custom_call.1} parent=59 // pred_check
          %p4716 = pneg %p261
        $region86: #{tpu_custom_call.1} parent=59 // pred_check_branch
          %4718 = sbr.rel (%p4716) target = $region88
        $region87: #{tpu_custom_call.1} parent=59 // pred_region
          %4720 = vsyncadd %s4712, 0
          %s4721 = smul.addr %s28, 2
          %s4722 = smul.addr %s4721, 8
          %s4723 = scalar_lea.hbm %s10, %s4722
          %s4725 = sshll.u32 %s4715, 4
          %s4726 = int_to_ptr.vmem [resolvable:$true] %s4725
          %s4727 = sshll.u32 %s4723, 4
          %s4728 = int_to_ptr.hbm [resolvable:$true] %s4727
          %4730 = dma.vmem_to_hbm [thread:$0]  %s4726, 256, %s4728, %s4712
        $region88: #{tpu_custom_call.1} parent=59 // pred_fallthru
          _
      $region60: #{tpu_custom_call.1} parent=5 // pred_fallthru
        _
      %p4731 = scmp.le.s32.totalorder 2, %s23
      // Predicated region
      $region89: #{tpu_custom_call.1} parent=5 // pred_check
        %p4732 = pneg %p4731
      $region90: #{tpu_custom_call.1} parent=5 // pred_check_branch
        %4734 = sbr.rel (%p4732) target = $region92
      $region91: #{tpu_custom_call.1} parent=5 // pred_region
        %s4735 = ssub.s32 %s23, 2
        // Predicated region
        $region93: #{tpu_custom_call.1} parent=91 // pred_check
          %p4736 = pneg %p267
        $region94: #{tpu_custom_call.1} parent=91 // pred_check_branch
          %4738 = sbr.rel (%p4736) target = $region96
        $region95: #{tpu_custom_call.1} parent=91 // pred_region
          %s4739 = sand.u32 %s252, 1
          %s4740 = scalar_lea.sflag [#allocation4], %s4739
          %s4741 = sand.u32 %s252, 1
          %s4742 = smul.addr %s4741, 16
          %s4743 = scalar_lea.vmem [#allocation13], %s4742
          %4745 = dma.done %s4740, 256
        $region96: #{tpu_custom_call.1} parent=91 // pred_fallthru
          _
      $region92: #{tpu_custom_call.1} parent=5 // pred_fallthru
        _
    $region6: #{tpu_custom_call.1} parent=1 // loop_footer
      %s27 = sadd.s32 1, %s23
    $region7: #{tpu_custom_call.1} parent=1 // loop_footer_branch
      %22 = sbr.rel target = $region3
    $region8: #{tpu_custom_call.1} parent=1 // loop_exit
      _
    %4746 = vsyncpa [#allocation3], 1
    %s4747 = scalar_lea.sflag [#allocation3], 1
    %4748 = vsyncpa %s4747, 1
    %4749 = vsyncpa [#allocation6], 1
    %4750 = vsyncpa [#allocation9], 1
    %4751 = vsyncpa [#allocation12], 1
    %4752 = vsyncpa [#allocation4], 1
    %s4753 = scalar_lea.sflag [#allocation4], 1
    %4754 = vsyncpa %s4753, 1

</llo_original>
